<compile_context>
chip_gen: v6e
topology: v6e:2x2x1
jax: 0.10.0
libtpu: 0.0.40
codegen_flags: <defaults>
</compile_context>

<pallas_src>
import jax
import jax.numpy as jnp
from jax.experimental import pallas as pl
from jax.experimental.pallas import tpu as pltpu


def _round_up(x, m):
    return ((x + m - 1) // m) * m


# --------------------------------------------------------------------------
# Fused kernel: per (batch-tile, time-chunk) grid step
#   combo = x_chunk @ [W1' | W_ih] + [b1' | b_ih]       (one MXU pass of x)
#   emb   = relu(combo[:, :Ep]) @ W2 + b2               (MLP head -> lang_emb)
#   gi    = combo[:, Ep:]  (VMEM scratch, never hits HBM)
#   then the sequential GRU recurrence over the chunk (h carried in vregs),
#   with the classifier Linear fused into the last-chunk epilogue.
# --------------------------------------------------------------------------
def _fused_kernel(len_ref, x_ref, wc_ref, bc_ref, w2_ref, b2_ref,
                  whh_ref, bhh_ref, wcls_ref, bcls_ref,
                  emb_ref, hlast_ref, scores_ref,
                  gi_scr, h_scr):
    c = pl.program_id(1)                       # time-chunk index (sequential)
    rows, Ep = x_ref.shape                     # rows = tc * tb
    tb, H = h_scr.shape
    tc = rows // tb

    # ---- fused per-position projections for this chunk (single x pass) ----
    x = x_ref[...]                                                    # bf16
    combo = (jnp.dot(x, wc_ref[...], preferred_element_type=jnp.float32)
             + bc_ref[...])                                           # (rows, Ep+Gp)
    gi_scr[...] = combo[:, Ep:]                    # hoisted GRU input proj
    hid = jnp.maximum(combo[:, :Ep], 0.0)          # conv1 -> BN(eval) -> ReLU
    emb_ref[...] = (jnp.dot(hid.astype(jnp.bfloat16), w2_ref[...],
                            preferred_element_type=jnp.float32)
                    + b2_ref[...])                 # conv2 -> lang_emb chunk

    # ---- sequential GRU recurrence over the chunk, h carried in vregs ----
    @pl.when(c == 0)
    def _():
        h_scr[...] = jnp.zeros_like(h_scr)

    lens = len_ref[...]                                               # (tb, 1) int32
    whh = whh_ref[...]                                                # (H, Gp) bf16
    bhh = bhh_ref[...]                                                # (1, Gp) f32

    def step(lt, h):
        t = c * tc + lt
        off = pl.multiple_of(lt * tb, tb)
        gi = gi_scr[pl.ds(off, tb), :]                                # (tb, Gp) f32
        # TODO(synk): check the bundle dump that the W_hh push is hoisted out
        # of the unrolled loop; drive the MXU explicitly otherwise.
        gh = (jnp.dot(h.astype(jnp.bfloat16), whh,
                      preferred_element_type=jnp.float32) + bhh)
        r = jax.nn.sigmoid(gi[:, 0:H] + gh[:, 0:H])
        z = jax.nn.sigmoid(gi[:, H:2 * H] + gh[:, H:2 * H])
        n = jnp.tanh(gi[:, 2 * H:3 * H] + r * gh[:, 2 * H:3 * H])
        h_new = (1.0 - z) * n + z * h
        # packed-sequence semantics: only advance while t < length
        return jnp.where(lens > t, h_new, h)

    h = jax.lax.fori_loop(0, tc, step, h_scr[...], unroll=min(tc, 8))
    h_scr[...] = h                                                    # persist once per chunk

    @pl.when(c == pl.num_programs(1) - 1)
    def _():
        hlast_ref[...] = h
        scores_ref[...] = (jnp.dot(h.astype(jnp.bfloat16), wcls_ref[...],
                                   preferred_element_type=jnp.float32)
                           + bcls_ref[...])


def fused_forward(x2d, len2d, wc, bc, w2, b2, whh, bhh, wcls, bcls,
                  hidden_size, *, tc, tb, nb, nt):
    rows = tc * tb
    Bp = nb * tb
    N, Ep = x2d.shape
    Gp = whh.shape[1]
    Op = w2.shape[1]
    Cp = wcls.shape[1]

    def full(a):
        return pl.BlockSpec(a.shape, lambda bi, c: (0,) * a.ndim)

    emb, hlast, scores = pl.pallas_call(
        _fused_kernel,
        out_shape=(jax.ShapeDtypeStruct((N, Op), jnp.float32),
                   jax.ShapeDtypeStruct((Bp, hidden_size), jnp.float32),
                   jax.ShapeDtypeStruct((Bp, Cp), jnp.float32)),
        grid=(nb, nt),
        in_specs=[pl.BlockSpec((tb, 1), lambda bi, c: (bi, 0)),
                  pl.BlockSpec((rows, Ep), lambda bi, c: (bi * nt + c, 0)),
                  full(wc), full(bc), full(w2), full(b2),
                  full(whh), full(bhh), full(wcls), full(bcls)],
        out_specs=(pl.BlockSpec((rows, Op), lambda bi, c: (bi * nt + c, 0)),
                   pl.BlockSpec((tb, hidden_size), lambda bi, c: (bi, 0)),
                   pl.BlockSpec((tb, Cp), lambda bi, c: (bi, 0))),
        scratch_shapes=[pltpu.VMEM((rows, Gp), jnp.float32),    # gi chunk
                        pltpu.VMEM((tb, hidden_size), jnp.float32)],  # h carry
        compiler_params=pltpu.CompilerParams(
            dimension_semantics=("parallel", "arbitrary"),
            vmem_limit_bytes=32 * 1024 * 1024),
    )(len2d, x2d, wc, bc, w2, b2, whh, bhh, wcls, bcls)
    return emb, hlast, scores


# --------------------------------------------------------------------------
# Parameter init (PyTorch-compatible shapes; GRU/conv weights pre-transposed
# to (in, out), GRU gate order [r | z | n]).
# --------------------------------------------------------------------------
def init_params(key, emb_size=300, hidden_size=128, out_dim=128,
                num_text_classes=18):
    ks = jax.random.split(key, 10)
    s_gru = 1.0 / jnp.sqrt(hidden_size)
    s_mlp = 1.0 / jnp.sqrt(emb_size)
    s_cls = 1.0 / jnp.sqrt(hidden_size)
    u = lambda k, shape, s: jax.random.uniform(k, shape, jnp.float32, -s, s)
    return {
        'w_ih': u(ks[0], (emb_size, 3 * hidden_size), s_gru),
        'w_hh': u(ks[1], (hidden_size, 3 * hidden_size), s_gru),
        'b_ih': u(ks[2], (1, 3 * hidden_size), s_gru),
        'b_hh': u(ks[3], (1, 3 * hidden_size), s_gru),
        'w1': u(ks[4], (emb_size, emb_size), s_mlp),
        'b1': u(ks[5], (1, emb_size), s_mlp),
        'bn_gamma': jnp.ones((1, emb_size), jnp.float32),
        'bn_beta': jnp.zeros((1, emb_size), jnp.float32),
        'bn_mean': jnp.zeros((1, emb_size), jnp.float32),
        'bn_var': jnp.ones((1, emb_size), jnp.float32),
        'w2': u(ks[6], (emb_size, out_dim), s_mlp),
        'b2': u(ks[7], (1, out_dim), s_mlp),
        'w_cls': u(ks[8], (hidden_size, num_text_classes), s_cls),
        'b_cls': u(ks[9], (1, num_text_classes), s_cls),
    }


def _prepare_params(params, emb_size, hidden_size, out_dim, num_text_classes,
                    eps=1e-5):
    """Fold eval-mode BN into conv1, concat [W1'|W_ih] into one MXU RHS,
    zero-pad channel dims to lane multiples, cast MXU operands to bf16."""
    Ep = _round_up(emb_size, 128)
    Gp = _round_up(3 * hidden_size, 128)
    Op = _round_up(out_dim, 128)
    Cp = _round_up(num_text_classes, 128)

    scale = params['bn_gamma'] * jax.lax.rsqrt(params['bn_var'] + eps)  # (1, E)
    w1f = params['w1'] * scale                                          # fold BN
    b1f = (params['b1'] - params['bn_mean']) * scale + params['bn_beta']

    def padw(w, rp, cp):
        r, c = w.shape
        return jnp.pad(w, ((0, rp - r), (0, cp - c)))

    wc = jnp.concatenate([padw(w1f, Ep, Ep),
                          padw(params['w_ih'], Ep, Gp)], axis=1)        # (Ep, Ep+Gp)
    bc = jnp.concatenate([padw(b1f, 1, Ep),
                          padw(params['b_ih'], 1, Gp)], axis=1)         # (1, Ep+Gp)
    return {
        'wc': wc.astype(jnp.bfloat16),
        'bc': bc,
        'w2': padw(params['w2'], Ep, Op).astype(jnp.bfloat16),
        'b2': padw(params['b2'], 1, Op),
        'w_hh': padw(params['w_hh'], hidden_size, Gp).astype(jnp.bfloat16),
        'b_hh': padw(params['b_hh'], 1, Gp),
        'w_cls': padw(params['w_cls'], hidden_size, Cp).astype(jnp.bfloat16),
        'b_cls': padw(params['b_cls'], 1, Cp),
    }


def gru_layer_forward(data_dict, params, hidden_size=128, out_dim=128,
                      num_text_classes=18, *, tc=16, tb=32):
    word_embs = data_dict['lang_feat']                               # (B, T, 300)
    lengths = data_dict['lang_len'].astype(jnp.int32)                # (B,)
    B, T, E = word_embs.shape
    Ep = _round_up(E, 128)

    prep = _prepare_params(params, E, hidden_size, out_dim, num_text_classes)

    # tile sizes (batch tile multiple of 8 sublanes; time chunk <= T)
    tb = _round_up(min(tb, _round_up(B, 8)), 8)
    Bp = _round_up(B, tb)
    nb = Bp // tb
    tc = max(1, min(tc, T))
    T_pad = _round_up(T, tc)
    nt = T_pad // tc

    # ---- one fused XLA pad+transpose+cast: rows ordered (batch_tile, t, b) ----
    x = jnp.pad(word_embs, ((0, Bp - B), (0, T_pad - T), (0, Ep - E)))
    x = x.reshape(nb, tb, T_pad, Ep).transpose(0, 2, 1, 3)           # (nb, T_pad, tb, Ep)
    x2d = x.reshape(nb * T_pad * tb, Ep).astype(jnp.bfloat16)
    len2d = jnp.pad(lengths, (0, Bp - B)).reshape(Bp, 1)             # pads -> len 0

    emb2d, hlast, scores = fused_forward(
        x2d, len2d, prep['wc'], prep['bc'], prep['w2'], prep['b2'],
        prep['w_hh'], prep['b_hh'], prep['w_cls'], prep['b_cls'],
        hidden_size, tc=tc, tb=tb, nb=nb, nt=nt)

    # ---- layout back: only the 128-lane lang_emb gets transposed ----
    Op = emb2d.shape[1]
    emb = emb2d.reshape(nb, T_pad, tb, Op).transpose(0, 2, 1, 3)
    emb = emb.reshape(Bp, T_pad, Op)

    out = dict(data_dict)
    out['lang_emb'] = emb[:B, :T, :out_dim]
    out['lang_hidden'] = hlast[:B]
    # TODO(synk): Dropout after the classifier Linear is identity (inference).
    out['lang_scores'] = scores[:B, :num_text_classes]
    return out


if __name__ == "__main__":
    key = jax.random.PRNGKey(0)
    kx, kp = jax.random.split(key, 2)

    B, T, E = 2, 8, 300
    H, OUT, NCLS = 128, 128, 18

    word_embs = jax.random.normal(kx, (B, T, E), jnp.float32)
    lang_len = jnp.array([8, 5], jnp.int32)
    params = init_params(kp, E, H, OUT, NCLS)

    data_dict = {'lang_feat': word_embs, 'lang_len': lang_len}
    out = gru_layer_forward(data_dict, params, hidden_size=H, out_dim=OUT,
                            num_text_classes=NCLS)

    jax.block_until_ready((out['lang_emb'], out['lang_hidden'],
                           out['lang_scores']))
    assert out['lang_emb'].shape == (B, T, OUT)
    assert out['lang_hidden'].shape == (B, H)
    assert out['lang_scores'].shape == (B, NCLS)
    print("KERNEL_OK")
</pallas_src>

<mosaic_0001>
module attributes {stable_mosaic.version = 11 : i64} {
  func.func @_fused_kernel(%arg0: i32, %arg1: i32, %arg2: memref<8x1xi32, #tpu.memory_space<vmem>>, %arg3: memref<64x384xbf16, #tpu.memory_space<vmem>>, %arg4: memref<384x768xbf16, #tpu.memory_space<vmem>>, %arg5: memref<1x768xf32, #tpu.memory_space<vmem>>, %arg6: memref<384x128xbf16, #tpu.memory_space<vmem>>, %arg7: memref<1x128xf32, #tpu.memory_space<vmem>>, %arg8: memref<128x384xbf16, #tpu.memory_space<vmem>>, %arg9: memref<1x384xf32, #tpu.memory_space<vmem>>, %arg10: memref<128x128xbf16, #tpu.memory_space<vmem>>, %arg11: memref<1x128xf32, #tpu.memory_space<vmem>>, %arg12: memref<64x128xf32, #tpu.memory_space<vmem>>, %arg13: memref<8x128xf32, #tpu.memory_space<vmem>>, %arg14: memref<8x128xf32, #tpu.memory_space<vmem>>, %arg15: memref<64x384xf32, #tpu.memory_space<vmem>>, %arg16: memref<8x128xf32, #tpu.memory_space<vmem>>) attributes {dimension_semantics = [#tpu.dimension_semantics<parallel>, #tpu.dimension_semantics<arbitrary>], iteration_bounds = array<i64: 1, 1>, scalar_prefetch = 0 : i64, scratch_operands = 2 : i64, tpu.core_type = #tpu.core_type<tc>, window_params = [{transform_indices = @transform_0, window_bounds = array<i64: 8, 1>}, {transform_indices = @transform_1, window_bounds = array<i64: 64, 384>}, {pipeline_mode = #tpu.pipeline_mode<synchronous>, transform_indices = @transform_2, window_bounds = array<i64: 384, 768>}, {pipeline_mode = #tpu.pipeline_mode<synchronous>, transform_indices = @transform_3, window_bounds = array<i64: 1, 768>}, {pipeline_mode = #tpu.pipeline_mode<synchronous>, transform_indices = @transform_4, window_bounds = array<i64: 384, 128>}, {pipeline_mode = #tpu.pipeline_mode<synchronous>, transform_indices = @transform_5, window_bounds = array<i64: 1, 128>}, {pipeline_mode = #tpu.pipeline_mode<synchronous>, transform_indices = @transform_6, window_bounds = array<i64: 128, 384>}, {pipeline_mode = #tpu.pipeline_mode<synchronous>, transform_indices = @transform_7, window_bounds = array<i64: 1, 384>}, {pipeline_mode = #tpu.pipeline_mode<synchronous>, transform_indices = @transform_8, window_bounds = array<i64: 128, 128>}, {pipeline_mode = #tpu.pipeline_mode<synchronous>, transform_indices = @transform_9, window_bounds = array<i64: 1, 128>}, {transform_indices = @transform_10, window_bounds = array<i64: 64, 128>}, {transform_indices = @transform_11, window_bounds = array<i64: 8, 128>}, {transform_indices = @transform_12, window_bounds = array<i64: 8, 128>}]} {
    %c0 = arith.constant 0 : index
    %c0_0 = arith.constant 0 : index
    %0 = vector.load %arg3[%c0, %c0_0] : memref<64x384xbf16, #tpu.memory_space<vmem>>, vector<64x384xbf16>
    %c0_1 = arith.constant 0 : index
    %c0_2 = arith.constant 0 : index
    %1 = vector.load %arg4[%c0_1, %c0_2] : memref<384x768xbf16, #tpu.memory_space<vmem>>, vector<384x768xbf16>
    %cst = arith.constant dense<0.000000e+00> : vector<64x768xf32>
    %2 = tpu.matmul %0, %1, %cst {dimension_numbers = #tpu.dot_dimension_numbers<[1], [0], [0], [1], [0, 0, 1, 1], [], []>} : vector<64x384xbf16>, vector<384x768xbf16>, vector<64x768xf32> -> vector<64x768xf32>
    %c0_3 = arith.constant 0 : index
    %c0_4 = arith.constant 0 : index
    %3 = vector.load %arg5[%c0_3, %c0_4] : memref<1x768xf32, #tpu.memory_space<vmem>>, vector<1x768xf32>
    %4 = vector.broadcast %3 : vector<1x768xf32> to vector<64x768xf32>
    %5 = arith.addf %2, %4 : vector<64x768xf32>
    %6 = vector.extract_strided_slice %5 {offsets = [0, 384], sizes = [64, 384], strides = [1, 1]} : vector<64x768xf32> to vector<64x384xf32>
    %c0_5 = arith.constant 0 : index
    %c0_6 = arith.constant 0 : index
    %7 = vector.load %arg15[%c0_5, %c0_6] : memref<64x384xf32, #tpu.memory_space<vmem>>, vector<64x384xf32>
    tpu.vector_store %arg15[%c0_5, %c0_6], %6 {strides = array<i32>} : memref<64x384xf32, #tpu.memory_space<vmem>>, vector<64x384xf32>,
    %8 = vector.extract_strided_slice %5 {offsets = [0, 0], sizes = [64, 384], strides = [1, 1]} : vector<64x768xf32> to vector<64x384xf32>
    %cst_7 = arith.constant 0.000000e+00 : f32
    %9 = vector.broadcast %cst_7 : f32 to vector<64x384xf32>
    %10 = arith.maximumf %8, %9 : vector<64x384xf32>
    %11 = arith.truncf %10 : vector<64x384xf32> to vector<64x384xbf16>
    %c0_8 = arith.constant 0 : index
    %c0_9 = arith.constant 0 : index
    %12 = vector.load %arg6[%c0_8, %c0_9] : memref<384x128xbf16, #tpu.memory_space<vmem>>, vector<384x128xbf16>
    %cst_10 = arith.constant dense<0.000000e+00> : vector<64x128xf32>
    %13 = tpu.matmul %11, %12, %cst_10 {dimension_numbers = #tpu.dot_dimension_numbers<[1], [0], [0], [1], [0, 0, 1, 1], [], []>} : vector<64x384xbf16>, vector<384x128xbf16>, vector<64x128xf32> -> vector<64x128xf32>
    %c0_11 = arith.constant 0 : index
    %c0_12 = arith.constant 0 : index
    %14 = vector.load %arg7[%c0_11, %c0_12] : memref<1x128xf32, #tpu.memory_space<vmem>>, vector<1x128xf32>
    %15 = vector.broadcast %14 : vector<1x128xf32> to vector<64x128xf32>
    %16 = arith.addf %13, %15 : vector<64x128xf32>
    %c0_13 = arith.constant 0 : index
    %c0_14 = arith.constant 0 : index
    %17 = vector.load %arg12[%c0_13, %c0_14] : memref<64x128xf32, #tpu.memory_space<vmem>>, vector<64x128xf32>
    tpu.vector_store %arg12[%c0_13, %c0_14], %16 {strides = array<i32>} : memref<64x128xf32, #tpu.memory_space<vmem>>, vector<64x128xf32>,
    %c0_i32 = arith.constant 0 : i32
    %18 = arith.cmpi eq, %arg1, %c0_i32 : i32
    %19 = arith.extui %18 : i1 to i32
    %c0_i32_15 = arith.constant 0 : i32
    %20 = arith.cmpi ne, %19, %c0_i32_15 : i32
    scf.if %20 {
      %cst_85 = arith.constant 0.000000e+00 : f32
      %357 = vector.broadcast %cst_85 : f32 to vector<8x128xf32>
      %c0_86 = arith.constant 0 : index
      %c0_87 = arith.constant 0 : index
      %358 = vector.load %arg16[%c0_86, %c0_87] : memref<8x128xf32, #tpu.memory_space<vmem>>, vector<8x128xf32>
      tpu.vector_store %arg16[%c0_86, %c0_87], %357 {strides = array<i32>} : memref<8x128xf32, #tpu.memory_space<vmem>>, vector<8x128xf32>,
    } else {
    }
    %c0_16 = arith.constant 0 : index
    %c0_17 = arith.constant 0 : index
    %21 = vector.load %arg2[%c0_16, %c0_17] : memref<8x1xi32, #tpu.memory_space<vmem>>, vector<8x1xi32>
    %c0_18 = arith.constant 0 : index
    %c0_19 = arith.constant 0 : index
    %22 = vector.load %arg8[%c0_18, %c0_19] : memref<128x384xbf16, #tpu.memory_space<vmem>>, vector<128x384xbf16>
    %c0_20 = arith.constant 0 : index
    %c0_21 = arith.constant 0 : index
    %23 = vector.load %arg9[%c0_20, %c0_21] : memref<1x384xf32, #tpu.memory_space<vmem>>, vector<1x384xf32>
    %c0_22 = arith.constant 0 : index
    %c0_23 = arith.constant 0 : index
    %24 = vector.load %arg16[%c0_22, %c0_23] : memref<8x128xf32, #tpu.memory_space<vmem>>, vector<8x128xf32>
    %c0_i32_24 = arith.constant 0 : i32
    %c8_i32 = arith.constant 8 : i32
    %25 = arith.muli %arg1, %c8_i32 : i32
    %26 = arith.addi %25, %c0_i32_24 : i32
    %c8_i32_25 = arith.constant 8 : i32
    %27 = arith.muli %c0_i32_24, %c8_i32_25 : i32
    %28 = tpu.assume_multiple %27, 8 : i32
    %29 = arith.index_cast %28 : i32 to index
    %c0_26 = arith.constant 0 : index
    %30 = vector.load %arg15[%29, %c0_26] : memref<64x384xf32, #tpu.memory_space<vmem>>, vector<8x384xf32>
    %31 = arith.truncf %24 : vector<8x128xf32> to vector<8x128xbf16>
    %cst_27 = arith.constant dense<0.000000e+00> : vector<8x384xf32>
    %32 = tpu.matmul %31, %22, %cst_27 {dimension_numbers = #tpu.dot_dimension_numbers<[1], [0], [0], [1], [0, 0, 1, 1], [], []>} : vector<8x128xbf16>, vector<128x384xbf16>, vector<8x384xf32> -> vector<8x384xf32>
    %33 = vector.broadcast %23 : vector<1x384xf32> to vector<8x384xf32>
    %34 = arith.addf %32, %33 : vector<8x384xf32>
    %35 = vector.extract_strided_slice %30 {offsets = [0, 0], sizes = [8, 128], strides = [1, 1]} : vector<8x384xf32> to vector<8x128xf32>
    %36 = vector.extract_strided_slice %34 {offsets = [0, 0], sizes = [8, 128], strides = [1, 1]} : vector<8x384xf32> to vector<8x128xf32>
    %37 = arith.addf %35, %36 : vector<8x128xf32>
    %38 = arith.negf %37 : vector<8x128xf32>
    %39 = math.exp %38 : vector<8x128xf32>
    %cst_28 = arith.constant 1.000000e+00 : f32
    %40 = vector.broadcast %cst_28 : f32 to vector<8x128xf32>
    %41 = arith.addf %40, %39 : vector<8x128xf32>
    %42 = arith.divf %40, %41 : vector<8x128xf32>
    %43 = vector.extract_strided_slice %30 {offsets = [0, 128], sizes = [8, 128], strides = [1, 1]} : vector<8x384xf32> to vector<8x128xf32>
    %44 = vector.extract_strided_slice %34 {offsets = [0, 128], sizes = [8, 128], strides = [1, 1]} : vector<8x384xf32> to vector<8x128xf32>
    %45 = arith.addf %43, %44 : vector<8x128xf32>
    %46 = arith.negf %45 : vector<8x128xf32>
    %47 = math.exp %46 : vector<8x128xf32>
    %cst_29 = arith.constant 1.000000e+00 : f32
    %48 = vector.broadcast %cst_29 : f32 to vector<8x128xf32>
    %49 = arith.addf %48, %47 : vector<8x128xf32>
    %50 = arith.divf %48, %49 : vector<8x128xf32>
    %51 = vector.extract_strided_slice %30 {offsets = [0, 256], sizes = [8, 128], strides = [1, 1]} : vector<8x384xf32> to vector<8x128xf32>
    %52 = vector.extract_strided_slice %34 {offsets = [0, 256], sizes = [8, 128], strides = [1, 1]} : vector<8x384xf32> to vector<8x128xf32>
    %53 = arith.mulf %42, %52 : vector<8x128xf32>
    %54 = arith.addf %51, %53 : vector<8x128xf32>
    %55 = math.tanh %54 : vector<8x128xf32>
    %cst_30 = arith.constant 1.000000e+00 : f32
    %56 = vector.broadcast %cst_30 : f32 to vector<8x128xf32>
    %57 = arith.subf %56, %50 : vector<8x128xf32>
    %58 = arith.mulf %57, %55 : vector<8x128xf32>
    %59 = arith.mulf %50, %24 : vector<8x128xf32>
    %60 = arith.addf %58, %59 : vector<8x128xf32>
    %61 = vector.broadcast %26 : i32 to vector<8x1xi32>
    %62 = arith.cmpi sgt, %21, %61 : vector<8x1xi32>
    %63 = vector.shape_cast %62 : vector<8x1xi1> to vector<8x1xi1>
    %64 = vector.broadcast %63 : vector<8x1xi1> to vector<8x128xi1>
    %65 = arith.select %64, %60, %24 : vector<8x128xi1>, vector<8x128xf32>
    %c1_i32 = arith.constant 1 : i32
    %c8_i32_31 = arith.constant 8 : i32
    %66 = arith.muli %arg1, %c8_i32_31 : i32
    %67 = arith.addi %66, %c1_i32 : i32
    %c8_i32_32 = arith.constant 8 : i32
    %68 = arith.muli %c1_i32, %c8_i32_32 : i32
    %69 = tpu.assume_multiple %68, 8 : i32
    %70 = arith.index_cast %69 : i32 to index
    %c0_33 = arith.constant 0 : index
    %71 = vector.load %arg15[%70, %c0_33] : memref<64x384xf32, #tpu.memory_space<vmem>>, vector<8x384xf32>
    %72 = arith.truncf %65 : vector<8x128xf32> to vector<8x128xbf16>
    %cst_34 = arith.constant dense<0.000000e+00> : vector<8x384xf32>
    %73 = tpu.matmul %72, %22, %cst_34 {dimension_numbers = #tpu.dot_dimension_numbers<[1], [0], [0], [1], [0, 0, 1, 1], [], []>} : vector<8x128xbf16>, vector<128x384xbf16>, vector<8x384xf32> -> vector<8x384xf32>
    %74 = vector.broadcast %23 : vector<1x384xf32> to vector<8x384xf32>
    %75 = arith.addf %73, %74 : vector<8x384xf32>
    %76 = vector.extract_strided_slice %71 {offsets = [0, 0], sizes = [8, 128], strides = [1, 1]} : vector<8x384xf32> to vector<8x128xf32>
    %77 = vector.extract_strided_slice %75 {offsets = [0, 0], sizes = [8, 128], strides = [1, 1]} : vector<8x384xf32> to vector<8x128xf32>
    %78 = arith.addf %76, %77 : vector<8x128xf32>
    %79 = arith.negf %78 : vector<8x128xf32>
    %80 = math.exp %79 : vector<8x128xf32>
    %cst_35 = arith.constant 1.000000e+00 : f32
    %81 = vector.broadcast %cst_35 : f32 to vector<8x128xf32>
    %82 = arith.addf %81, %80 : vector<8x128xf32>
    %83 = arith.divf %81, %82 : vector<8x128xf32>
    %84 = vector.extract_strided_slice %71 {offsets = [0, 128], sizes = [8, 128], strides = [1, 1]} : vector<8x384xf32> to vector<8x128xf32>
    %85 = vector.extract_strided_slice %75 {offsets = [0, 128], sizes = [8, 128], strides = [1, 1]} : vector<8x384xf32> to vector<8x128xf32>
    %86 = arith.addf %84, %85 : vector<8x128xf32>
    %87 = arith.negf %86 : vector<8x128xf32>
    %88 = math.exp %87 : vector<8x128xf32>
    %cst_36 = arith.constant 1.000000e+00 : f32
    %89 = vector.broadcast %cst_36 : f32 to vector<8x128xf32>
    %90 = arith.addf %89, %88 : vector<8x128xf32>
    %91 = arith.divf %89, %90 : vector<8x128xf32>
    %92 = vector.extract_strided_slice %71 {offsets = [0, 256], sizes = [8, 128], strides = [1, 1]} : vector<8x384xf32> to vector<8x128xf32>
    %93 = vector.extract_strided_slice %75 {offsets = [0, 256], sizes = [8, 128], strides = [1, 1]} : vector<8x384xf32> to vector<8x128xf32>
    %94 = arith.mulf %83, %93 : vector<8x128xf32>
    %95 = arith.addf %92, %94 : vector<8x128xf32>
    %96 = math.tanh %95 : vector<8x128xf32>
    %cst_37 = arith.constant 1.000000e+00 : f32
    %97 = vector.broadcast %cst_37 : f32 to vector<8x128xf32>
    %98 = arith.subf %97, %91 : vector<8x128xf32>
    %99 = arith.mulf %98, %96 : vector<8x128xf32>
    %100 = arith.mulf %91, %65 : vector<8x128xf32>
    %101 = arith.addf %99, %100 : vector<8x128xf32>
    %102 = vector.broadcast %67 : i32 to vector<8x1xi32>
    %103 = arith.cmpi sgt, %21, %102 : vector<8x1xi32>
    %104 = vector.shape_cast %103 : vector<8x1xi1> to vector<8x1xi1>
    %105 = vector.broadcast %104 : vector<8x1xi1> to vector<8x128xi1>
    %106 = arith.select %105, %101, %65 : vector<8x128xi1>, vector<8x128xf32>
    %c2_i32 = arith.constant 2 : i32
    %c8_i32_38 = arith.constant 8 : i32
    %107 = arith.muli %arg1, %c8_i32_38 : i32
    %108 = arith.addi %107, %c2_i32 : i32
    %c8_i32_39 = arith.constant 8 : i32
    %109 = arith.muli %c2_i32, %c8_i32_39 : i32
    %110 = tpu.assume_multiple %109, 8 : i32
    %111 = arith.index_cast %110 : i32 to index
    %c0_40 = arith.constant 0 : index
    %112 = vector.load %arg15[%111, %c0_40] : memref<64x384xf32, #tpu.memory_space<vmem>>, vector<8x384xf32>
    %113 = arith.truncf %106 : vector<8x128xf32> to vector<8x128xbf16>
    %cst_41 = arith.constant dense<0.000000e+00> : vector<8x384xf32>
    %114 = tpu.matmul %113, %22, %cst_41 {dimension_numbers = #tpu.dot_dimension_numbers<[1], [0], [0], [1], [0, 0, 1, 1], [], []>} : vector<8x128xbf16>, vector<128x384xbf16>, vector<8x384xf32> -> vector<8x384xf32>
    %115 = vector.broadcast %23 : vector<1x384xf32> to vector<8x384xf32>
    %116 = arith.addf %114, %115 : vector<8x384xf32>
    %117 = vector.extract_strided_slice %112 {offsets = [0, 0], sizes = [8, 128], strides = [1, 1]} : vector<8x384xf32> to vector<8x128xf32>
    %118 = vector.extract_strided_slice %116 {offsets = [0, 0], sizes = [8, 128], strides = [1, 1]} : vector<8x384xf32> to vector<8x128xf32>
    %119 = arith.addf %117, %118 : vector<8x128xf32>
    %120 = arith.negf %119 : vector<8x128xf32>
    %121 = math.exp %120 : vector<8x128xf32>
    %cst_42 = arith.constant 1.000000e+00 : f32
    %122 = vector.broadcast %cst_42 : f32 to vector<8x128xf32>
    %123 = arith.addf %122, %121 : vector<8x128xf32>
    %124 = arith.divf %122, %123 : vector<8x128xf32>
    %125 = vector.extract_strided_slice %112 {offsets = [0, 128], sizes = [8, 128], strides = [1, 1]} : vector<8x384xf32> to vector<8x128xf32>
    %126 = vector.extract_strided_slice %116 {offsets = [0, 128], sizes = [8, 128], strides = [1, 1]} : vector<8x384xf32> to vector<8x128xf32>
    %127 = arith.addf %125, %126 : vector<8x128xf32>
    %128 = arith.negf %127 : vector<8x128xf32>
    %129 = math.exp %128 : vector<8x128xf32>
    %cst_43 = arith.constant 1.000000e+00 : f32
    %130 = vector.broadcast %cst_43 : f32 to vector<8x128xf32>
    %131 = arith.addf %130, %129 : vector<8x128xf32>
    %132 = arith.divf %130, %131 : vector<8x128xf32>
    %133 = vector.extract_strided_slice %112 {offsets = [0, 256], sizes = [8, 128], strides = [1, 1]} : vector<8x384xf32> to vector<8x128xf32>
    %134 = vector.extract_strided_slice %116 {offsets = [0, 256], sizes = [8, 128], strides = [1, 1]} : vector<8x384xf32> to vector<8x128xf32>
    %135 = arith.mulf %124, %134 : vector<8x128xf32>
    %136 = arith.addf %133, %135 : vector<8x128xf32>
    %137 = math.tanh %136 : vector<8x128xf32>
    %cst_44 = arith.constant 1.000000e+00 : f32
    %138 = vector.broadcast %cst_44 : f32 to vector<8x128xf32>
    %139 = arith.subf %138, %132 : vector<8x128xf32>
    %140 = arith.mulf %139, %137 : vector<8x128xf32>
    %141 = arith.mulf %132, %106 : vector<8x128xf32>
    %142 = arith.addf %140, %141 : vector<8x128xf32>
    %143 = vector.broadcast %108 : i32 to vector<8x1xi32>
    %144 = arith.cmpi sgt, %21, %143 : vector<8x1xi32>
    %145 = vector.shape_cast %144 : vector<8x1xi1> to vector<8x1xi1>
    %146 = vector.broadcast %145 : vector<8x1xi1> to vector<8x128xi1>
    %147 = arith.select %146, %142, %106 : vector<8x128xi1>, vector<8x128xf32>
    %c3_i32 = arith.constant 3 : i32
    %c8_i32_45 = arith.constant 8 : i32
    %148 = arith.muli %arg1, %c8_i32_45 : i32
    %149 = arith.addi %148, %c3_i32 : i32
    %c8_i32_46 = arith.constant 8 : i32
    %150 = arith.muli %c3_i32, %c8_i32_46 : i32
    %151 = tpu.assume_multiple %150, 8 : i32
    %152 = arith.index_cast %151 : i32 to index
    %c0_47 = arith.constant 0 : index
    %153 = vector.load %arg15[%152, %c0_47] : memref<64x384xf32, #tpu.memory_space<vmem>>, vector<8x384xf32>
    %154 = arith.truncf %147 : vector<8x128xf32> to vector<8x128xbf16>
    %cst_48 = arith.constant dense<0.000000e+00> : vector<8x384xf32>
    %155 = tpu.matmul %154, %22, %cst_48 {dimension_numbers = #tpu.dot_dimension_numbers<[1], [0], [0], [1], [0, 0, 1, 1], [], []>} : vector<8x128xbf16>, vector<128x384xbf16>, vector<8x384xf32> -> vector<8x384xf32>
    %156 = vector.broadcast %23 : vector<1x384xf32> to vector<8x384xf32>
    %157 = arith.addf %155, %156 : vector<8x384xf32>
    %158 = vector.extract_strided_slice %153 {offsets = [0, 0], sizes = [8, 128], strides = [1, 1]} : vector<8x384xf32> to vector<8x128xf32>
    %159 = vector.extract_strided_slice %157 {offsets = [0, 0], sizes = [8, 128], strides = [1, 1]} : vector<8x384xf32> to vector<8x128xf32>
    %160 = arith.addf %158, %159 : vector<8x128xf32>
    %161 = arith.negf %160 : vector<8x128xf32>
    %162 = math.exp %161 : vector<8x128xf32>
    %cst_49 = arith.constant 1.000000e+00 : f32
    %163 = vector.broadcast %cst_49 : f32 to vector<8x128xf32>
    %164 = arith.addf %163, %162 : vector<8x128xf32>
    %165 = arith.divf %163, %164 : vector<8x128xf32>
    %166 = vector.extract_strided_slice %153 {offsets = [0, 128], sizes = [8, 128], strides = [1, 1]} : vector<8x384xf32> to vector<8x128xf32>
    %167 = vector.extract_strided_slice %157 {offsets = [0, 128], sizes = [8, 128], strides = [1, 1]} : vector<8x384xf32> to vector<8x128xf32>
    %168 = arith.addf %166, %167 : vector<8x128xf32>
    %169 = arith.negf %168 : vector<8x128xf32>
    %170 = math.exp %169 : vector<8x128xf32>
    %cst_50 = arith.constant 1.000000e+00 : f32
    %171 = vector.broadcast %cst_50 : f32 to vector<8x128xf32>
    %172 = arith.addf %171, %170 : vector<8x128xf32>
    %173 = arith.divf %171, %172 : vector<8x128xf32>
    %174 = vector.extract_strided_slice %153 {offsets = [0, 256], sizes = [8, 128], strides = [1, 1]} : vector<8x384xf32> to vector<8x128xf32>
    %175 = vector.extract_strided_slice %157 {offsets = [0, 256], sizes = [8, 128], strides = [1, 1]} : vector<8x384xf32> to vector<8x128xf32>
    %176 = arith.mulf %165, %175 : vector<8x128xf32>
    %177 = arith.addf %174, %176 : vector<8x128xf32>
    %178 = math.tanh %177 : vector<8x128xf32>
    %cst_51 = arith.constant 1.000000e+00 : f32
    %179 = vector.broadcast %cst_51 : f32 to vector<8x128xf32>
    %180 = arith.subf %179, %173 : vector<8x128xf32>
    %181 = arith.mulf %180, %178 : vector<8x128xf32>
    %182 = arith.mulf %173, %147 : vector<8x128xf32>
    %183 = arith.addf %181, %182 : vector<8x128xf32>
    %184 = vector.broadcast %149 : i32 to vector<8x1xi32>
    %185 = arith.cmpi sgt, %21, %184 : vector<8x1xi32>
    %186 = vector.shape_cast %185 : vector<8x1xi1> to vector<8x1xi1>
    %187 = vector.broadcast %186 : vector<8x1xi1> to vector<8x128xi1>
    %188 = arith.select %187, %183, %147 : vector<8x128xi1>, vector<8x128xf32>
    %c4_i32 = arith.constant 4 : i32
    %c8_i32_52 = arith.constant 8 : i32
    %189 = arith.muli %arg1, %c8_i32_52 : i32
    %190 = arith.addi %189, %c4_i32 : i32
    %c8_i32_53 = arith.constant 8 : i32
    %191 = arith.muli %c4_i32, %c8_i32_53 : i32
    %192 = tpu.assume_multiple %191, 8 : i32
    %193 = arith.index_cast %192 : i32 to index
    %c0_54 = arith.constant 0 : index
    %194 = vector.load %arg15[%193, %c0_54] : memref<64x384xf32, #tpu.memory_space<vmem>>, vector<8x384xf32>
    %195 = arith.truncf %188 : vector<8x128xf32> to vector<8x128xbf16>
    %cst_55 = arith.constant dense<0.000000e+00> : vector<8x384xf32>
    %196 = tpu.matmul %195, %22, %cst_55 {dimension_numbers = #tpu.dot_dimension_numbers<[1], [0], [0], [1], [0, 0, 1, 1], [], []>} : vector<8x128xbf16>, vector<128x384xbf16>, vector<8x384xf32> -> vector<8x384xf32>
    %197 = vector.broadcast %23 : vector<1x384xf32> to vector<8x384xf32>
    %198 = arith.addf %196, %197 : vector<8x384xf32>
    %199 = vector.extract_strided_slice %194 {offsets = [0, 0], sizes = [8, 128], strides = [1, 1]} : vector<8x384xf32> to vector<8x128xf32>
    %200 = vector.extract_strided_slice %198 {offsets = [0, 0], sizes = [8, 128], strides = [1, 1]} : vector<8x384xf32> to vector<8x128xf32>
    %201 = arith.addf %199, %200 : vector<8x128xf32>
    %202 = arith.negf %201 : vector<8x128xf32>
    %203 = math.exp %202 : vector<8x128xf32>
    %cst_56 = arith.constant 1.000000e+00 : f32
    %204 = vector.broadcast %cst_56 : f32 to vector<8x128xf32>
    %205 = arith.addf %204, %203 : vector<8x128xf32>
    %206 = arith.divf %204, %205 : vector<8x128xf32>
    %207 = vector.extract_strided_slice %194 {offsets = [0, 128], sizes = [8, 128], strides = [1, 1]} : vector<8x384xf32> to vector<8x128xf32>
    %208 = vector.extract_strided_slice %198 {offsets = [0, 128], sizes = [8, 128], strides = [1, 1]} : vector<8x384xf32> to vector<8x128xf32>
    %209 = arith.addf %207, %208 : vector<8x128xf32>
    %210 = arith.negf %209 : vector<8x128xf32>
    %211 = math.exp %210 : vector<8x128xf32>
    %cst_57 = arith.constant 1.000000e+00 : f32
    %212 = vector.broadcast %cst_57 : f32 to vector<8x128xf32>
    %213 = arith.addf %212, %211 : vector<8x128xf32>
    %214 = arith.divf %212, %213 : vector<8x128xf32>
    %215 = vector.extract_strided_slice %194 {offsets = [0, 256], sizes = [8, 128], strides = [1, 1]} : vector<8x384xf32> to vector<8x128xf32>
    %216 = vector.extract_strided_slice %198 {offsets = [0, 256], sizes = [8, 128], strides = [1, 1]} : vector<8x384xf32> to vector<8x128xf32>
    %217 = arith.mulf %206, %216 : vector<8x128xf32>
    %218 = arith.addf %215, %217 : vector<8x128xf32>
    %219 = math.tanh %218 : vector<8x128xf32>
    %cst_58 = arith.constant 1.000000e+00 : f32
    %220 = vector.broadcast %cst_58 : f32 to vector<8x128xf32>
    %221 = arith.subf %220, %214 : vector<8x128xf32>
    %222 = arith.mulf %221, %219 : vector<8x128xf32>
    %223 = arith.mulf %214, %188 : vector<8x128xf32>
    %224 = arith.addf %222, %223 : vector<8x128xf32>
    %225 = vector.broadcast %190 : i32 to vector<8x1xi32>
    %226 = arith.cmpi sgt, %21, %225 : vector<8x1xi32>
    %227 = vector.shape_cast %226 : vector<8x1xi1> to vector<8x1xi1>
    %228 = vector.broadcast %227 : vector<8x1xi1> to vector<8x128xi1>
    %229 = arith.select %228, %224, %188 : vector<8x128xi1>, vector<8x128xf32>
    %c5_i32 = arith.constant 5 : i32
    %c8_i32_59 = arith.constant 8 : i32
    %230 = arith.muli %arg1, %c8_i32_59 : i32
    %231 = arith.addi %230, %c5_i32 : i32
    %c8_i32_60 = arith.constant 8 : i32
    %232 = arith.muli %c5_i32, %c8_i32_60 : i32
    %233 = tpu.assume_multiple %232, 8 : i32
    %234 = arith.index_cast %233 : i32 to index
    %c0_61 = arith.constant 0 : index
    %235 = vector.load %arg15[%234, %c0_61] : memref<64x384xf32, #tpu.memory_space<vmem>>, vector<8x384xf32>
    %236 = arith.truncf %229 : vector<8x128xf32> to vector<8x128xbf16>
    %cst_62 = arith.constant dense<0.000000e+00> : vector<8x384xf32>
    %237 = tpu.matmul %236, %22, %cst_62 {dimension_numbers = #tpu.dot_dimension_numbers<[1], [0], [0], [1], [0, 0, 1, 1], [], []>} : vector<8x128xbf16>, vector<128x384xbf16>, vector<8x384xf32> -> vector<8x384xf32>
    %238 = vector.broadcast %23 : vector<1x384xf32> to vector<8x384xf32>
    %239 = arith.addf %237, %238 : vector<8x384xf32>
    %240 = vector.extract_strided_slice %235 {offsets = [0, 0], sizes = [8, 128], strides = [1, 1]} : vector<8x384xf32> to vector<8x128xf32>
    %241 = vector.extract_strided_slice %239 {offsets = [0, 0], sizes = [8, 128], strides = [1, 1]} : vector<8x384xf32> to vector<8x128xf32>
    %242 = arith.addf %240, %241 : vector<8x128xf32>
    %243 = arith.negf %242 : vector<8x128xf32>
    %244 = math.exp %243 : vector<8x128xf32>
    %cst_63 = arith.constant 1.000000e+00 : f32
    %245 = vector.broadcast %cst_63 : f32 to vector<8x128xf32>
    %246 = arith.addf %245, %244 : vector<8x128xf32>
    %247 = arith.divf %245, %246 : vector<8x128xf32>
    %248 = vector.extract_strided_slice %235 {offsets = [0, 128], sizes = [8, 128], strides = [1, 1]} : vector<8x384xf32> to vector<8x128xf32>
    %249 = vector.extract_strided_slice %239 {offsets = [0, 128], sizes = [8, 128], strides = [1, 1]} : vector<8x384xf32> to vector<8x128xf32>
    %250 = arith.addf %248, %249 : vector<8x128xf32>
    %251 = arith.negf %250 : vector<8x128xf32>
    %252 = math.exp %251 : vector<8x128xf32>
    %cst_64 = arith.constant 1.000000e+00 : f32
    %253 = vector.broadcast %cst_64 : f32 to vector<8x128xf32>
    %254 = arith.addf %253, %252 : vector<8x128xf32>
    %255 = arith.divf %253, %254 : vector<8x128xf32>
    %256 = vector.extract_strided_slice %235 {offsets = [0, 256], sizes = [8, 128], strides = [1, 1]} : vector<8x384xf32> to vector<8x128xf32>
    %257 = vector.extract_strided_slice %239 {offsets = [0, 256], sizes = [8, 128], strides = [1, 1]} : vector<8x384xf32> to vector<8x128xf32>
    %258 = arith.mulf %247, %257 : vector<8x128xf32>
    %259 = arith.addf %256, %258 : vector<8x128xf32>
    %260 = math.tanh %259 : vector<8x128xf32>
    %cst_65 = arith.constant 1.000000e+00 : f32
    %261 = vector.broadcast %cst_65 : f32 to vector<8x128xf32>
    %262 = arith.subf %261, %255 : vector<8x128xf32>
    %263 = arith.mulf %262, %260 : vector<8x128xf32>
    %264 = arith.mulf %255, %229 : vector<8x128xf32>
    %265 = arith.addf %263, %264 : vector<8x128xf32>
    %266 = vector.broadcast %231 : i32 to vector<8x1xi32>
    %267 = arith.cmpi sgt, %21, %266 : vector<8x1xi32>
    %268 = vector.shape_cast %267 : vector<8x1xi1> to vector<8x1xi1>
    %269 = vector.broadcast %268 : vector<8x1xi1> to vector<8x128xi1>
    %270 = arith.select %269, %265, %229 : vector<8x128xi1>, vector<8x128xf32>
    %c6_i32 = arith.constant 6 : i32
    %c8_i32_66 = arith.constant 8 : i32
    %271 = arith.muli %arg1, %c8_i32_66 : i32
    %272 = arith.addi %271, %c6_i32 : i32
    %c8_i32_67 = arith.constant 8 : i32
    %273 = arith.muli %c6_i32, %c8_i32_67 : i32
    %274 = tpu.assume_multiple %273, 8 : i32
    %275 = arith.index_cast %274 : i32 to index
    %c0_68 = arith.constant 0 : index
    %276 = vector.load %arg15[%275, %c0_68] : memref<64x384xf32, #tpu.memory_space<vmem>>, vector<8x384xf32>
    %277 = arith.truncf %270 : vector<8x128xf32> to vector<8x128xbf16>
    %cst_69 = arith.constant dense<0.000000e+00> : vector<8x384xf32>
    %278 = tpu.matmul %277, %22, %cst_69 {dimension_numbers = #tpu.dot_dimension_numbers<[1], [0], [0], [1], [0, 0, 1, 1], [], []>} : vector<8x128xbf16>, vector<128x384xbf16>, vector<8x384xf32> -> vector<8x384xf32>
    %279 = vector.broadcast %23 : vector<1x384xf32> to vector<8x384xf32>
    %280 = arith.addf %278, %279 : vector<8x384xf32>
    %281 = vector.extract_strided_slice %276 {offsets = [0, 0], sizes = [8, 128], strides = [1, 1]} : vector<8x384xf32> to vector<8x128xf32>
    %282 = vector.extract_strided_slice %280 {offsets = [0, 0], sizes = [8, 128], strides = [1, 1]} : vector<8x384xf32> to vector<8x128xf32>
    %283 = arith.addf %281, %282 : vector<8x128xf32>
    %284 = arith.negf %283 : vector<8x128xf32>
    %285 = math.exp %284 : vector<8x128xf32>
    %cst_70 = arith.constant 1.000000e+00 : f32
    %286 = vector.broadcast %cst_70 : f32 to vector<8x128xf32>
    %287 = arith.addf %286, %285 : vector<8x128xf32>
    %288 = arith.divf %286, %287 : vector<8x128xf32>
    %289 = vector.extract_strided_slice %276 {offsets = [0, 128], sizes = [8, 128], strides = [1, 1]} : vector<8x384xf32> to vector<8x128xf32>
    %290 = vector.extract_strided_slice %280 {offsets = [0, 128], sizes = [8, 128], strides = [1, 1]} : vector<8x384xf32> to vector<8x128xf32>
    %291 = arith.addf %289, %290 : vector<8x128xf32>
    %292 = arith.negf %291 : vector<8x128xf32>
    %293 = math.exp %292 : vector<8x128xf32>
    %cst_71 = arith.constant 1.000000e+00 : f32
    %294 = vector.broadcast %cst_71 : f32 to vector<8x128xf32>
    %295 = arith.addf %294, %293 : vector<8x128xf32>
    %296 = arith.divf %294, %295 : vector<8x128xf32>
    %297 = vector.extract_strided_slice %276 {offsets = [0, 256], sizes = [8, 128], strides = [1, 1]} : vector<8x384xf32> to vector<8x128xf32>
    %298 = vector.extract_strided_slice %280 {offsets = [0, 256], sizes = [8, 128], strides = [1, 1]} : vector<8x384xf32> to vector<8x128xf32>
    %299 = arith.mulf %288, %298 : vector<8x128xf32>
    %300 = arith.addf %297, %299 : vector<8x128xf32>
    %301 = math.tanh %300 : vector<8x128xf32>
    %cst_72 = arith.constant 1.000000e+00 : f32
    %302 = vector.broadcast %cst_72 : f32 to vector<8x128xf32>
    %303 = arith.subf %302, %296 : vector<8x128xf32>
    %304 = arith.mulf %303, %301 : vector<8x128xf32>
    %305 = arith.mulf %296, %270 : vector<8x128xf32>
    %306 = arith.addf %304, %305 : vector<8x128xf32>
    %307 = vector.broadcast %272 : i32 to vector<8x1xi32>
    %308 = arith.cmpi sgt, %21, %307 : vector<8x1xi32>
    %309 = vector.shape_cast %308 : vector<8x1xi1> to vector<8x1xi1>
    %310 = vector.broadcast %309 : vector<8x1xi1> to vector<8x128xi1>
    %311 = arith.select %310, %306, %270 : vector<8x128xi1>, vector<8x128xf32>
    %c7_i32 = arith.constant 7 : i32
    %c8_i32_73 = arith.constant 8 : i32
    %312 = arith.muli %arg1, %c8_i32_73 : i32
    %313 = arith.addi %312, %c7_i32 : i32
    %c8_i32_74 = arith.constant 8 : i32
    %314 = arith.muli %c7_i32, %c8_i32_74 : i32
    %315 = tpu.assume_multiple %314, 8 : i32
    %316 = arith.index_cast %315 : i32 to index
    %c0_75 = arith.constant 0 : index
    %317 = vector.load %arg15[%316, %c0_75] : memref<64x384xf32, #tpu.memory_space<vmem>>, vector<8x384xf32>
    %318 = arith.truncf %311 : vector<8x128xf32> to vector<8x128xbf16>
    %cst_76 = arith.constant dense<0.000000e+00> : vector<8x384xf32>
    %319 = tpu.matmul %318, %22, %cst_76 {dimension_numbers = #tpu.dot_dimension_numbers<[1], [0], [0], [1], [0, 0, 1, 1], [], []>} : vector<8x128xbf16>, vector<128x384xbf16>, vector<8x384xf32> -> vector<8x384xf32>
    %320 = vector.broadcast %23 : vector<1x384xf32> to vector<8x384xf32>
    %321 = arith.addf %319, %320 : vector<8x384xf32>
    %322 = vector.extract_strided_slice %317 {offsets = [0, 0], sizes = [8, 128], strides = [1, 1]} : vector<8x384xf32> to vector<8x128xf32>
    %323 = vector.extract_strided_slice %321 {offsets = [0, 0], sizes = [8, 128], strides = [1, 1]} : vector<8x384xf32> to vector<8x128xf32>
    %324 = arith.addf %322, %323 : vector<8x128xf32>
    %325 = arith.negf %324 : vector<8x128xf32>
    %326 = math.exp %325 : vector<8x128xf32>
    %cst_77 = arith.constant 1.000000e+00 : f32
    %327 = vector.broadcast %cst_77 : f32 to vector<8x128xf32>
    %328 = arith.addf %327, %326 : vector<8x128xf32>
    %329 = arith.divf %327, %328 : vector<8x128xf32>
    %330 = vector.extract_strided_slice %317 {offsets = [0, 128], sizes = [8, 128], strides = [1, 1]} : vector<8x384xf32> to vector<8x128xf32>
    %331 = vector.extract_strided_slice %321 {offsets = [0, 128], sizes = [8, 128], strides = [1, 1]} : vector<8x384xf32> to vector<8x128xf32>
    %332 = arith.addf %330, %331 : vector<8x128xf32>
    %333 = arith.negf %332 : vector<8x128xf32>
    %334 = math.exp %333 : vector<8x128xf32>
    %cst_78 = arith.constant 1.000000e+00 : f32
    %335 = vector.broadcast %cst_78 : f32 to vector<8x128xf32>
    %336 = arith.addf %335, %334 : vector<8x128xf32>
    %337 = arith.divf %335, %336 : vector<8x128xf32>
    %338 = vector.extract_strided_slice %317 {offsets = [0, 256], sizes = [8, 128], strides = [1, 1]} : vector<8x384xf32> to vector<8x128xf32>
    %339 = vector.extract_strided_slice %321 {offsets = [0, 256], sizes = [8, 128], strides = [1, 1]} : vector<8x384xf32> to vector<8x128xf32>
    %340 = arith.mulf %329, %339 : vector<8x128xf32>
    %341 = arith.addf %338, %340 : vector<8x128xf32>
    %342 = math.tanh %341 : vector<8x128xf32>
    %cst_79 = arith.constant 1.000000e+00 : f32
    %343 = vector.broadcast %cst_79 : f32 to vector<8x128xf32>
    %344 = arith.subf %343, %337 : vector<8x128xf32>
    %345 = arith.mulf %344, %342 : vector<8x128xf32>
    %346 = arith.mulf %337, %311 : vector<8x128xf32>
    %347 = arith.addf %345, %346 : vector<8x128xf32>
    %348 = vector.broadcast %313 : i32 to vector<8x1xi32>
    %349 = arith.cmpi sgt, %21, %348 : vector<8x1xi32>
    %350 = vector.shape_cast %349 : vector<8x1xi1> to vector<8x1xi1>
    %351 = vector.broadcast %350 : vector<8x1xi1> to vector<8x128xi1>
    %352 = arith.select %351, %347, %311 : vector<8x128xi1>, vector<8x128xf32>
    %c8_i32_80 = arith.constant 8 : i32
    %c0_81 = arith.constant 0 : index
    %c0_82 = arith.constant 0 : index
    %353 = vector.load %arg16[%c0_81, %c0_82] : memref<8x128xf32, #tpu.memory_space<vmem>>, vector<8x128xf32>
    tpu.vector_store %arg16[%c0_81, %c0_82], %352 {strides = array<i32>} : memref<8x128xf32, #tpu.memory_space<vmem>>, vector<8x128xf32>,
    %c0_i32_83 = arith.constant 0 : i32
    %354 = arith.cmpi eq, %arg1, %c0_i32_83 : i32
    %355 = arith.extui %354 : i1 to i32
    %c0_i32_84 = arith.constant 0 : i32
    %356 = arith.cmpi ne, %355, %c0_i32_84 : i32
    scf.if %356 {
      %c0_85 = arith.constant 0 : index
      %c0_86 = arith.constant 0 : index
      %357 = vector.load %arg13[%c0_85, %c0_86] : memref<8x128xf32, #tpu.memory_space<vmem>>, vector<8x128xf32>
      tpu.vector_store %arg13[%c0_85, %c0_86], %352 {strides = array<i32>} : memref<8x128xf32, #tpu.memory_space<vmem>>, vector<8x128xf32>,
      %358 = arith.truncf %352 : vector<8x128xf32> to vector<8x128xbf16>
      %c0_87 = arith.constant 0 : index
      %c0_88 = arith.constant 0 : index
      %359 = vector.load %arg10[%c0_87, %c0_88] : memref<128x128xbf16, #tpu.memory_space<vmem>>, vector<128x128xbf16>
      %cst_89 = arith.constant dense<0.000000e+00> : vector<8x128xf32>
      %360 = tpu.matmul %358, %359, %cst_89 {dimension_numbers = #tpu.dot_dimension_numbers<[1], [0], [0], [1], [0, 0, 1, 1], [], []>} : vector<8x128xbf16>, vector<128x128xbf16>, vector<8x128xf32> -> vector<8x128xf32>
      %c0_90 = arith.constant 0 : index
      %c0_91 = arith.constant 0 : index
      %361 = vector.load %arg11[%c0_90, %c0_91] : memref<1x128xf32, #tpu.memory_space<vmem>>, vector<1x128xf32>
      %362 = vector.broadcast %361 : vector<1x128xf32> to vector<8x128xf32>
      %363 = arith.addf %360, %362 : vector<8x128xf32>
      %c0_92 = arith.constant 0 : index
      %c0_93 = arith.constant 0 : index
      %364 = vector.load %arg14[%c0_92, %c0_93] : memref<8x128xf32, #tpu.memory_space<vmem>>, vector<8x128xf32>
      tpu.vector_store %arg14[%c0_92, %c0_93], %363 {strides = array<i32>} : memref<8x128xf32, #tpu.memory_space<vmem>>, vector<8x128xf32>,
    } else {
    }
    return
  }
  func.func @transform_0(%arg0: i32, %arg1: i32) -> (i32, i32) {
    %c0_i32 = arith.constant 0 : i32
    %c0_i32_0 = arith.constant 0 : i32
    return %arg0, %c0_i32 : i32, i32
  }
  func.func @transform_1(%arg0: i32, %arg1: i32) -> (i32, i32) {
    %c1_i32 = arith.constant 1 : i32
    %0 = arith.muli %arg0, %c1_i32 : i32
    %1 = arith.addi %0, %arg1 : i32
    %c0_i32 = arith.constant 0 : i32
    %c0_i32_0 = arith.constant 0 : i32
    return %1, %c0_i32 : i32, i32
  }
  func.func @transform_2(%arg0: i32, %arg1: i32) -> (i32, i32) {
    %c0_i32 = arith.constant 0 : i32
    %c0_i32_0 = arith.constant 0 : i32
    %c0_i32_1 = arith.constant 0 : i32
    return %c0_i32, %c0_i32_0 : i32, i32
  }
  func.func @transform_3(%arg0: i32, %arg1: i32) -> (i32, i32) {
    %c0_i32 = arith.constant 0 : i32
    %c0_i32_0 = arith.constant 0 : i32
    %c0_i32_1 = arith.constant 0 : i32
    return %c0_i32, %c0_i32_0 : i32, i32
  }
  func.func @transform_4(%arg0: i32, %arg1: i32) -> (i32, i32) {
    %c0_i32 = arith.constant 0 : i32
    %c0_i32_0 = arith.constant 0 : i32
    %c0_i32_1 = arith.constant 0 : i32
    return %c0_i32, %c0_i32_0 : i32, i32
  }
  func.func @transform_5(%arg0: i32, %arg1: i32) -> (i32, i32) {
    %c0_i32 = arith.constant 0 : i32
    %c0_i32_0 = arith.constant 0 : i32
    %c0_i32_1 = arith.constant 0 : i32
    return %c0_i32, %c0_i32_0 : i32, i32
  }
  func.func @transform_6(%arg0: i32, %arg1: i32) -> (i32, i32) {
    %c0_i32 = arith.constant 0 : i32
    %c0_i32_0 = arith.constant 0 : i32
    %c0_i32_1 = arith.constant 0 : i32
    return %c0_i32, %c0_i32_0 : i32, i32
  }
  func.func @transform_7(%arg0: i32, %arg1: i32) -> (i32, i32) {
    %c0_i32 = arith.constant 0 : i32
    %c0_i32_0 = arith.constant 0 : i32
    %c0_i32_1 = arith.constant 0 : i32
    return %c0_i32, %c0_i32_0 : i32, i32
  }
  func.func @transform_8(%arg0: i32, %arg1: i32) -> (i32, i32) {
    %c0_i32 = arith.constant 0 : i32
    %c0_i32_0 = arith.constant 0 : i32
    %c0_i32_1 = arith.constant 0 : i32
    return %c0_i32, %c0_i32_0 : i32, i32
  }
  func.func @transform_9(%arg0: i32, %arg1: i32) -> (i32, i32) {
    %c0_i32 = arith.constant 0 : i32
    %c0_i32_0 = arith.constant 0 : i32
    %c0_i32_1 = arith.constant 0 : i32
    return %c0_i32, %c0_i32_0 : i32, i32
  }
  func.func @transform_10(%arg0: i32, %arg1: i32) -> (i32, i32) {
    %c1_i32 = arith.constant 1 : i32
    %0 = arith.muli %arg0, %c1_i32 : i32
    %1 = arith.addi %0, %arg1 : i32
    %c0_i32 = arith.constant 0 : i32
    %c0_i32_0 = arith.constant 0 : i32
    return %1, %c0_i32 : i32, i32
  }
  func.func @transform_11(%arg0: i32, %arg1: i32) -> (i32, i32) {
    %c0_i32 = arith.constant 0 : i32
    %c0_i32_0 = arith.constant 0 : i32
    return %arg0, %c0_i32 : i32, i32
  }
  func.func @transform_12(%arg0: i32, %arg1: i32) -> (i32, i32) {
    %c0_i32 = arith.constant 0 : i32
    %c0_i32_0 = arith.constant 0 : i32
    return %arg0, %c0_i32 : i32, i32
  }
}

</mosaic_0001>

<llo_original>
// kernel: tpu_custom_call.1
$region0: #{tpu_custom_call.1}
  #allocation0 [shape = 'u32[]', space=smem, size = 0x4, offset = 0x4, fixed_abs, tag = 'smem constant byte address 0x4 - core index']
  #allocation1 [shape = 'u32[144,128]{1,0:T(1,128)}', space=vmem, size = 0x12000, scoped, tag = 'internal scratch']
  #allocation2 [shape = 'f32[64,384]{1,0:T(8,128)}', space=vmem, size = 0x18000, scoped, tag = 'scratch operand']
  #allocation3 [shape = 'f32[8,128]{1,0:T(8,128)}', space=vmem, size = 0x1000, scoped, tag = 'scratch operand']
  %s0 = inlined_call_operand.vmem [shape: s32[8,1], index: 0, kind: input, shape index: {}]
  %s1 = inlined_call_operand.hbm [shape: bf16[64,384], index: 1, kind: input, shape index: {}]
  %s2 = inlined_call_operand.hbm [shape: bf16[384,768], index: 2, kind: input, shape index: {}]
  %s3 = inlined_call_operand.vmem [shape: f32[1,768], index: 3, kind: input, shape index: {}]
  %s4 = inlined_call_operand.hbm [shape: bf16[384,128], index: 4, kind: input, shape index: {}]
  %s5 = inlined_call_operand.vmem [shape: f32[1,128], index: 5, kind: input, shape index: {}]
  %s6 = inlined_call_operand.hbm [shape: bf16[128,384], index: 6, kind: input, shape index: {}]
  %s7 = inlined_call_operand.vmem [shape: f32[1,384], index: 7, kind: input, shape index: {}]
  %s8 = inlined_call_operand.hbm [shape: bf16[128,128], index: 8, kind: input, shape index: {}]
  %s9 = inlined_call_operand.vmem [shape: f32[1,128], index: 9, kind: input, shape index: {}]
  %s10 = inlined_call_operand.hbm [shape: f32[64,128], index: 10, kind: output, shape index: {0}]
  %s11 = inlined_call_operand.hbm [shape: f32[8,128], index: 11, kind: output, shape index: {1}]
  %s12 = inlined_call_operand.hbm [shape: f32[8,128], index: 12, kind: output, shape index: {2}]
  %13 = xla_tuple %s10, %s11, %s12
  %s14 = sld [smem:[#allocation0]]
  $region94: #{tpu_custom_call.1} parent=0
    _
  %s16 = ssub.s32 1, %s14
  %s17 = scalar_select 0, %s16, %s14
  $region1: #{tpu_custom_call.1} parent=0
    #allocation4 [shape = 'u8[49152]{0}', space=vmem, size = 0xc000, scoped, tag = 'input window, operand 1, single buffered']
    #allocation5 [shape = 's32[1]{0}', space=sflag, size = 0x4, scoped, tag = 'scoped memory for tpu_custom_call.1']
    #allocation6 [shape = 's32[1]{0}', space=sflag, size = 0x4, scoped, tag = 'scoped memory for tpu_custom_call.1']
    #allocation7 [shape = 'u8[589824]{0}', space=vmem, size = 0x90000, scoped, tag = 'input window, operand 2, single buffered']
    #allocation8 [shape = 's32[1]{0}', space=sflag, size = 0x4, scoped, tag = 'scoped memory for tpu_custom_call.1']
    #allocation9 [shape = 'u8[98304]{0}', space=vmem, size = 0x18000, scoped, tag = 'input window, operand 4, single buffered']
    #allocation10 [shape = 'u8[98304]{0}', space=vmem, size = 0x18000, scoped, tag = 'input window, operand 6, single buffered']
    #allocation11 [shape = 's32[1]{0}', space=sflag, size = 0x4, scoped, tag = 'scoped memory for tpu_custom_call.1']
    #allocation12 [shape = 'u8[32768]{0}', space=vmem, size = 0x8000, scoped, tag = 'input window, operand 8, single buffered']
    #allocation13 [shape = 'u8[32768]{0}', space=vmem, size = 0x8000, scoped, tag = 'output window, operand 0, single buffered']
    #allocation14 [shape = 'u8[4096]{0}', space=vmem, size = 0x1000, scoped, tag = 'output window, operand 1, single buffered']
    #allocation15 [shape = 's32[1]{0}', space=sflag, size = 0x4, scoped, tag = 'scoped memory for tpu_custom_call.1']
    #allocation16 [shape = 'u8[4096]{0}', space=vmem, size = 0x1000, scoped, tag = 'output window, operand 2, single buffered']
    %18 = vsyncpa [#allocation5], 0
    %19 = vsyncpa [#allocation8], 0
    %20 = vsyncpa [#allocation11], 0
    %21 = vsyncpa [#allocation6], 0
    %22 = vsyncpa [#allocation15], 0
    // Predicated region
    $region2: #{tpu_custom_call.1} parent=1 // pred_check
      _
    $region3: #{tpu_custom_call.1} parent=1 // pred_check_branch
      %24 = sbr.rel (0) target = $region5
    $region4: #{tpu_custom_call.1} parent=1 // pred_region
      _
    $region5: #{tpu_custom_call.1} parent=1 // pred_fallthru
      _
    // Predicated region
    $region6: #{tpu_custom_call.1} parent=1 // pred_check
      _
    $region7: #{tpu_custom_call.1} parent=1 // pred_check_branch
      %26 = sbr.rel (0) target = $region9
    $region8: #{tpu_custom_call.1} parent=1 // pred_region
      %s27 = sadd.s32 0, 0
      %s28 = smul.u32 8, %s27
      %s30 = ssub.s32 1536, 1536
      %31 = vsyncadd [#allocation5], %s30
      %s32 = smul.addr %s28, 3
      %s33 = smul.addr %s32, 64
      %s34 = scalar_lea.hbm %s1, %s33
      %s35 = sshll.u32 [#allocation4], 4
      %s36 = int_to_ptr.vmem [resolvable:$true] %s35
      %41 = dma.hbm_to_vmem [thread:$0]  %s34, 1536, %s36, [#allocation5], 192, 192, 12
    $region9: #{tpu_custom_call.1} parent=1 // pred_fallthru
      _
    // Predicated region
    $region10: #{tpu_custom_call.1} parent=1 // pred_check
      _
    $region11: #{tpu_custom_call.1} parent=1 // pred_check_branch
      %43 = sbr.rel (0) target = $region13
    $region12: #{tpu_custom_call.1} parent=1 // pred_region
      %s45 = ssub.s32 18432, 18432
      %46 = vsyncadd [#allocation8], %s45
      %s47 = sshll.u32 [#allocation7], 4
      %s48 = int_to_ptr.vmem [resolvable:$true] %s47
      %53 = dma.hbm_to_vmem [thread:$0]  %s2, 18432, %s48, [#allocation8], 384, 384, 24
    $region13: #{tpu_custom_call.1} parent=1 // pred_fallthru
      _
    // Predicated region
    $region14: #{tpu_custom_call.1} parent=1 // pred_check
      _
    $region15: #{tpu_custom_call.1} parent=1 // pred_check_branch
      %55 = sbr.rel (0) target = $region17
    $region16: #{tpu_custom_call.1} parent=1 // pred_region
      _
    $region17: #{tpu_custom_call.1} parent=1 // pred_fallthru
      _
    // Predicated region
    $region18: #{tpu_custom_call.1} parent=1 // pred_check
      _
    $region19: #{tpu_custom_call.1} parent=1 // pred_check_branch
      %57 = sbr.rel (0) target = $region21
    $region20: #{tpu_custom_call.1} parent=1 // pred_region
      %s59 = ssub.s32 3072, 3072
      %60 = vsyncadd [#allocation8], %s59
      %s61 = sshll.u32 [#allocation9], 4
      %s62 = int_to_ptr.vmem [resolvable:$true] %s61
      %67 = dma.hbm_to_vmem [thread:$0]  %s4, 3072, %s62, [#allocation8], 64, 64, 4
    $region21: #{tpu_custom_call.1} parent=1 // pred_fallthru
      _
    // Predicated region
    $region22: #{tpu_custom_call.1} parent=1 // pred_check
      _
    $region23: #{tpu_custom_call.1} parent=1 // pred_check_branch
      %69 = sbr.rel (0) target = $region25
    $region24: #{tpu_custom_call.1} parent=1 // pred_region
      _
    $region25: #{tpu_custom_call.1} parent=1 // pred_fallthru
      _
    // Predicated region
    $region26: #{tpu_custom_call.1} parent=1 // pred_check
      _
    $region27: #{tpu_custom_call.1} parent=1 // pred_check_branch
      %71 = sbr.rel (0) target = $region29
    $region28: #{tpu_custom_call.1} parent=1 // pred_region
      %s73 = ssub.s32 3072, 3072
      %74 = vsyncadd [#allocation11], %s73
      %s75 = sshll.u32 [#allocation10], 4
      %s76 = int_to_ptr.vmem [resolvable:$true] %s75
      %81 = dma.hbm_to_vmem [thread:$0]  %s6, 3072, %s76, [#allocation11], 192, 192, 12
    $region29: #{tpu_custom_call.1} parent=1 // pred_fallthru
      _
    // Predicated region
    $region30: #{tpu_custom_call.1} parent=1 // pred_check
      _
    $region31: #{tpu_custom_call.1} parent=1 // pred_check_branch
      %83 = sbr.rel (0) target = $region33
    $region32: #{tpu_custom_call.1} parent=1 // pred_region
      _
    $region33: #{tpu_custom_call.1} parent=1 // pred_fallthru
      _
    // Predicated region
    $region34: #{tpu_custom_call.1} parent=1 // pred_check
      _
    $region35: #{tpu_custom_call.1} parent=1 // pred_check_branch
      %85 = sbr.rel (0) target = $region37
    $region36: #{tpu_custom_call.1} parent=1 // pred_region
      %s87 = ssub.s32 1024, 1024
      %88 = vsyncadd [#allocation11], %s87
      %s89 = sshll.u32 [#allocation12], 4
      %s90 = int_to_ptr.vmem [resolvable:$true] %s89
      %95 = dma.hbm_to_vmem [thread:$0]  %s8, 1024, %s90, [#allocation11], 64, 64, 4
    $region37: #{tpu_custom_call.1} parent=1 // pred_fallthru
      _
    // Predicated region
    $region38: #{tpu_custom_call.1} parent=1 // pred_check
      _
    $region39: #{tpu_custom_call.1} parent=1 // pred_check_branch
      %97 = sbr.rel (0) target = $region41
    $region40: #{tpu_custom_call.1} parent=1 // pred_region
      _
    $region41: #{tpu_custom_call.1} parent=1 // pred_fallthru
      _
    // Predicated region
    $region42: #{tpu_custom_call.1} parent=1 // pred_check
      _
    $region43: #{tpu_custom_call.1} parent=1 // pred_check_branch
      %99 = sbr.rel (0) target = $region45
    $region44: #{tpu_custom_call.1} parent=1 // pred_region
      %100 = dma.done [#allocation5], 1536
    $region45: #{tpu_custom_call.1} parent=1 // pred_fallthru
      _
    // Predicated region
    $region46: #{tpu_custom_call.1} parent=1 // pred_check
      _
    $region47: #{tpu_custom_call.1} parent=1 // pred_check_branch
      %102 = sbr.rel (0) target = $region49
    $region48: #{tpu_custom_call.1} parent=1 // pred_region
      %103 = dma.done [#allocation8], 18432
    $region49: #{tpu_custom_call.1} parent=1 // pred_fallthru
      _
    // Predicated region
    $region50: #{tpu_custom_call.1} parent=1 // pred_check
      _
    $region51: #{tpu_custom_call.1} parent=1 // pred_check_branch
      %105 = sbr.rel (0) target = $region53
    $region52: #{tpu_custom_call.1} parent=1 // pred_region
      %106 = dma.done [#allocation8], 3072
    $region53: #{tpu_custom_call.1} parent=1 // pred_fallthru
      _
    // Predicated region
    $region54: #{tpu_custom_call.1} parent=1 // pred_check
      _
    $region55: #{tpu_custom_call.1} parent=1 // pred_check_branch
      %108 = sbr.rel (0) target = $region57
    $region56: #{tpu_custom_call.1} parent=1 // pred_region
      %109 = dma.done [#allocation11], 3072
    $region57: #{tpu_custom_call.1} parent=1 // pred_fallthru
      _
    // Predicated region
    $region58: #{tpu_custom_call.1} parent=1 // pred_check
      _
    $region59: #{tpu_custom_call.1} parent=1 // pred_check_branch
      %111 = sbr.rel (0) target = $region61
    $region60: #{tpu_custom_call.1} parent=1 // pred_region
      %112 = dma.done [#allocation11], 1024
    $region61: #{tpu_custom_call.1} parent=1 // pred_fallthru
      _
    %s113 = sadd.s32 0, 0
    %s114 = smul.u32 8, %s113
    %s115 = sadd.s32 0, 0
    %s116 = smul.u32 8, %s115
    %v118 = vld [vmem:[#allocation4] sm:$0xff]
    %v119 = vld [vmem:[#allocation4 + $0x8] sm:$0xf]
    %v120 = vld [vmem:[#allocation4 + $0xc] sm:$0xff]
    %v121 = vld [vmem:[#allocation4 + $0x14] sm:$0xf]
    %v122 = vld [vmem:[#allocation4 + $0x18] sm:$0xff]
    %v123 = vld [vmem:[#allocation4 + $0x20] sm:$0xf]
    %v124 = vld [vmem:[#allocation4 + $0x24] sm:$0xff]
    %v125 = vld [vmem:[#allocation4 + $0x2c] sm:$0xf]
    %v126 = vld [vmem:[#allocation4 + $0x30] sm:$0xff]
    %v127 = vld [vmem:[#allocation4 + $0x38] sm:$0xf]
    %v128 = vld [vmem:[#allocation4 + $0x3c] sm:$0xff]
    %v129 = vld [vmem:[#allocation4 + $0x44] sm:$0xf]
    %v130 = vld [vmem:[#allocation4 + $0x48] sm:$0xff]
    %v131 = vld [vmem:[#allocation4 + $0x50] sm:$0xf]
    %v132 = vld [vmem:[#allocation4 + $0x54] sm:$0xff]
    %v133 = vld [vmem:[#allocation4 + $0x5c] sm:$0xf]
    %v134 = vld [vmem:[#allocation7] sm:$0xff]
    %v135 = vld [vmem:[#allocation7 + $0x8] sm:$0xff]
    %v136 = vld [vmem:[#allocation7 + $0x10] sm:$0xff]
    %v137 = vld [vmem:[#allocation7 + $0x18] sm:$0xff]
    %v138 = vld [vmem:[#allocation7 + $0x20] sm:$0xff]
    %v139 = vld [vmem:[#allocation7 + $0x28] sm:$0xff]
    %v140 = vld [vmem:[#allocation7 + $0x30] sm:$0xff]
    %v141 = vld [vmem:[#allocation7 + $0x38] sm:$0xff]
    %v142 = vld [vmem:[#allocation7 + $0x40] sm:$0xff]
    %v143 = vld [vmem:[#allocation7 + $0x48] sm:$0xff]
    %v144 = vld [vmem:[#allocation7 + $0x50] sm:$0xff]
    %v145 = vld [vmem:[#allocation7 + $0x58] sm:$0xff]
    %v146 = vld [vmem:[#allocation7 + $0x60] sm:$0xff]
    %v147 = vld [vmem:[#allocation7 + $0x68] sm:$0xff]
    %v148 = vld [vmem:[#allocation7 + $0x70] sm:$0xff]
    %v149 = vld [vmem:[#allocation7 + $0x78] sm:$0xff]
    %v150 = vld [vmem:[#allocation7 + $0x80] sm:$0xff]
    %v151 = vld [vmem:[#allocation7 + $0x88] sm:$0xff]
    %v152 = vld [vmem:[#allocation7 + $0x90] sm:$0xff]
    %v153 = vld [vmem:[#allocation7 + $0x98] sm:$0xff]
    %v154 = vld [vmem:[#allocation7 + $0xa0] sm:$0xff]
    %v155 = vld [vmem:[#allocation7 + $0xa8] sm:$0xff]
    %v156 = vld [vmem:[#allocation7 + $0xb0] sm:$0xff]
    %v157 = vld [vmem:[#allocation7 + $0xb8] sm:$0xff]
    %v158 = vld [vmem:[#allocation7 + $0xc0] sm:$0xff]
    %v159 = vld [vmem:[#allocation7 + $0xc8] sm:$0xff]
    %v160 = vld [vmem:[#allocation7 + $0xd0] sm:$0xff]
    %v161 = vld [vmem:[#allocation7 + $0xd8] sm:$0xff]
    %v162 = vld [vmem:[#allocation7 + $0xe0] sm:$0xff]
    %v163 = vld [vmem:[#allocation7 + $0xe8] sm:$0xff]
    %v164 = vld [vmem:[#allocation7 + $0xf0] sm:$0xff]
    %v165 = vld [vmem:[#allocation7 + $0xf8] sm:$0xff]
    %v166 = vld [vmem:[#allocation7 + $0x100] sm:$0xff]
    %v167 = vld [vmem:[#allocation7 + $0x108] sm:$0xff]
    %v168 = vld [vmem:[#allocation7 + $0x110] sm:$0xff]
    %v169 = vld [vmem:[#allocation7 + $0x118] sm:$0xff]
    %v170 = vld [vmem:[#allocation7 + $0x120] sm:$0xff]
    %v171 = vld [vmem:[#allocation7 + $0x128] sm:$0xff]
    %v172 = vld [vmem:[#allocation7 + $0x130] sm:$0xff]
    %v173 = vld [vmem:[#allocation7 + $0x138] sm:$0xff]
    %v174 = vld [vmem:[#allocation7 + $0x140] sm:$0xff]
    %v175 = vld [vmem:[#allocation7 + $0x148] sm:$0xff]
    %v176 = vld [vmem:[#allocation7 + $0x150] sm:$0xff]
    %v177 = vld [vmem:[#allocation7 + $0x158] sm:$0xff]
    %v178 = vld [vmem:[#allocation7 + $0x160] sm:$0xff]
    %v179 = vld [vmem:[#allocation7 + $0x168] sm:$0xff]
    %v180 = vld [vmem:[#allocation7 + $0x170] sm:$0xff]
    %v181 = vld [vmem:[#allocation7 + $0x178] sm:$0xff]
    %v182 = vld [vmem:[#allocation7 + $0x180] sm:$0xff]
    %v183 = vld [vmem:[#allocation7 + $0x188] sm:$0xff]
    %v184 = vld [vmem:[#allocation7 + $0x190] sm:$0xff]
    %v185 = vld [vmem:[#allocation7 + $0x198] sm:$0xff]
    %v186 = vld [vmem:[#allocation7 + $0x1a0] sm:$0xff]
    %v187 = vld [vmem:[#allocation7 + $0x1a8] sm:$0xff]
    %v188 = vld [vmem:[#allocation7 + $0x1b0] sm:$0xff]
    %v189 = vld [vmem:[#allocation7 + $0x1b8] sm:$0xff]
    %v190 = vld [vmem:[#allocation7 + $0x1c0] sm:$0xff]
    %v191 = vld [vmem:[#allocation7 + $0x1c8] sm:$0xff]
    %v192 = vld [vmem:[#allocation7 + $0x1d0] sm:$0xff]
    %v193 = vld [vmem:[#allocation7 + $0x1d8] sm:$0xff]
    %v194 = vld [vmem:[#allocation7 + $0x1e0] sm:$0xff]
    %v195 = vld [vmem:[#allocation7 + $0x1e8] sm:$0xff]
    %v196 = vld [vmem:[#allocation7 + $0x1f0] sm:$0xff]
    %v197 = vld [vmem:[#allocation7 + $0x1f8] sm:$0xff]
    %v198 = vld [vmem:[#allocation7 + $0x200] sm:$0xff]
    %v199 = vld [vmem:[#allocation7 + $0x208] sm:$0xff]
    %v200 = vld [vmem:[#allocation7 + $0x210] sm:$0xff]
    %v201 = vld [vmem:[#allocation7 + $0x218] sm:$0xff]
    %v202 = vld [vmem:[#allocation7 + $0x220] sm:$0xff]
    %v203 = vld [vmem:[#allocation7 + $0x228] sm:$0xff]
    %v204 = vld [vmem:[#allocation7 + $0x230] sm:$0xff]
    %v205 = vld [vmem:[#allocation7 + $0x238] sm:$0xff]
    %v206 = vld [vmem:[#allocation7 + $0x240] sm:$0xff]
    %v207 = vld [vmem:[#allocation7 + $0x248] sm:$0xff]
    %v208 = vld [vmem:[#allocation7 + $0x250] sm:$0xff]
    %v209 = vld [vmem:[#allocation7 + $0x258] sm:$0xff]
    %v210 = vld [vmem:[#allocation7 + $0x260] sm:$0xff]
    %v211 = vld [vmem:[#allocation7 + $0x268] sm:$0xff]
    %v212 = vld [vmem:[#allocation7 + $0x270] sm:$0xff]
    %v213 = vld [vmem:[#allocation7 + $0x278] sm:$0xff]
    %v214 = vld [vmem:[#allocation7 + $0x280] sm:$0xff]
    %v215 = vld [vmem:[#allocation7 + $0x288] sm:$0xff]
    %v216 = vld [vmem:[#allocation7 + $0x290] sm:$0xff]
    %v217 = vld [vmem:[#allocation7 + $0x298] sm:$0xff]
    %v218 = vld [vmem:[#allocation7 + $0x2a0] sm:$0xff]
    %v219 = vld [vmem:[#allocation7 + $0x2a8] sm:$0xff]
    %v220 = vld [vmem:[#allocation7 + $0x2b0] sm:$0xff]
    %v221 = vld [vmem:[#allocation7 + $0x2b8] sm:$0xff]
    %v222 = vld [vmem:[#allocation7 + $0x2c0] sm:$0xff]
    %v223 = vld [vmem:[#allocation7 + $0x2c8] sm:$0xff]
    %v224 = vld [vmem:[#allocation7 + $0x2d0] sm:$0xff]
    %v225 = vld [vmem:[#allocation7 + $0x2d8] sm:$0xff]
    %v226 = vld [vmem:[#allocation7 + $0x2e0] sm:$0xff]
    %v227 = vld [vmem:[#allocation7 + $0x2e8] sm:$0xff]
    %v228 = vld [vmem:[#allocation7 + $0x2f0] sm:$0xff]
    %v229 = vld [vmem:[#allocation7 + $0x2f8] sm:$0xff]
    %v230 = vld [vmem:[#allocation7 + $0x300] sm:$0xff]
    %v231 = vld [vmem:[#allocation7 + $0x308] sm:$0xff]
    %v232 = vld [vmem:[#allocation7 + $0x310] sm:$0xff]
    %v233 = vld [vmem:[#allocation7 + $0x318] sm:$0xff]
    %v234 = vld [vmem:[#allocation7 + $0x320] sm:$0xff]
    %v235 = vld [vmem:[#allocation7 + $0x328] sm:$0xff]
    %v236 = vld [vmem:[#allocation7 + $0x330] sm:$0xff]
    %v237 = vld [vmem:[#allocation7 + $0x338] sm:$0xff]
    %v238 = vld [vmem:[#allocation7 + $0x340] sm:$0xff]
    %v239 = vld [vmem:[#allocation7 + $0x348] sm:$0xff]
    %v240 = vld [vmem:[#allocation7 + $0x350] sm:$0xff]
    %v241 = vld [vmem:[#allocation7 + $0x358] sm:$0xff]
    %v242 = vld [vmem:[#allocation7 + $0x360] sm:$0xff]
    %v243 = vld [vmem:[#allocation7 + $0x368] sm:$0xff]
    %v244 = vld [vmem:[#allocation7 + $0x370] sm:$0xff]
    %v245 = vld [vmem:[#allocation7 + $0x378] sm:$0xff]
    %v246 = vld [vmem:[#allocation7 + $0x380] sm:$0xff]
    %v247 = vld [vmem:[#allocation7 + $0x388] sm:$0xff]
    %v248 = vld [vmem:[#allocation7 + $0x390] sm:$0xff]
    %v249 = vld [vmem:[#allocation7 + $0x398] sm:$0xff]
    %v250 = vld [vmem:[#allocation7 + $0x3a0] sm:$0xff]
    %v251 = vld [vmem:[#allocation7 + $0x3a8] sm:$0xff]
    %v252 = vld [vmem:[#allocation7 + $0x3b0] sm:$0xff]
    %v253 = vld [vmem:[#allocation7 + $0x3b8] sm:$0xff]
    %v254 = vld [vmem:[#allocation7 + $0x3c0] sm:$0xff]
    %v255 = vld [vmem:[#allocation7 + $0x3c8] sm:$0xff]
    %v256 = vld [vmem:[#allocation7 + $0x3d0] sm:$0xff]
    %v257 = vld [vmem:[#allocation7 + $0x3d8] sm:$0xff]
    %v258 = vld [vmem:[#allocation7 + $0x3e0] sm:$0xff]
    %v259 = vld [vmem:[#allocation7 + $0x3e8] sm:$0xff]
    %v260 = vld [vmem:[#allocation7 + $0x3f0] sm:$0xff]
    %v261 = vld [vmem:[#allocation7 + $0x3f8] sm:$0xff]
    %v262 = vld [vmem:[#allocation7 + $0x400] sm:$0xff]
    %v263 = vld [vmem:[#allocation7 + $0x408] sm:$0xff]
    %v264 = vld [vmem:[#allocation7 + $0x410] sm:$0xff]
    %v265 = vld [vmem:[#allocation7 + $0x418] sm:$0xff]
    %v266 = vld [vmem:[#allocation7 + $0x420] sm:$0xff]
    %v267 = vld [vmem:[#allocation7 + $0x428] sm:$0xff]
    %v268 = vld [vmem:[#allocation7 + $0x430] sm:$0xff]
    %v269 = vld [vmem:[#allocation7 + $0x438] sm:$0xff]
    %v270 = vld [vmem:[#allocation7 + $0x440] sm:$0xff]
    %v271 = vld [vmem:[#allocation7 + $0x448] sm:$0xff]
    %v272 = vld [vmem:[#allocation7 + $0x450] sm:$0xff]
    %v273 = vld [vmem:[#allocation7 + $0x458] sm:$0xff]
    %v274 = vld [vmem:[#allocation7 + $0x460] sm:$0xff]
    %v275 = vld [vmem:[#allocation7 + $0x468] sm:$0xff]
    %v276 = vld [vmem:[#allocation7 + $0x470] sm:$0xff]
    %v277 = vld [vmem:[#allocation7 + $0x478] sm:$0xff]
    %v278 = vld [vmem:[%s3] sm:$0x3f]
    %v280 = vlaneseq
    %v281 = vshrl.u32 %v280, 7
    %v282 = vsub.s32 0, %v281
    %v283 = vrot.slane %v278, %v282
    %v284 = vlaneseq
    %v285 = vshrl.u32 %v284, 7
    %v286 = vsub.s32 1, %v285
    %v287 = vrot.slane %v278, %v286
    %v288 = vlaneseq
    %v289 = vshrl.u32 %v288, 7
    %v290 = vsub.s32 2, %v289
    %v291 = vrot.slane %v278, %v290
    %v292 = vlaneseq
    %v293 = vshrl.u32 %v292, 7
    %v294 = vsub.s32 3, %v293
    %v295 = vrot.slane %v278, %v294
    %v296 = vlaneseq
    %v297 = vshrl.u32 %v296, 7
    %v298 = vsub.s32 4, %v297
    %v299 = vrot.slane %v278, %v298
    %v300 = vlaneseq
    %v301 = vshrl.u32 %v300, 7
    %v302 = vsub.s32 5, %v301
    %v303 = vrot.slane %v278, %v302
    %v326 = vunpack.c.l.b16 %v118
    %v327 = vunpack.c.h.b16 %v118
    %v328 = vunpack.c.l.b16 %v119
    %v329 = vunpack.c.l.b16 %v120
    %v330 = vunpack.c.h.b16 %v120
    %v331 = vunpack.c.l.b16 %v121
    %v332 = vunpack.c.l.b16 %v122
    %v333 = vunpack.c.h.b16 %v122
    %v334 = vunpack.c.l.b16 %v123
    %v335 = vunpack.c.l.b16 %v124
    %v336 = vunpack.c.h.b16 %v124
    %v337 = vunpack.c.l.b16 %v125
    %v338 = vunpack.c.l.b16 %v126
    %v339 = vunpack.c.h.b16 %v126
    %v340 = vunpack.c.l.b16 %v127
    %v341 = vunpack.c.l.b16 %v128
    %v342 = vunpack.c.h.b16 %v128
    %v343 = vunpack.c.l.b16 %v129
    %v344 = vunpack.c.l.b16 %v130
    %v345 = vunpack.c.h.b16 %v130
    %v346 = vunpack.c.l.b16 %v131
    %v347 = vunpack.c.l.b16 %v132
    %v348 = vunpack.c.h.b16 %v132
    %v349 = vunpack.c.l.b16 %v133
    %v350 = vpack.c.b16 %v329, %v326
    %v351 = vpack.c.b16 %v330, %v327
    %v352 = vpack.c.b16 %v331, %v328
    %v353 = vpack.c.b16 %v335, %v332
    %v354 = vpack.c.b16 %v336, %v333
    %v355 = vpack.c.b16 %v337, %v334
    %v356 = vpack.c.b16 %v341, %v338
    %v357 = vpack.c.b16 %v342, %v339
    %v358 = vpack.c.b16 %v343, %v340
    %v359 = vpack.c.b16 %v347, %v344
    %v360 = vpack.c.b16 %v348, %v345
    %v361 = vpack.c.b16 %v349, %v346
    %v518 = vunpack.c.l.b16 %v134
    %v519 = vunpack.c.h.b16 %v134
    %v520 = vunpack.c.l.b16 %v135
    %v521 = vunpack.c.h.b16 %v135
    %v522 = vunpack.c.l.b16 %v136
    %v523 = vunpack.c.h.b16 %v136
    %v524 = vunpack.c.l.b16 %v137
    %v525 = vunpack.c.h.b16 %v137
    %v526 = vunpack.c.l.b16 %v138
    %v527 = vunpack.c.h.b16 %v138
    %v528 = vunpack.c.l.b16 %v139
    %v529 = vunpack.c.h.b16 %v139
    %v530 = vunpack.c.l.b16 %v140
    %v531 = vunpack.c.h.b16 %v140
    %v532 = vunpack.c.l.b16 %v141
    %v533 = vunpack.c.h.b16 %v141
    %v534 = vunpack.c.l.b16 %v142
    %v535 = vunpack.c.h.b16 %v142
    %v536 = vunpack.c.l.b16 %v143
    %v537 = vunpack.c.h.b16 %v143
    %v538 = vunpack.c.l.b16 %v144
    %v539 = vunpack.c.h.b16 %v144
    %v540 = vunpack.c.l.b16 %v145
    %v541 = vunpack.c.h.b16 %v145
    %v542 = vunpack.c.l.b16 %v146
    %v543 = vunpack.c.h.b16 %v146
    %v544 = vunpack.c.l.b16 %v147
    %v545 = vunpack.c.h.b16 %v147
    %v546 = vunpack.c.l.b16 %v148
    %v547 = vunpack.c.h.b16 %v148
    %v548 = vunpack.c.l.b16 %v149
    %v549 = vunpack.c.h.b16 %v149
    %v550 = vunpack.c.l.b16 %v150
    %v551 = vunpack.c.h.b16 %v150
    %v552 = vunpack.c.l.b16 %v151
    %v553 = vunpack.c.h.b16 %v151
    %v554 = vunpack.c.l.b16 %v152
    %v555 = vunpack.c.h.b16 %v152
    %v556 = vunpack.c.l.b16 %v153
    %v557 = vunpack.c.h.b16 %v153
    %v558 = vunpack.c.l.b16 %v154
    %v559 = vunpack.c.h.b16 %v154
    %v560 = vunpack.c.l.b16 %v155
    %v561 = vunpack.c.h.b16 %v155
    %v562 = vunpack.c.l.b16 %v156
    %v563 = vunpack.c.h.b16 %v156
    %v564 = vunpack.c.l.b16 %v157
    %v565 = vunpack.c.h.b16 %v157
    %v566 = vunpack.c.l.b16 %v158
    %v567 = vunpack.c.h.b16 %v158
    %v568 = vunpack.c.l.b16 %v159
    %v569 = vunpack.c.h.b16 %v159
    %v570 = vunpack.c.l.b16 %v160
    %v571 = vunpack.c.h.b16 %v160
    %v572 = vunpack.c.l.b16 %v161
    %v573 = vunpack.c.h.b16 %v161
    %v574 = vunpack.c.l.b16 %v162
    %v575 = vunpack.c.h.b16 %v162
    %v576 = vunpack.c.l.b16 %v163
    %v577 = vunpack.c.h.b16 %v163
    %v578 = vunpack.c.l.b16 %v164
    %v579 = vunpack.c.h.b16 %v164
    %v580 = vunpack.c.l.b16 %v165
    %v581 = vunpack.c.h.b16 %v165
    %v582 = vunpack.c.l.b16 %v166
    %v583 = vunpack.c.h.b16 %v166
    %v584 = vunpack.c.l.b16 %v167
    %v585 = vunpack.c.h.b16 %v167
    %v586 = vunpack.c.l.b16 %v168
    %v587 = vunpack.c.h.b16 %v168
    %v588 = vunpack.c.l.b16 %v169
    %v589 = vunpack.c.h.b16 %v169
    %v590 = vunpack.c.l.b16 %v170
    %v591 = vunpack.c.h.b16 %v170
    %v592 = vunpack.c.l.b16 %v171
    %v593 = vunpack.c.h.b16 %v171
    %v594 = vunpack.c.l.b16 %v172
    %v595 = vunpack.c.h.b16 %v172
    %v596 = vunpack.c.l.b16 %v173
    %v597 = vunpack.c.h.b16 %v173
    %v598 = vunpack.c.l.b16 %v174
    %v599 = vunpack.c.h.b16 %v174
    %v600 = vunpack.c.l.b16 %v175
    %v601 = vunpack.c.h.b16 %v175
    %v602 = vunpack.c.l.b16 %v176
    %v603 = vunpack.c.h.b16 %v176
    %v604 = vunpack.c.l.b16 %v177
    %v605 = vunpack.c.h.b16 %v177
    %v606 = vunpack.c.l.b16 %v178
    %v607 = vunpack.c.h.b16 %v178
    %v608 = vunpack.c.l.b16 %v179
    %v609 = vunpack.c.h.b16 %v179
    %v610 = vunpack.c.l.b16 %v180
    %v611 = vunpack.c.h.b16 %v180
    %v612 = vunpack.c.l.b16 %v181
    %v613 = vunpack.c.h.b16 %v181
    %v614 = vunpack.c.l.b16 %v182
    %v615 = vunpack.c.h.b16 %v182
    %v616 = vunpack.c.l.b16 %v183
    %v617 = vunpack.c.h.b16 %v183
    %v618 = vunpack.c.l.b16 %v184
    %v619 = vunpack.c.h.b16 %v184
    %v620 = vunpack.c.l.b16 %v185
    %v621 = vunpack.c.h.b16 %v185
    %v622 = vunpack.c.l.b16 %v186
    %v623 = vunpack.c.h.b16 %v186
    %v624 = vunpack.c.l.b16 %v187
    %v625 = vunpack.c.h.b16 %v187
    %v626 = vunpack.c.l.b16 %v188
    %v627 = vunpack.c.h.b16 %v188
    %v628 = vunpack.c.l.b16 %v189
    %v629 = vunpack.c.h.b16 %v189
    %v630 = vunpack.c.l.b16 %v190
    %v631 = vunpack.c.h.b16 %v190
    %v632 = vunpack.c.l.b16 %v191
    %v633 = vunpack.c.h.b16 %v191
    %v634 = vunpack.c.l.b16 %v192
    %v635 = vunpack.c.h.b16 %v192
    %v636 = vunpack.c.l.b16 %v193
    %v637 = vunpack.c.h.b16 %v193
    %v638 = vunpack.c.l.b16 %v194
    %v639 = vunpack.c.h.b16 %v194
    %v640 = vunpack.c.l.b16 %v195
    %v641 = vunpack.c.h.b16 %v195
    %v642 = vunpack.c.l.b16 %v196
    %v643 = vunpack.c.h.b16 %v196
    %v644 = vunpack.c.l.b16 %v197
    %v645 = vunpack.c.h.b16 %v197
    %v646 = vunpack.c.l.b16 %v198
    %v647 = vunpack.c.h.b16 %v198
    %v648 = vunpack.c.l.b16 %v199
    %v649 = vunpack.c.h.b16 %v199
    %v650 = vunpack.c.l.b16 %v200
    %v651 = vunpack.c.h.b16 %v200
    %v652 = vunpack.c.l.b16 %v201
    %v653 = vunpack.c.h.b16 %v201
    %v654 = vunpack.c.l.b16 %v202
    %v655 = vunpack.c.h.b16 %v202
    %v656 = vunpack.c.l.b16 %v203
    %v657 = vunpack.c.h.b16 %v203
    %v658 = vunpack.c.l.b16 %v204
    %v659 = vunpack.c.h.b16 %v204
    %v660 = vunpack.c.l.b16 %v205
    %v661 = vunpack.c.h.b16 %v205
    %v662 = vunpack.c.l.b16 %v206
    %v663 = vunpack.c.h.b16 %v206
    %v664 = vunpack.c.l.b16 %v207
    %v665 = vunpack.c.h.b16 %v207
    %v666 = vunpack.c.l.b16 %v208
    %v667 = vunpack.c.h.b16 %v208
    %v668 = vunpack.c.l.b16 %v209
    %v669 = vunpack.c.h.b16 %v209
    %v670 = vunpack.c.l.b16 %v210
    %v671 = vunpack.c.h.b16 %v210
    %v672 = vunpack.c.l.b16 %v211
    %v673 = vunpack.c.h.b16 %v211
    %v674 = vunpack.c.l.b16 %v212
    %v675 = vunpack.c.h.b16 %v212
    %v676 = vunpack.c.l.b16 %v213
    %v677 = vunpack.c.h.b16 %v213
    %v678 = vunpack.c.l.b16 %v214
    %v679 = vunpack.c.h.b16 %v214
    %v680 = vunpack.c.l.b16 %v215
    %v681 = vunpack.c.h.b16 %v215
    %v682 = vunpack.c.l.b16 %v216
    %v683 = vunpack.c.h.b16 %v216
    %v684 = vunpack.c.l.b16 %v217
    %v685 = vunpack.c.h.b16 %v217
    %v686 = vunpack.c.l.b16 %v218
    %v687 = vunpack.c.h.b16 %v218
    %v688 = vunpack.c.l.b16 %v219
    %v689 = vunpack.c.h.b16 %v219
    %v690 = vunpack.c.l.b16 %v220
    %v691 = vunpack.c.h.b16 %v220
    %v692 = vunpack.c.l.b16 %v221
    %v693 = vunpack.c.h.b16 %v221
    %v694 = vunpack.c.l.b16 %v222
    %v695 = vunpack.c.h.b16 %v222
    %v696 = vunpack.c.l.b16 %v223
    %v697 = vunpack.c.h.b16 %v223
    %v698 = vunpack.c.l.b16 %v224
    %v699 = vunpack.c.h.b16 %v224
    %v700 = vunpack.c.l.b16 %v225
    %v701 = vunpack.c.h.b16 %v225
    %v702 = vunpack.c.l.b16 %v226
    %v703 = vunpack.c.h.b16 %v226
    %v704 = vunpack.c.l.b16 %v227
    %v705 = vunpack.c.h.b16 %v227
    %v706 = vunpack.c.l.b16 %v228
    %v707 = vunpack.c.h.b16 %v228
    %v708 = vunpack.c.l.b16 %v229
    %v709 = vunpack.c.h.b16 %v229
    %v710 = vunpack.c.l.b16 %v230
    %v711 = vunpack.c.h.b16 %v230
    %v712 = vunpack.c.l.b16 %v231
    %v713 = vunpack.c.h.b16 %v231
    %v714 = vunpack.c.l.b16 %v232
    %v715 = vunpack.c.h.b16 %v232
    %v716 = vunpack.c.l.b16 %v233
    %v717 = vunpack.c.h.b16 %v233
    %v718 = vunpack.c.l.b16 %v234
    %v719 = vunpack.c.h.b16 %v234
    %v720 = vunpack.c.l.b16 %v235
    %v721 = vunpack.c.h.b16 %v235
    %v722 = vunpack.c.l.b16 %v236
    %v723 = vunpack.c.h.b16 %v236
    %v724 = vunpack.c.l.b16 %v237
    %v725 = vunpack.c.h.b16 %v237
    %v726 = vunpack.c.l.b16 %v238
    %v727 = vunpack.c.h.b16 %v238
    %v728 = vunpack.c.l.b16 %v239
    %v729 = vunpack.c.h.b16 %v239
    %v730 = vunpack.c.l.b16 %v240
    %v731 = vunpack.c.h.b16 %v240
    %v732 = vunpack.c.l.b16 %v241
    %v733 = vunpack.c.h.b16 %v241
    %v734 = vunpack.c.l.b16 %v242
    %v735 = vunpack.c.h.b16 %v242
    %v736 = vunpack.c.l.b16 %v243
    %v737 = vunpack.c.h.b16 %v243
    %v738 = vunpack.c.l.b16 %v244
    %v739 = vunpack.c.h.b16 %v244
    %v740 = vunpack.c.l.b16 %v245
    %v741 = vunpack.c.h.b16 %v245
    %v742 = vunpack.c.l.b16 %v246
    %v743 = vunpack.c.h.b16 %v246
    %v744 = vunpack.c.l.b16 %v247
    %v745 = vunpack.c.h.b16 %v247
    %v746 = vunpack.c.l.b16 %v248
    %v747 = vunpack.c.h.b16 %v248
    %v748 = vunpack.c.l.b16 %v249
    %v749 = vunpack.c.h.b16 %v249
    %v750 = vunpack.c.l.b16 %v250
    %v751 = vunpack.c.h.b16 %v250
    %v752 = vunpack.c.l.b16 %v251
    %v753 = vunpack.c.h.b16 %v251
    %v754 = vunpack.c.l.b16 %v252
    %v755 = vunpack.c.h.b16 %v252
    %v756 = vunpack.c.l.b16 %v253
    %v757 = vunpack.c.h.b16 %v253
    %v758 = vunpack.c.l.b16 %v254
    %v759 = vunpack.c.h.b16 %v254
    %v760 = vunpack.c.l.b16 %v255
    %v761 = vunpack.c.h.b16 %v255
    %v762 = vunpack.c.l.b16 %v256
    %v763 = vunpack.c.h.b16 %v256
    %v764 = vunpack.c.l.b16 %v257
    %v765 = vunpack.c.h.b16 %v257
    %v766 = vunpack.c.l.b16 %v258
    %v767 = vunpack.c.h.b16 %v258
    %v768 = vunpack.c.l.b16 %v259
    %v769 = vunpack.c.h.b16 %v259
    %v770 = vunpack.c.l.b16 %v260
    %v771 = vunpack.c.h.b16 %v260
    %v772 = vunpack.c.l.b16 %v261
    %v773 = vunpack.c.h.b16 %v261
    %v774 = vunpack.c.l.b16 %v262
    %v775 = vunpack.c.h.b16 %v262
    %v776 = vunpack.c.l.b16 %v263
    %v777 = vunpack.c.h.b16 %v263
    %v778 = vunpack.c.l.b16 %v264
    %v779 = vunpack.c.h.b16 %v264
    %v780 = vunpack.c.l.b16 %v265
    %v781 = vunpack.c.h.b16 %v265
    %v782 = vunpack.c.l.b16 %v266
    %v783 = vunpack.c.h.b16 %v266
    %v784 = vunpack.c.l.b16 %v267
    %v785 = vunpack.c.h.b16 %v267
    %v786 = vunpack.c.l.b16 %v268
    %v787 = vunpack.c.h.b16 %v268
    %v788 = vunpack.c.l.b16 %v269
    %v789 = vunpack.c.h.b16 %v269
    %v790 = vunpack.c.l.b16 %v270
    %v791 = vunpack.c.h.b16 %v270
    %v792 = vunpack.c.l.b16 %v271
    %v793 = vunpack.c.h.b16 %v271
    %v794 = vunpack.c.l.b16 %v272
    %v795 = vunpack.c.h.b16 %v272
    %v796 = vunpack.c.l.b16 %v273
    %v797 = vunpack.c.h.b16 %v273
    %v798 = vunpack.c.l.b16 %v274
    %v799 = vunpack.c.h.b16 %v274
    %v800 = vunpack.c.l.b16 %v275
    %v801 = vunpack.c.h.b16 %v275
    %v802 = vunpack.c.l.b16 %v276
    %v803 = vunpack.c.h.b16 %v276
    %v804 = vunpack.c.l.b16 %v277
    %v805 = vunpack.c.h.b16 %v277
    %v806 = vpack.c.b16 %v524, %v518
    %v807 = vpack.c.b16 %v525, %v519
    %v808 = vpack.c.b16 %v526, %v520
    %v809 = vpack.c.b16 %v527, %v521
    %v810 = vpack.c.b16 %v528, %v522
    %v811 = vpack.c.b16 %v529, %v523
    %v812 = vpack.c.b16 %v536, %v530
    %v813 = vpack.c.b16 %v537, %v531
    %v814 = vpack.c.b16 %v538, %v532
    %v815 = vpack.c.b16 %v539, %v533
    %v816 = vpack.c.b16 %v540, %v534
    %v817 = vpack.c.b16 %v541, %v535
    %v818 = vpack.c.b16 %v548, %v542
    %v819 = vpack.c.b16 %v549, %v543
    %v820 = vpack.c.b16 %v550, %v544
    %v821 = vpack.c.b16 %v551, %v545
    %v822 = vpack.c.b16 %v552, %v546
    %v823 = vpack.c.b16 %v553, %v547
    %v824 = vpack.c.b16 %v560, %v554
    %v825 = vpack.c.b16 %v561, %v555
    %v826 = vpack.c.b16 %v562, %v556
    %v827 = vpack.c.b16 %v563, %v557
    %v828 = vpack.c.b16 %v564, %v558
    %v829 = vpack.c.b16 %v565, %v559
    %v830 = vpack.c.b16 %v572, %v566
    %v831 = vpack.c.b16 %v573, %v567
    %v832 = vpack.c.b16 %v574, %v568
    %v833 = vpack.c.b16 %v575, %v569
    %v834 = vpack.c.b16 %v576, %v570
    %v835 = vpack.c.b16 %v577, %v571
    %v836 = vpack.c.b16 %v584, %v578
    %v837 = vpack.c.b16 %v585, %v579
    %v838 = vpack.c.b16 %v586, %v580
    %v839 = vpack.c.b16 %v587, %v581
    %v840 = vpack.c.b16 %v588, %v582
    %v841 = vpack.c.b16 %v589, %v583
    %v842 = vpack.c.b16 %v596, %v590
    %v843 = vpack.c.b16 %v597, %v591
    %v844 = vpack.c.b16 %v598, %v592
    %v845 = vpack.c.b16 %v599, %v593
    %v846 = vpack.c.b16 %v600, %v594
    %v847 = vpack.c.b16 %v601, %v595
    %v848 = vpack.c.b16 %v608, %v602
    %v849 = vpack.c.b16 %v609, %v603
    %v850 = vpack.c.b16 %v610, %v604
    %v851 = vpack.c.b16 %v611, %v605
    %v852 = vpack.c.b16 %v612, %v606
    %v853 = vpack.c.b16 %v613, %v607
    %v854 = vpack.c.b16 %v620, %v614
    %v855 = vpack.c.b16 %v621, %v615
    %v856 = vpack.c.b16 %v622, %v616
    %v857 = vpack.c.b16 %v623, %v617
    %v858 = vpack.c.b16 %v624, %v618
    %v859 = vpack.c.b16 %v625, %v619
    %v860 = vpack.c.b16 %v632, %v626
    %v861 = vpack.c.b16 %v633, %v627
    %v862 = vpack.c.b16 %v634, %v628
    %v863 = vpack.c.b16 %v635, %v629
    %v864 = vpack.c.b16 %v636, %v630
    %v865 = vpack.c.b16 %v637, %v631
    %v866 = vpack.c.b16 %v644, %v638
    %v867 = vpack.c.b16 %v645, %v639
    %v868 = vpack.c.b16 %v646, %v640
    %v869 = vpack.c.b16 %v647, %v641
    %v870 = vpack.c.b16 %v648, %v642
    %v871 = vpack.c.b16 %v649, %v643
    %v872 = vpack.c.b16 %v656, %v650
    %v873 = vpack.c.b16 %v657, %v651
    %v874 = vpack.c.b16 %v658, %v652
    %v875 = vpack.c.b16 %v659, %v653
    %v876 = vpack.c.b16 %v660, %v654
    %v877 = vpack.c.b16 %v661, %v655
    %v878 = vpack.c.b16 %v668, %v662
    %v879 = vpack.c.b16 %v669, %v663
    %v880 = vpack.c.b16 %v670, %v664
    %v881 = vpack.c.b16 %v671, %v665
    %v882 = vpack.c.b16 %v672, %v666
    %v883 = vpack.c.b16 %v673, %v667
    %v884 = vpack.c.b16 %v680, %v674
    %v885 = vpack.c.b16 %v681, %v675
    %v886 = vpack.c.b16 %v682, %v676
    %v887 = vpack.c.b16 %v683, %v677
    %v888 = vpack.c.b16 %v684, %v678
    %v889 = vpack.c.b16 %v685, %v679
    %v890 = vpack.c.b16 %v692, %v686
    %v891 = vpack.c.b16 %v693, %v687
    %v892 = vpack.c.b16 %v694, %v688
    %v893 = vpack.c.b16 %v695, %v689
    %v894 = vpack.c.b16 %v696, %v690
    %v895 = vpack.c.b16 %v697, %v691
    %v896 = vpack.c.b16 %v704, %v698
    %v897 = vpack.c.b16 %v705, %v699
    %v898 = vpack.c.b16 %v706, %v700
    %v899 = vpack.c.b16 %v707, %v701
    %v900 = vpack.c.b16 %v708, %v702
    %v901 = vpack.c.b16 %v709, %v703
    %v902 = vpack.c.b16 %v716, %v710
    %v903 = vpack.c.b16 %v717, %v711
    %v904 = vpack.c.b16 %v718, %v712
    %v905 = vpack.c.b16 %v719, %v713
    %v906 = vpack.c.b16 %v720, %v714
    %v907 = vpack.c.b16 %v721, %v715
    %v908 = vpack.c.b16 %v728, %v722
    %v909 = vpack.c.b16 %v729, %v723
    %v910 = vpack.c.b16 %v730, %v724
    %v911 = vpack.c.b16 %v731, %v725
    %v912 = vpack.c.b16 %v732, %v726
    %v913 = vpack.c.b16 %v733, %v727
    %v914 = vpack.c.b16 %v740, %v734
    %v915 = vpack.c.b16 %v741, %v735
    %v916 = vpack.c.b16 %v742, %v736
    %v917 = vpack.c.b16 %v743, %v737
    %v918 = vpack.c.b16 %v744, %v738
    %v919 = vpack.c.b16 %v745, %v739
    %v920 = vpack.c.b16 %v752, %v746
    %v921 = vpack.c.b16 %v753, %v747
    %v922 = vpack.c.b16 %v754, %v748
    %v923 = vpack.c.b16 %v755, %v749
    %v924 = vpack.c.b16 %v756, %v750
    %v925 = vpack.c.b16 %v757, %v751
    %v926 = vpack.c.b16 %v764, %v758
    %v927 = vpack.c.b16 %v765, %v759
    %v928 = vpack.c.b16 %v766, %v760
    %v929 = vpack.c.b16 %v767, %v761
    %v930 = vpack.c.b16 %v768, %v762
    %v931 = vpack.c.b16 %v769, %v763
    %v932 = vpack.c.b16 %v776, %v770
    %v933 = vpack.c.b16 %v777, %v771
    %v934 = vpack.c.b16 %v778, %v772
    %v935 = vpack.c.b16 %v779, %v773
    %v936 = vpack.c.b16 %v780, %v774
    %v937 = vpack.c.b16 %v781, %v775
    %v938 = vpack.c.b16 %v788, %v782
    %v939 = vpack.c.b16 %v789, %v783
    %v940 = vpack.c.b16 %v790, %v784
    %v941 = vpack.c.b16 %v791, %v785
    %v942 = vpack.c.b16 %v792, %v786
    %v943 = vpack.c.b16 %v793, %v787
    %v944 = vpack.c.b16 %v800, %v794
    %v945 = vpack.c.b16 %v801, %v795
    %v946 = vpack.c.b16 %v802, %v796
    %v947 = vpack.c.b16 %v803, %v797
    %v948 = vpack.c.b16 %v804, %v798
    %v949 = vpack.c.b16 %v805, %v799
    %1094 = vmatprep.subr.bf16.mxu0 %v849
    %1095 = vmatpush1.bf16.msra.mxu0 %v848
    %1096 = vmatprep.subr.bf16.mxu0 %v843
    %1097 = vmatpush1.bf16.msra.mxu0 %v842
    %1098 = vmatprep.subr.bf16.mxu0 %v837
    %1099 = vmatpush1.bf16.msra.mxu0 %v836
    %1100 = vmatprep.subr.bf16.mxu0 %v831
    %1101 = vmatpush1.bf16.msra.mxu0 %v830
    %1102 = vmatprep.subr.bf16.mxu0 %v825
    %1103 = vmatpush1.bf16.msra.mxu0 %v824
    %1104 = vmatprep.subr.bf16.mxu0 %v819
    %1105 = vmatpush1.bf16.msra.mxu0 %v818
    %1106 = vmatprep.subr.bf16.mxu0 %v813
    %1107 = vmatpush1.bf16.msra.mxu0 %v812
    %1108 = vmatprep.subr.bf16.mxu0 %v807
    %1109 = vmatpush1.bf16.msra.mxu0 %v806
    %1110 = vmatprep.subr.bf16.mxu0 %v897
    %1111 = vmatpush2.bf16.msra.mxu0 %v896
    %1112 = vmatprep.subr.bf16.mxu0 %v891
    %1113 = vmatpush2.bf16.msra.mxu0 %v890
    %1114 = vmatprep.subr.bf16.mxu0 %v885
    %1115 = vmatpush2.bf16.msra.mxu0 %v884
    %1116 = vmatprep.subr.bf16.mxu0 %v879
    %1117 = vmatpush2.bf16.msra.mxu0 %v878
    %1118 = vmatprep.subr.bf16.mxu0 %v873
    %1119 = vmatpush2.bf16.msra.mxu0 %v872
    %1120 = vmatprep.subr.bf16.mxu0 %v867
    %1121 = vmatpush2.bf16.msra.mxu0 %v866
    %1122 = vmatprep.subr.bf16.mxu0 %v861
    %1123 = vmatpush2.bf16.msra.mxu0 %v860
    %1124 = vmatprep.subr.bf16.mxu0 %v855
    %1125 = vmatpush2.bf16.msra.mxu0 %v854
    %1126 = vmatprep.mubr.bf16.mxu0 %v351
    %1127 = vmatmul.mubr.bf16.gmra.mxu0 %v350
    %v1128 = vpop.f32.mrf.mxu0
    %v1129 = vadd.f32 %v283, %v1128
    %v1130 = vpop.f32.mrf.mxu0
    %v1131 = vadd.f32 %v287, %v1130
    %v1132 = vpop.f32.mrf.mxu0
    %v1133 = vadd.f32 %v283, %v1132
    %v1134 = vpop.f32.mrf.mxu0
    %v1135 = vadd.f32 %v287, %v1134
    %1136 = vmatprep.mubr.bf16.mxu0 %v354
    %1137 = vmatmul.mubr.bf16.gmra.mxu0 %v353
    %v1138 = vpop.f32.mrf.mxu0
    %v1139 = vadd.f32 %v283, %v1138
    %v1140 = vpop.f32.mrf.mxu0
    %v1141 = vadd.f32 %v287, %v1140
    %v1142 = vpop.f32.mrf.mxu0
    %v1143 = vadd.f32 %v283, %v1142
    %v1144 = vpop.f32.mrf.mxu0
    %v1145 = vadd.f32 %v287, %v1144
    %1146 = vmatprep.mubr.bf16.mxu0 %v357
    %1147 = vmatmul.mubr.bf16.gmra.mxu0 %v356
    %v1148 = vpop.f32.mrf.mxu0
    %v1149 = vadd.f32 %v283, %v1148
    %v1150 = vpop.f32.mrf.mxu0
    %v1151 = vadd.f32 %v287, %v1150
    %v1152 = vpop.f32.mrf.mxu0
    %v1153 = vadd.f32 %v283, %v1152
    %v1154 = vpop.f32.mrf.mxu0
    %v1155 = vadd.f32 %v287, %v1154
    %1156 = vmatprep.mubr.bf16.mxu0 %v360
    %1157 = vmatmul.mubr.bf16.gmra.mxu0 %v359
    %v1158 = vpop.f32.mrf.mxu0
    %v1159 = vadd.f32 %v283, %v1158
    %v1160 = vpop.f32.mrf.mxu0
    %v1161 = vadd.f32 %v287, %v1160
    %v1162 = vpop.f32.mrf.mxu0
    %v1163 = vadd.f32 %v283, %v1162
    %v1164 = vpop.f32.mrf.mxu0
    %v1165 = vadd.f32 %v287, %v1164
    %1166 = vdwg.mxu0
    %1167 = vmatprep.subr.bf16.mxu0 %v945
    %1168 = vmatpush1.bf16.msra.mxu0 %v944
    %1169 = vmatprep.subr.bf16.mxu0 %v939
    %1170 = vmatpush1.bf16.msra.mxu0 %v938
    %1171 = vmatprep.subr.bf16.mxu0 %v933
    %1172 = vmatpush1.bf16.msra.mxu0 %v932
    %1173 = vmatprep.subr.bf16.mxu0 %v927
    %1174 = vmatpush1.bf16.msra.mxu0 %v926
    %1175 = vmatprep.subr.bf16.mxu0 %v921
    %1176 = vmatpush1.bf16.msra.mxu0 %v920
    %1177 = vmatprep.subr.bf16.mxu0 %v915
    %1178 = vmatpush1.bf16.msra.mxu0 %v914
    %1179 = vmatprep.subr.bf16.mxu0 %v909
    %1180 = vmatpush1.bf16.msra.mxu0 %v908
    %1181 = vmatprep.subr.bf16.mxu0 %v903
    %1182 = vmatpush1.bf16.msra.mxu0 %v902
    %1183 = vmatprep.subr.bf16.mxu0 0
    %1184 = vmatpush2.bf16.msra.mxu0 0
    %1185 = vmatprep.subr.bf16.mxu0 0
    %1186 = vmatpush2.bf16.msra.mxu0 0
    %1187 = vmatprep.subr.bf16.mxu0 0
    %1188 = vmatpush2.bf16.msra.mxu0 0
    %1189 = vmatprep.subr.bf16.mxu0 0
    %1190 = vmatpush2.bf16.msra.mxu0 0
    %1191 = vmatprep.subr.bf16.mxu0 0
    %1192 = vmatpush2.bf16.msra.mxu0 0
    %1193 = vmatprep.subr.bf16.mxu0 0
    %1194 = vmatpush2.bf16.msra.mxu0 0
    %1195 = vmatprep.subr.bf16.mxu0 0
    %1196 = vmatpush2.bf16.msra.mxu0 0
    %1197 = vmatprep.subr.bf16.mxu0 0
    %1198 = vmatpush2.bf16.msra.mxu0 0
    %1199 = vmatprep.mubr.bf16.mxu0 0
    %1200 = vmatmul.mubr.bf16.gmra.mxu0 %v352
    %v1201 = vpop.f32.mrf.mxu0
    %v1202 = vadd.f32 %v1129, %v1201
    %v1203 = vpop.f32.mrf.mxu0
    %v1204 = vadd.f32 %v1131, %v1203
    %v1205 = vpop.f32.mrf.mxu0
    %v1206 = vadd.f32 %v1133, %v1205
    %v1207 = vpop.f32.mrf.mxu0
    %v1208 = vadd.f32 %v1135, %v1207
    %1209 = vmatprep.mubr.bf16.mxu0 0
    %1210 = vmatmul.mubr.bf16.gmra.mxu0 %v355
    %v1211 = vpop.f32.mrf.mxu0
    %v1212 = vadd.f32 %v1139, %v1211
    %v1213 = vpop.f32.mrf.mxu0
    %v1214 = vadd.f32 %v1141, %v1213
    %v1215 = vpop.f32.mrf.mxu0
    %v1216 = vadd.f32 %v1143, %v1215
    %v1217 = vpop.f32.mrf.mxu0
    %v1218 = vadd.f32 %v1145, %v1217
    %1219 = vmatprep.mubr.bf16.mxu0 0
    %1220 = vmatmul.mubr.bf16.gmra.mxu0 %v358
    %v1221 = vpop.f32.mrf.mxu0
    %v1222 = vadd.f32 %v1149, %v1221
    %v1223 = vpop.f32.mrf.mxu0
    %v1224 = vadd.f32 %v1151, %v1223
    %v1225 = vpop.f32.mrf.mxu0
    %v1226 = vadd.f32 %v1153, %v1225
    %v1227 = vpop.f32.mrf.mxu0
    %v1228 = vadd.f32 %v1155, %v1227
    %1229 = vmatprep.mubr.bf16.mxu0 0
    %1230 = vmatmul.mubr.bf16.gmra.mxu0 %v361
    %v1231 = vpop.f32.mrf.mxu0
    %v1232 = vadd.f32 %v1159, %v1231
    %v1233 = vpop.f32.mrf.mxu0
    %v1234 = vadd.f32 %v1161, %v1233
    %v1235 = vpop.f32.mrf.mxu0
    %v1236 = vadd.f32 %v1163, %v1235
    %v1237 = vpop.f32.mrf.mxu0
    %v1238 = vadd.f32 %v1165, %v1237
    %1239 = vdwg.mxu0
    %1240 = vmatprep.subr.bf16.mxu0 %v851
    %1241 = vmatpush1.bf16.msra.mxu0 %v850
    %1242 = vmatprep.subr.bf16.mxu0 %v845
    %1243 = vmatpush1.bf16.msra.mxu0 %v844
    %1244 = vmatprep.subr.bf16.mxu0 %v839
    %1245 = vmatpush1.bf16.msra.mxu0 %v838
    %1246 = vmatprep.subr.bf16.mxu0 %v833
    %1247 = vmatpush1.bf16.msra.mxu0 %v832
    %1248 = vmatprep.subr.bf16.mxu0 %v827
    %1249 = vmatpush1.bf16.msra.mxu0 %v826
    %1250 = vmatprep.subr.bf16.mxu0 %v821
    %1251 = vmatpush1.bf16.msra.mxu0 %v820
    %1252 = vmatprep.subr.bf16.mxu0 %v815
    %1253 = vmatpush1.bf16.msra.mxu0 %v814
    %1254 = vmatprep.subr.bf16.mxu0 %v809
    %1255 = vmatpush1.bf16.msra.mxu0 %v808
    %1256 = vmatprep.subr.bf16.mxu0 %v899
    %1257 = vmatpush2.bf16.msra.mxu0 %v898
    %1258 = vmatprep.subr.bf16.mxu0 %v893
    %1259 = vmatpush2.bf16.msra.mxu0 %v892
    %1260 = vmatprep.subr.bf16.mxu0 %v887
    %1261 = vmatpush2.bf16.msra.mxu0 %v886
    %1262 = vmatprep.subr.bf16.mxu0 %v881
    %1263 = vmatpush2.bf16.msra.mxu0 %v880
    %1264 = vmatprep.subr.bf16.mxu0 %v875
    %1265 = vmatpush2.bf16.msra.mxu0 %v874
    %1266 = vmatprep.subr.bf16.mxu0 %v869
    %1267 = vmatpush2.bf16.msra.mxu0 %v868
    %1268 = vmatprep.subr.bf16.mxu0 %v863
    %1269 = vmatpush2.bf16.msra.mxu0 %v862
    %1270 = vmatprep.subr.bf16.mxu0 %v857
    %1271 = vmatpush2.bf16.msra.mxu0 %v856
    %1272 = vmatprep.mubr.bf16.mxu0 %v351
    %1273 = vmatmul.mubr.bf16.gmra.mxu0 %v350
    %v1274 = vpop.f32.mrf.mxu0
    %v1275 = vadd.f32 %v291, %v1274
    %v1276 = vpop.f32.mrf.mxu0
    %v1277 = vadd.f32 %v295, %v1276
    %v1278 = vpop.f32.mrf.mxu0
    %v1279 = vadd.f32 %v291, %v1278
    %v1280 = vpop.f32.mrf.mxu0
    %v1281 = vadd.f32 %v295, %v1280
    %1282 = vmatprep.mubr.bf16.mxu0 %v354
    %1283 = vmatmul.mubr.bf16.gmra.mxu0 %v353
    %v1284 = vpop.f32.mrf.mxu0
    %v1285 = vadd.f32 %v291, %v1284
    %v1286 = vpop.f32.mrf.mxu0
    %v1287 = vadd.f32 %v295, %v1286
    %v1288 = vpop.f32.mrf.mxu0
    %v1289 = vadd.f32 %v291, %v1288
    %v1290 = vpop.f32.mrf.mxu0
    %v1291 = vadd.f32 %v295, %v1290
    %1292 = vmatprep.mubr.bf16.mxu0 %v357
    %1293 = vmatmul.mubr.bf16.gmra.mxu0 %v356
    %v1294 = vpop.f32.mrf.mxu0
    %v1295 = vadd.f32 %v291, %v1294
    %v1296 = vpop.f32.mrf.mxu0
    %v1297 = vadd.f32 %v295, %v1296
    %v1298 = vpop.f32.mrf.mxu0
    %v1299 = vadd.f32 %v291, %v1298
    %v1300 = vpop.f32.mrf.mxu0
    %v1301 = vadd.f32 %v295, %v1300
    %1302 = vmatprep.mubr.bf16.mxu0 %v360
    %1303 = vmatmul.mubr.bf16.gmra.mxu0 %v359
    %v1304 = vpop.f32.mrf.mxu0
    %v1305 = vadd.f32 %v291, %v1304
    %v1306 = vpop.f32.mrf.mxu0
    %v1307 = vadd.f32 %v295, %v1306
    %v1308 = vpop.f32.mrf.mxu0
    %v1309 = vadd.f32 %v291, %v1308
    %v1310 = vpop.f32.mrf.mxu0
    %v1311 = vadd.f32 %v295, %v1310
    %1312 = vdwg.mxu0
    %1313 = vmatprep.subr.bf16.mxu0 %v947
    %1314 = vmatpush1.bf16.msra.mxu0 %v946
    %1315 = vmatprep.subr.bf16.mxu0 %v941
    %1316 = vmatpush1.bf16.msra.mxu0 %v940
    %1317 = vmatprep.subr.bf16.mxu0 %v935
    %1318 = vmatpush1.bf16.msra.mxu0 %v934
    %1319 = vmatprep.subr.bf16.mxu0 %v929
    %1320 = vmatpush1.bf16.msra.mxu0 %v928
    %1321 = vmatprep.subr.bf16.mxu0 %v923
    %1322 = vmatpush1.bf16.msra.mxu0 %v922
    %1323 = vmatprep.subr.bf16.mxu0 %v917
    %1324 = vmatpush1.bf16.msra.mxu0 %v916
    %1325 = vmatprep.subr.bf16.mxu0 %v911
    %1326 = vmatpush1.bf16.msra.mxu0 %v910
    %1327 = vmatprep.subr.bf16.mxu0 %v905
    %1328 = vmatpush1.bf16.msra.mxu0 %v904
    %1329 = vmatprep.subr.bf16.mxu0 0
    %1330 = vmatpush2.bf16.msra.mxu0 0
    %1331 = vmatprep.subr.bf16.mxu0 0
    %1332 = vmatpush2.bf16.msra.mxu0 0
    %1333 = vmatprep.subr.bf16.mxu0 0
    %1334 = vmatpush2.bf16.msra.mxu0 0
    %1335 = vmatprep.subr.bf16.mxu0 0
    %1336 = vmatpush2.bf16.msra.mxu0 0
    %1337 = vmatprep.subr.bf16.mxu0 0
    %1338 = vmatpush2.bf16.msra.mxu0 0
    %1339 = vmatprep.subr.bf16.mxu0 0
    %1340 = vmatpush2.bf16.msra.mxu0 0
    %1341 = vmatprep.subr.bf16.mxu0 0
    %1342 = vmatpush2.bf16.msra.mxu0 0
    %1343 = vmatprep.subr.bf16.mxu0 0
    %1344 = vmatpush2.bf16.msra.mxu0 0
    %1345 = vmatprep.mubr.bf16.mxu0 0
    %1346 = vmatmul.mubr.bf16.gmra.mxu0 %v352
    %v1347 = vpop.f32.mrf.mxu0
    %v1348 = vadd.f32 %v1275, %v1347
    %v1349 = vpop.f32.mrf.mxu0
    %v1350 = vadd.f32 %v1277, %v1349
    %v1351 = vpop.f32.mrf.mxu0
    %v1352 = vadd.f32 %v1279, %v1351
    %v1353 = vpop.f32.mrf.mxu0
    %v1354 = vadd.f32 %v1281, %v1353
    %1355 = vmatprep.mubr.bf16.mxu0 0
    %1356 = vmatmul.mubr.bf16.gmra.mxu0 %v355
    %v1357 = vpop.f32.mrf.mxu0
    %v1358 = vadd.f32 %v1285, %v1357
    %v1359 = vpop.f32.mrf.mxu0
    %v1360 = vadd.f32 %v1287, %v1359
    %v1361 = vpop.f32.mrf.mxu0
    %v1362 = vadd.f32 %v1289, %v1361
    %v1363 = vpop.f32.mrf.mxu0
    %v1364 = vadd.f32 %v1291, %v1363
    %1365 = vmatprep.mubr.bf16.mxu0 0
    %1366 = vmatmul.mubr.bf16.gmra.mxu0 %v358
    %v1367 = vpop.f32.mrf.mxu0
    %v1368 = vadd.f32 %v1295, %v1367
    %v1369 = vpop.f32.mrf.mxu0
    %v1370 = vadd.f32 %v1297, %v1369
    %v1371 = vpop.f32.mrf.mxu0
    %v1372 = vadd.f32 %v1299, %v1371
    %v1373 = vpop.f32.mrf.mxu0
    %v1374 = vadd.f32 %v1301, %v1373
    %1375 = vmatprep.mubr.bf16.mxu0 0
    %1376 = vmatmul.mubr.bf16.gmra.mxu0 %v361
    %v1377 = vpop.f32.mrf.mxu0
    %v1378 = vadd.f32 %v1305, %v1377
    %v1379 = vpop.f32.mrf.mxu0
    %v1380 = vadd.f32 %v1307, %v1379
    %v1381 = vpop.f32.mrf.mxu0
    %v1382 = vadd.f32 %v1309, %v1381
    %v1383 = vpop.f32.mrf.mxu0
    %v1384 = vadd.f32 %v1311, %v1383
    %1385 = vdwg.mxu0
    %1386 = vmatprep.subr.bf16.mxu0 %v853
    %1387 = vmatpush1.bf16.msra.mxu0 %v852
    %1388 = vmatprep.subr.bf16.mxu0 %v847
    %1389 = vmatpush1.bf16.msra.mxu0 %v846
    %1390 = vmatprep.subr.bf16.mxu0 %v841
    %1391 = vmatpush1.bf16.msra.mxu0 %v840
    %1392 = vmatprep.subr.bf16.mxu0 %v835
    %1393 = vmatpush1.bf16.msra.mxu0 %v834
    %1394 = vmatprep.subr.bf16.mxu0 %v829
    %1395 = vmatpush1.bf16.msra.mxu0 %v828
    %1396 = vmatprep.subr.bf16.mxu0 %v823
    %1397 = vmatpush1.bf16.msra.mxu0 %v822
    %1398 = vmatprep.subr.bf16.mxu0 %v817
    %1399 = vmatpush1.bf16.msra.mxu0 %v816
    %1400 = vmatprep.subr.bf16.mxu0 %v811
    %1401 = vmatpush1.bf16.msra.mxu0 %v810
    %1402 = vmatprep.subr.bf16.mxu0 %v901
    %1403 = vmatpush2.bf16.msra.mxu0 %v900
    %1404 = vmatprep.subr.bf16.mxu0 %v895
    %1405 = vmatpush2.bf16.msra.mxu0 %v894
    %1406 = vmatprep.subr.bf16.mxu0 %v889
    %1407 = vmatpush2.bf16.msra.mxu0 %v888
    %1408 = vmatprep.subr.bf16.mxu0 %v883
    %1409 = vmatpush2.bf16.msra.mxu0 %v882
    %1410 = vmatprep.subr.bf16.mxu0 %v877
    %1411 = vmatpush2.bf16.msra.mxu0 %v876
    %1412 = vmatprep.subr.bf16.mxu0 %v871
    %1413 = vmatpush2.bf16.msra.mxu0 %v870
    %1414 = vmatprep.subr.bf16.mxu0 %v865
    %1415 = vmatpush2.bf16.msra.mxu0 %v864
    %1416 = vmatprep.subr.bf16.mxu0 %v859
    %1417 = vmatpush2.bf16.msra.mxu0 %v858
    %1418 = vmatprep.mubr.bf16.mxu0 %v351
    %1419 = vmatmul.mubr.bf16.gmra.mxu0 %v350
    %v1420 = vpop.f32.mrf.mxu0
    %v1421 = vadd.f32 %v299, %v1420
    %v1422 = vpop.f32.mrf.mxu0
    %v1423 = vadd.f32 %v303, %v1422
    %v1424 = vpop.f32.mrf.mxu0
    %v1425 = vadd.f32 %v299, %v1424
    %v1426 = vpop.f32.mrf.mxu0
    %v1427 = vadd.f32 %v303, %v1426
    %1428 = vmatprep.mubr.bf16.mxu0 %v354
    %1429 = vmatmul.mubr.bf16.gmra.mxu0 %v353
    %v1430 = vpop.f32.mrf.mxu0
    %v1431 = vadd.f32 %v299, %v1430
    %v1432 = vpop.f32.mrf.mxu0
    %v1433 = vadd.f32 %v303, %v1432
    %v1434 = vpop.f32.mrf.mxu0
    %v1435 = vadd.f32 %v299, %v1434
    %v1436 = vpop.f32.mrf.mxu0
    %v1437 = vadd.f32 %v303, %v1436
    %1438 = vmatprep.mubr.bf16.mxu0 %v357
    %1439 = vmatmul.mubr.bf16.gmra.mxu0 %v356
    %v1440 = vpop.f32.mrf.mxu0
    %v1441 = vadd.f32 %v299, %v1440
    %v1442 = vpop.f32.mrf.mxu0
    %v1443 = vadd.f32 %v303, %v1442
    %v1444 = vpop.f32.mrf.mxu0
    %v1445 = vadd.f32 %v299, %v1444
    %v1446 = vpop.f32.mrf.mxu0
    %v1447 = vadd.f32 %v303, %v1446
    %1448 = vmatprep.mubr.bf16.mxu0 %v360
    %1449 = vmatmul.mubr.bf16.gmra.mxu0 %v359
    %v1450 = vpop.f32.mrf.mxu0
    %v1451 = vadd.f32 %v299, %v1450
    %v1452 = vpop.f32.mrf.mxu0
    %v1453 = vadd.f32 %v303, %v1452
    %v1454 = vpop.f32.mrf.mxu0
    %v1455 = vadd.f32 %v299, %v1454
    %v1456 = vpop.f32.mrf.mxu0
    %v1457 = vadd.f32 %v303, %v1456
    %1458 = vdwg.mxu0
    %1459 = vmatprep.subr.bf16.mxu0 %v949
    %1460 = vmatpush1.bf16.msra.mxu0 %v948
    %1461 = vmatprep.subr.bf16.mxu0 %v943
    %1462 = vmatpush1.bf16.msra.mxu0 %v942
    %1463 = vmatprep.subr.bf16.mxu0 %v937
    %1464 = vmatpush1.bf16.msra.mxu0 %v936
    %1465 = vmatprep.subr.bf16.mxu0 %v931
    %1466 = vmatpush1.bf16.msra.mxu0 %v930
    %1467 = vmatprep.subr.bf16.mxu0 %v925
    %1468 = vmatpush1.bf16.msra.mxu0 %v924
    %1469 = vmatprep.subr.bf16.mxu0 %v919
    %1470 = vmatpush1.bf16.msra.mxu0 %v918
    %1471 = vmatprep.subr.bf16.mxu0 %v913
    %1472 = vmatpush1.bf16.msra.mxu0 %v912
    %1473 = vmatprep.subr.bf16.mxu0 %v907
    %1474 = vmatpush1.bf16.msra.mxu0 %v906
    %1475 = vmatprep.subr.bf16.mxu0 0
    %1476 = vmatpush2.bf16.msra.mxu0 0
    %1477 = vmatprep.subr.bf16.mxu0 0
    %1478 = vmatpush2.bf16.msra.mxu0 0
    %1479 = vmatprep.subr.bf16.mxu0 0
    %1480 = vmatpush2.bf16.msra.mxu0 0
    %1481 = vmatprep.subr.bf16.mxu0 0
    %1482 = vmatpush2.bf16.msra.mxu0 0
    %1483 = vmatprep.subr.bf16.mxu0 0
    %1484 = vmatpush2.bf16.msra.mxu0 0
    %1485 = vmatprep.subr.bf16.mxu0 0
    %1486 = vmatpush2.bf16.msra.mxu0 0
    %1487 = vmatprep.subr.bf16.mxu0 0
    %1488 = vmatpush2.bf16.msra.mxu0 0
    %1489 = vmatprep.subr.bf16.mxu0 0
    %1490 = vmatpush2.bf16.msra.mxu0 0
    %1491 = vmatprep.mubr.bf16.mxu0 0
    %1492 = vmatmul.mubr.bf16.gmra.mxu0 %v352
    %v1493 = vpop.f32.mrf.mxu0
    %v1494 = vadd.f32 %v1421, %v1493
    %v1495 = vpop.f32.mrf.mxu0
    %v1496 = vadd.f32 %v1423, %v1495
    %v1497 = vpop.f32.mrf.mxu0
    %v1498 = vadd.f32 %v1425, %v1497
    %v1499 = vpop.f32.mrf.mxu0
    %v1500 = vadd.f32 %v1427, %v1499
    %1501 = vmatprep.mubr.bf16.mxu0 0
    %1502 = vmatmul.mubr.bf16.gmra.mxu0 %v355
    %v1503 = vpop.f32.mrf.mxu0
    %v1504 = vadd.f32 %v1431, %v1503
    %v1505 = vpop.f32.mrf.mxu0
    %v1506 = vadd.f32 %v1433, %v1505
    %v1507 = vpop.f32.mrf.mxu0
    %v1508 = vadd.f32 %v1435, %v1507
    %v1509 = vpop.f32.mrf.mxu0
    %v1510 = vadd.f32 %v1437, %v1509
    %1511 = vmatprep.mubr.bf16.mxu0 0
    %1512 = vmatmul.mubr.bf16.gmra.mxu0 %v358
    %v1513 = vpop.f32.mrf.mxu0
    %v1514 = vadd.f32 %v1441, %v1513
    %v1515 = vpop.f32.mrf.mxu0
    %v1516 = vadd.f32 %v1443, %v1515
    %v1517 = vpop.f32.mrf.mxu0
    %v1518 = vadd.f32 %v1445, %v1517
    %v1519 = vpop.f32.mrf.mxu0
    %v1520 = vadd.f32 %v1447, %v1519
    %1521 = vmatprep.mubr.bf16.mxu0 0
    %1522 = vmatmul.mubr.bf16.gmra.mxu0 %v361
    %v1523 = vpop.f32.mrf.mxu0
    %v1524 = vadd.f32 %v1451, %v1523
    %v1525 = vpop.f32.mrf.mxu0
    %v1526 = vadd.f32 %v1453, %v1525
    %v1527 = vpop.f32.mrf.mxu0
    %v1528 = vadd.f32 %v1455, %v1527
    %v1529 = vpop.f32.mrf.mxu0
    %v1530 = vadd.f32 %v1457, %v1529
    %1531 = vdwg.mxu0
    %1532 = vst [vmem:[#allocation2] sm:$0xff] %v1350
    %1533 = vst [vmem:[#allocation2 + $0x8] sm:$0xff] %v1494
    %1534 = vst [vmem:[#allocation2 + $0x10] sm:$0xff] %v1496
    %1535 = vst [vmem:[#allocation2 + $0x18] sm:$0xff] %v1354
    %1536 = vst [vmem:[#allocation2 + $0x20] sm:$0xff] %v1498
    %1537 = vst [vmem:[#allocation2 + $0x28] sm:$0xff] %v1500
    %1538 = vst [vmem:[#allocation2 + $0x30] sm:$0xff] %v1360
    %1539 = vst [vmem:[#allocation2 + $0x38] sm:$0xff] %v1504
    %1540 = vst [vmem:[#allocation2 + $0x40] sm:$0xff] %v1506
    %1541 = vst [vmem:[#allocation2 + $0x48] sm:$0xff] %v1364
    %1542 = vst [vmem:[#allocation2 + $0x50] sm:$0xff] %v1508
    %1543 = vst [vmem:[#allocation2 + $0x58] sm:$0xff] %v1510
    %1544 = vst [vmem:[#allocation2 + $0x60] sm:$0xff] %v1370
    %1545 = vst [vmem:[#allocation2 + $0x68] sm:$0xff] %v1514
    %1546 = vst [vmem:[#allocation2 + $0x70] sm:$0xff] %v1516
    %1547 = vst [vmem:[#allocation2 + $0x78] sm:$0xff] %v1374
    %1548 = vst [vmem:[#allocation2 + $0x80] sm:$0xff] %v1518
    %1549 = vst [vmem:[#allocation2 + $0x88] sm:$0xff] %v1520
    %1550 = vst [vmem:[#allocation2 + $0x90] sm:$0xff] %v1380
    %1551 = vst [vmem:[#allocation2 + $0x98] sm:$0xff] %v1524
    %1552 = vst [vmem:[#allocation2 + $0xa0] sm:$0xff] %v1526
    %1553 = vst [vmem:[#allocation2 + $0xa8] sm:$0xff] %v1384
    %1554 = vst [vmem:[#allocation2 + $0xb0] sm:$0xff] %v1528
    %1555 = vst [vmem:[#allocation2 + $0xb8] sm:$0xff] %v1530
    %v1556 = vmax.f32 %v1202, 0.0
    %v1557 = vmax.f32 %v1204, 0.0
    %v1558 = vmax.f32 %v1348, 0.0
    %v1559 = vmax.f32 %v1206, 0.0
    %v1560 = vmax.f32 %v1208, 0.0
    %v1561 = vmax.f32 %v1352, 0.0
    %v1562 = vmax.f32 %v1212, 0.0
    %v1563 = vmax.f32 %v1214, 0.0
    %v1564 = vmax.f32 %v1358, 0.0
    %v1565 = vmax.f32 %v1216, 0.0
    %v1566 = vmax.f32 %v1218, 0.0
    %v1567 = vmax.f32 %v1362, 0.0
    %v1568 = vmax.f32 %v1222, 0.0
    %v1569 = vmax.f32 %v1224, 0.0
    %v1570 = vmax.f32 %v1368, 0.0
    %v1571 = vmax.f32 %v1226, 0.0
    %v1572 = vmax.f32 %v1228, 0.0
    %v1573 = vmax.f32 %v1372, 0.0
    %v1574 = vmax.f32 %v1232, 0.0
    %v1575 = vmax.f32 %v1234, 0.0
    %v1576 = vmax.f32 %v1378, 0.0
    %v1577 = vmax.f32 %v1236, 0.0
    %v1578 = vmax.f32 %v1238, 0.0
    %v1579 = vmax.f32 %v1382, 0.0
    %v1580 = vpack.c.bf16 %v1559, %v1556
    %v1581 = vpack.c.bf16 %v1560, %v1557
    %v1582 = vpack.c.bf16 %v1561, %v1558
    %v1583 = vpack.c.bf16 %v1565, %v1562
    %v1584 = vpack.c.bf16 %v1566, %v1563
    %v1585 = vpack.c.bf16 %v1567, %v1564
    %v1586 = vpack.c.bf16 %v1571, %v1568
    %v1587 = vpack.c.bf16 %v1572, %v1569
    %v1588 = vpack.c.bf16 %v1573, %v1570
    %v1589 = vpack.c.bf16 %v1577, %v1574
    %v1590 = vpack.c.bf16 %v1578, %v1575
    %v1591 = vpack.c.bf16 %v1579, %v1576
    %v1592 = vld [vmem:[#allocation9] sm:$0xf]
    %v1593 = vld [vmem:[#allocation9 + $0x4] sm:$0xf]
    %v1594 = vld [vmem:[#allocation9 + $0x8] sm:$0xf]
    %v1595 = vld [vmem:[#allocation9 + $0xc] sm:$0xf]
    %v1596 = vld [vmem:[#allocation9 + $0x10] sm:$0xf]
    %v1597 = vld [vmem:[#allocation9 + $0x14] sm:$0xf]
    %v1598 = vld [vmem:[#allocation9 + $0x18] sm:$0xf]
    %v1599 = vld [vmem:[#allocation9 + $0x1c] sm:$0xf]
    %v1600 = vld [vmem:[#allocation9 + $0x20] sm:$0xf]
    %v1601 = vld [vmem:[#allocation9 + $0x24] sm:$0xf]
    %v1602 = vld [vmem:[#allocation9 + $0x28] sm:$0xf]
    %v1603 = vld [vmem:[#allocation9 + $0x2c] sm:$0xf]
    %v1604 = vld [vmem:[#allocation9 + $0x30] sm:$0xf]
    %v1605 = vld [vmem:[#allocation9 + $0x34] sm:$0xf]
    %v1606 = vld [vmem:[#allocation9 + $0x38] sm:$0xf]
    %v1607 = vld [vmem:[#allocation9 + $0x3c] sm:$0xf]
    %v1608 = vld [vmem:[#allocation9 + $0x40] sm:$0xf]
    %v1609 = vld [vmem:[#allocation9 + $0x44] sm:$0xf]
    %v1610 = vld [vmem:[#allocation9 + $0x48] sm:$0xf]
    %v1611 = vld [vmem:[#allocation9 + $0x4c] sm:$0xf]
    %v1612 = vld [vmem:[#allocation9 + $0x50] sm:$0xf]
    %v1613 = vld [vmem:[#allocation9 + $0x54] sm:$0xf]
    %v1614 = vld [vmem:[#allocation9 + $0x58] sm:$0xf]
    %v1615 = vld [vmem:[#allocation9 + $0x5c] sm:$0xf]
    %v1616 = vld [vmem:[#allocation9 + $0x60] sm:$0xf]
    %v1617 = vld [vmem:[#allocation9 + $0x64] sm:$0xf]
    %v1618 = vld [vmem:[#allocation9 + $0x68] sm:$0xf]
    %v1619 = vld [vmem:[#allocation9 + $0x6c] sm:$0xf]
    %v1620 = vld [vmem:[#allocation9 + $0x70] sm:$0xf]
    %v1621 = vld [vmem:[#allocation9 + $0x74] sm:$0xf]
    %v1622 = vld [vmem:[#allocation9 + $0x78] sm:$0xf]
    %v1623 = vld [vmem:[#allocation9 + $0x7c] sm:$0xf]
    %v1624 = vld [vmem:[#allocation9 + $0x80] sm:$0xf]
    %v1625 = vld [vmem:[#allocation9 + $0x84] sm:$0xf]
    %v1626 = vld [vmem:[#allocation9 + $0x88] sm:$0xf]
    %v1627 = vld [vmem:[#allocation9 + $0x8c] sm:$0xf]
    %v1628 = vld [vmem:[#allocation9 + $0x90] sm:$0xf]
    %v1629 = vld [vmem:[#allocation9 + $0x94] sm:$0xf]
    %v1630 = vld [vmem:[#allocation9 + $0x98] sm:$0xf]
    %v1631 = vld [vmem:[#allocation9 + $0x9c] sm:$0xf]
    %v1632 = vld [vmem:[#allocation9 + $0xa0] sm:$0xf]
    %v1633 = vld [vmem:[#allocation9 + $0xa4] sm:$0xf]
    %v1634 = vld [vmem:[#allocation9 + $0xa8] sm:$0xf]
    %v1635 = vld [vmem:[#allocation9 + $0xac] sm:$0xf]
    %v1636 = vld [vmem:[#allocation9 + $0xb0] sm:$0xf]
    %v1637 = vld [vmem:[#allocation9 + $0xb4] sm:$0xf]
    %v1638 = vld [vmem:[#allocation9 + $0xb8] sm:$0xf]
    %v1639 = vld [vmem:[#allocation9 + $0xbc] sm:$0xf]
    %v1640 = vld [vmem:[%s5] sm:$0x1]
    %v1642 = vlaneseq
    %v1643 = vshrl.u32 %v1642, 7
    %v1644 = vsub.s32 0, %v1643
    %v1645 = vrot.slane %v1640, %v1644
    %v1695 = vunpack.c.l.b16 %v1592
    %v1696 = vunpack.c.l.b16 %v1593
    %v1697 = vunpack.c.l.b16 %v1594
    %v1698 = vunpack.c.l.b16 %v1595
    %v1699 = vunpack.c.l.b16 %v1596
    %v1700 = vunpack.c.l.b16 %v1597
    %v1701 = vunpack.c.l.b16 %v1598
    %v1702 = vunpack.c.l.b16 %v1599
    %v1703 = vunpack.c.l.b16 %v1600
    %v1704 = vunpack.c.l.b16 %v1601
    %v1705 = vunpack.c.l.b16 %v1602
    %v1706 = vunpack.c.l.b16 %v1603
    %v1707 = vunpack.c.l.b16 %v1604
    %v1708 = vunpack.c.l.b16 %v1605
    %v1709 = vunpack.c.l.b16 %v1606
    %v1710 = vunpack.c.l.b16 %v1607
    %v1711 = vunpack.c.l.b16 %v1608
    %v1712 = vunpack.c.l.b16 %v1609
    %v1713 = vunpack.c.l.b16 %v1610
    %v1714 = vunpack.c.l.b16 %v1611
    %v1715 = vunpack.c.l.b16 %v1612
    %v1716 = vunpack.c.l.b16 %v1613
    %v1717 = vunpack.c.l.b16 %v1614
    %v1718 = vunpack.c.l.b16 %v1615
    %v1719 = vunpack.c.l.b16 %v1616
    %v1720 = vunpack.c.l.b16 %v1617
    %v1721 = vunpack.c.l.b16 %v1618
    %v1722 = vunpack.c.l.b16 %v1619
    %v1723 = vunpack.c.l.b16 %v1620
    %v1724 = vunpack.c.l.b16 %v1621
    %v1725 = vunpack.c.l.b16 %v1622
    %v1726 = vunpack.c.l.b16 %v1623
    %v1727 = vunpack.c.l.b16 %v1624
    %v1728 = vunpack.c.l.b16 %v1625
    %v1729 = vunpack.c.l.b16 %v1626
    %v1730 = vunpack.c.l.b16 %v1627
    %v1731 = vunpack.c.l.b16 %v1628
    %v1732 = vunpack.c.l.b16 %v1629
    %v1733 = vunpack.c.l.b16 %v1630
    %v1734 = vunpack.c.l.b16 %v1631
    %v1735 = vunpack.c.l.b16 %v1632
    %v1736 = vunpack.c.l.b16 %v1633
    %v1737 = vunpack.c.l.b16 %v1634
    %v1738 = vunpack.c.l.b16 %v1635
    %v1739 = vunpack.c.l.b16 %v1636
    %v1740 = vunpack.c.l.b16 %v1637
    %v1741 = vunpack.c.l.b16 %v1638
    %v1742 = vunpack.c.l.b16 %v1639
    %v1743 = vpack.c.b16 %v1696, %v1695
    %v1744 = vpack.c.b16 %v1698, %v1697
    %v1745 = vpack.c.b16 %v1700, %v1699
    %v1746 = vpack.c.b16 %v1702, %v1701
    %v1747 = vpack.c.b16 %v1704, %v1703
    %v1748 = vpack.c.b16 %v1706, %v1705
    %v1749 = vpack.c.b16 %v1708, %v1707
    %v1750 = vpack.c.b16 %v1710, %v1709
    %v1751 = vpack.c.b16 %v1712, %v1711
    %v1752 = vpack.c.b16 %v1714, %v1713
    %v1753 = vpack.c.b16 %v1716, %v1715
    %v1754 = vpack.c.b16 %v1718, %v1717
    %v1755 = vpack.c.b16 %v1720, %v1719
    %v1756 = vpack.c.b16 %v1722, %v1721
    %v1757 = vpack.c.b16 %v1724, %v1723
    %v1758 = vpack.c.b16 %v1726, %v1725
    %v1759 = vpack.c.b16 %v1728, %v1727
    %v1760 = vpack.c.b16 %v1730, %v1729
    %v1761 = vpack.c.b16 %v1732, %v1731
    %v1762 = vpack.c.b16 %v1734, %v1733
    %v1763 = vpack.c.b16 %v1736, %v1735
    %v1764 = vpack.c.b16 %v1738, %v1737
    %v1765 = vpack.c.b16 %v1740, %v1739
    %v1766 = vpack.c.b16 %v1742, %v1741
    %1791 = vmatprep.subr.bf16.mxu0 0
    %1792 = vmatpush1.bf16.msra.mxu0 %v1750
    %1793 = vmatprep.subr.bf16.mxu0 0
    %1794 = vmatpush1.bf16.msra.mxu0 %v1749
    %1795 = vmatprep.subr.bf16.mxu0 0
    %1796 = vmatpush1.bf16.msra.mxu0 %v1748
    %1797 = vmatprep.subr.bf16.mxu0 0
    %1798 = vmatpush1.bf16.msra.mxu0 %v1747
    %1799 = vmatprep.subr.bf16.mxu0 0
    %1800 = vmatpush1.bf16.msra.mxu0 %v1746
    %1801 = vmatprep.subr.bf16.mxu0 0
    %1802 = vmatpush1.bf16.msra.mxu0 %v1745
    %1803 = vmatprep.subr.bf16.mxu0 0
    %1804 = vmatpush1.bf16.msra.mxu0 %v1744
    %1805 = vmatprep.subr.bf16.mxu0 0
    %1806 = vmatpush1.bf16.msra.mxu0 %v1743
    %1807 = vmatprep.subr.bf16.mxu0 0
    %1808 = vmatpush2.bf16.msra.mxu0 %v1758
    %1809 = vmatprep.subr.bf16.mxu0 0
    %1810 = vmatpush2.bf16.msra.mxu0 %v1757
    %1811 = vmatprep.subr.bf16.mxu0 0
    %1812 = vmatpush2.bf16.msra.mxu0 %v1756
    %1813 = vmatprep.subr.bf16.mxu0 0
    %1814 = vmatpush2.bf16.msra.mxu0 %v1755
    %1815 = vmatprep.subr.bf16.mxu0 0
    %1816 = vmatpush2.bf16.msra.mxu0 %v1754
    %1817 = vmatprep.subr.bf16.mxu0 0
    %1818 = vmatpush2.bf16.msra.mxu0 %v1753
    %1819 = vmatprep.subr.bf16.mxu0 0
    %1820 = vmatpush2.bf16.msra.mxu0 %v1752
    %1821 = vmatprep.subr.bf16.mxu0 0
    %1822 = vmatpush2.bf16.msra.mxu0 %v1751
    %1823 = vmatprep.mubr.bf16.mxu0 %v1581
    %1824 = vmatmul.mubr.bf16.gmra.mxu0 %v1580
    %v1825 = vpop.f32.mrf.mxu0
    %v1826 = vadd.f32 %v1645, %v1825
    %v1827 = vpop.f32.mrf.mxu0
    %v1828 = vpop.f32.mrf.mxu0
    %v1829 = vadd.f32 %v1645, %v1828
    %v1830 = vpop.f32.mrf.mxu0
    %1831 = vmatprep.mubr.bf16.mxu0 %v1584
    %1832 = vmatmul.mubr.bf16.gmra.mxu0 %v1583
    %v1833 = vpop.f32.mrf.mxu0
    %v1834 = vadd.f32 %v1645, %v1833
    %v1835 = vpop.f32.mrf.mxu0
    %v1836 = vpop.f32.mrf.mxu0
    %v1837 = vadd.f32 %v1645, %v1836
    %v1838 = vpop.f32.mrf.mxu0
    %1839 = vmatprep.mubr.bf16.mxu0 %v1587
    %1840 = vmatmul.mubr.bf16.gmra.mxu0 %v1586
    %v1841 = vpop.f32.mrf.mxu0
    %v1842 = vadd.f32 %v1645, %v1841
    %v1843 = vpop.f32.mrf.mxu0
    %v1844 = vpop.f32.mrf.mxu0
    %v1845 = vadd.f32 %v1645, %v1844
    %v1846 = vpop.f32.mrf.mxu0
    %1847 = vmatprep.mubr.bf16.mxu0 %v1590
    %1848 = vmatmul.mubr.bf16.gmra.mxu0 %v1589
    %v1849 = vpop.f32.mrf.mxu0
    %v1850 = vadd.f32 %v1645, %v1849
    %v1851 = vpop.f32.mrf.mxu0
    %v1852 = vpop.f32.mrf.mxu0
    %v1853 = vadd.f32 %v1645, %v1852
    %v1854 = vpop.f32.mrf.mxu0
    %1855 = vdwg.mxu0
    %1856 = vmatprep.subr.bf16.mxu0 0
    %1857 = vmatpush1.bf16.msra.mxu0 %v1766
    %1858 = vmatprep.subr.bf16.mxu0 0
    %1859 = vmatpush1.bf16.msra.mxu0 %v1765
    %1860 = vmatprep.subr.bf16.mxu0 0
    %1861 = vmatpush1.bf16.msra.mxu0 %v1764
    %1862 = vmatprep.subr.bf16.mxu0 0
    %1863 = vmatpush1.bf16.msra.mxu0 %v1763
    %1864 = vmatprep.subr.bf16.mxu0 0
    %1865 = vmatpush1.bf16.msra.mxu0 %v1762
    %1866 = vmatprep.subr.bf16.mxu0 0
    %1867 = vmatpush1.bf16.msra.mxu0 %v1761
    %1868 = vmatprep.subr.bf16.mxu0 0
    %1869 = vmatpush1.bf16.msra.mxu0 %v1760
    %1870 = vmatprep.subr.bf16.mxu0 0
    %1871 = vmatpush1.bf16.msra.mxu0 %v1759
    %1872 = vmatprep.subr.bf16.mxu0 0
    %1873 = vmatpush2.bf16.msra.mxu0 0
    %1874 = vmatprep.subr.bf16.mxu0 0
    %1875 = vmatpush2.bf16.msra.mxu0 0
    %1876 = vmatprep.subr.bf16.mxu0 0
    %1877 = vmatpush2.bf16.msra.mxu0 0
    %1878 = vmatprep.subr.bf16.mxu0 0
    %1879 = vmatpush2.bf16.msra.mxu0 0
    %1880 = vmatprep.subr.bf16.mxu0 0
    %1881 = vmatpush2.bf16.msra.mxu0 0
    %1882 = vmatprep.subr.bf16.mxu0 0
    %1883 = vmatpush2.bf16.msra.mxu0 0
    %1884 = vmatprep.subr.bf16.mxu0 0
    %1885 = vmatpush2.bf16.msra.mxu0 0
    %1886 = vmatprep.subr.bf16.mxu0 0
    %1887 = vmatpush2.bf16.msra.mxu0 0
    %1888 = vmatprep.mubr.bf16.mxu0 0
    %1889 = vmatmul.mubr.bf16.gmra.mxu0 %v1582
    %v1890 = vpop.f32.mrf.mxu0
    %v1891 = vadd.f32 %v1826, %v1890
    %v1892 = vpop.f32.mrf.mxu0
    %v1893 = vpop.f32.mrf.mxu0
    %v1894 = vadd.f32 %v1829, %v1893
    %v1895 = vpop.f32.mrf.mxu0
    %1896 = vmatprep.mubr.bf16.mxu0 0
    %1897 = vmatmul.mubr.bf16.gmra.mxu0 %v1585
    %v1898 = vpop.f32.mrf.mxu0
    %v1899 = vadd.f32 %v1834, %v1898
    %v1900 = vpop.f32.mrf.mxu0
    %v1901 = vpop.f32.mrf.mxu0
    %v1902 = vadd.f32 %v1837, %v1901
    %v1903 = vpop.f32.mrf.mxu0
    %1904 = vmatprep.mubr.bf16.mxu0 0
    %1905 = vmatmul.mubr.bf16.gmra.mxu0 %v1588
    %v1906 = vpop.f32.mrf.mxu0
    %v1907 = vadd.f32 %v1842, %v1906
    %v1908 = vpop.f32.mrf.mxu0
    %v1909 = vpop.f32.mrf.mxu0
    %v1910 = vadd.f32 %v1845, %v1909
    %v1911 = vpop.f32.mrf.mxu0
    %1912 = vmatprep.mubr.bf16.mxu0 0
    %1913 = vmatmul.mubr.bf16.gmra.mxu0 %v1591
    %v1914 = vpop.f32.mrf.mxu0
    %v1915 = vadd.f32 %v1850, %v1914
    %v1916 = vpop.f32.mrf.mxu0
    %v1917 = vpop.f32.mrf.mxu0
    %v1918 = vadd.f32 %v1853, %v1917
    %v1919 = vpop.f32.mrf.mxu0
    %1920 = vdwg.mxu0
    %1921 = vst [vmem:[#allocation13] sm:$0xff] %v1891
    %1922 = vst [vmem:[#allocation13 + $0x8] sm:$0xff] %v1894
    %1923 = vst [vmem:[#allocation13 + $0x10] sm:$0xff] %v1899
    %1924 = vst [vmem:[#allocation13 + $0x18] sm:$0xff] %v1902
    %1925 = vst [vmem:[#allocation13 + $0x20] sm:$0xff] %v1907
    %1926 = vst [vmem:[#allocation13 + $0x28] sm:$0xff] %v1910
    %1927 = vst [vmem:[#allocation13 + $0x30] sm:$0xff] %v1915
    %1928 = vst [vmem:[#allocation13 + $0x38] sm:$0xff] %v1918
    %p1929 = scmp.eq.s32.totalorder 0, 0
    // Predicated region
    $region62: #{tpu_custom_call.1} parent=1 // pred_check
      %p1930 = pneg %p1929
    $region63: #{tpu_custom_call.1} parent=1 // pred_check_branch
      %1932 = sbr.rel (%p1930) target = $region65
    $region64: #{tpu_custom_call.1} parent=1 // pred_region
      %1933 = vst [vmem:[#allocation3] sm:$0xff] 0.0
    $region65: #{tpu_custom_call.1} parent=1 // pred_fallthru
      _
    %v1934 = vld [vmem:[%s0] sm:$0xff]
    %v1935 = vld [vmem:[#allocation10] sm:$0xff]
    %v1936 = vld [vmem:[#allocation10 + $0x8] sm:$0xf]
    %v1937 = vld [vmem:[#allocation10 + $0xc] sm:$0xff]
    %v1938 = vld [vmem:[#allocation10 + $0x14] sm:$0xf]
    %v1939 = vld [vmem:[#allocation10 + $0x18] sm:$0xff]
    %v1940 = vld [vmem:[#allocation10 + $0x20] sm:$0xf]
    %v1941 = vld [vmem:[#allocation10 + $0x24] sm:$0xff]
    %v1942 = vld [vmem:[#allocation10 + $0x2c] sm:$0xf]
    %v1943 = vld [vmem:[#allocation10 + $0x30] sm:$0xff]
    %v1944 = vld [vmem:[#allocation10 + $0x38] sm:$0xf]
    %v1945 = vld [vmem:[#allocation10 + $0x3c] sm:$0xff]
    %v1946 = vld [vmem:[#allocation10 + $0x44] sm:$0xf]
    %v1947 = vld [vmem:[#allocation10 + $0x48] sm:$0xff]
    %v1948 = vld [vmem:[#allocation10 + $0x50] sm:$0xf]
    %v1949 = vld [vmem:[#allocation10 + $0x54] sm:$0xff]
    %v1950 = vld [vmem:[#allocation10 + $0x5c] sm:$0xf]
    %v1951 = vld [vmem:[#allocation10 + $0x60] sm:$0xff]
    %v1952 = vld [vmem:[#allocation10 + $0x68] sm:$0xf]
    %v1953 = vld [vmem:[#allocation10 + $0x6c] sm:$0xff]
    %v1954 = vld [vmem:[#allocation10 + $0x74] sm:$0xf]
    %v1955 = vld [vmem:[#allocation10 + $0x78] sm:$0xff]
    %v1956 = vld [vmem:[#allocation10 + $0x80] sm:$0xf]
    %v1957 = vld [vmem:[#allocation10 + $0x84] sm:$0xff]
    %v1958 = vld [vmem:[#allocation10 + $0x8c] sm:$0xf]
    %v1959 = vld [vmem:[#allocation10 + $0x90] sm:$0xff]
    %v1960 = vld [vmem:[#allocation10 + $0x98] sm:$0xf]
    %v1961 = vld [vmem:[#allocation10 + $0x9c] sm:$0xff]
    %v1962 = vld [vmem:[#allocation10 + $0xa4] sm:$0xf]
    %v1963 = vld [vmem:[#allocation10 + $0xa8] sm:$0xff]
    %v1964 = vld [vmem:[#allocation10 + $0xb0] sm:$0xf]
    %v1965 = vld [vmem:[#allocation10 + $0xb4] sm:$0xff]
    %v1966 = vld [vmem:[#allocation10 + $0xbc] sm:$0xf]
    %v1967 = vld [vmem:[%s7] sm:$0x7]
    %v1968 = vld [vmem:[#allocation3] sm:$0xff]
    %s1969 = smul.u32 0, 8
    %s1970 = smul.u32 0, 3
    %s1971 = smul.addr %s1970, 8
    %s1972 = scalar_lea.vmem [#allocation2], %s1971
    %v1973 = vld [vmem:[%s1972] sm:$0xff]
    %v1974 = vld [vmem:[%s1972 + $0x8] sm:$0xff]
    %v1975 = vld [vmem:[%s1972 + $0x10] sm:$0xff]
    %v1976 = vpack.c.bf16 %v1968, %v1968
    %v1978 = vlaneseq
    %v1979 = vshrl.u32 %v1978, 7
    %v1980 = vsub.s32 0, %v1979
    %v1981 = vrot.slane %v1967, %v1980
    %v1982 = vlaneseq
    %v1983 = vshrl.u32 %v1982, 7
    %v1984 = vsub.s32 1, %v1983
    %v1985 = vrot.slane %v1967, %v1984
    %v1986 = vlaneseq
    %v1987 = vshrl.u32 %v1986, 7
    %v1988 = vsub.s32 2, %v1987
    %v1989 = vrot.slane %v1967, %v1988
    %v2025 = vunpack.c.l.b16 %v1935
    %v2026 = vunpack.c.h.b16 %v1935
    %v2027 = vunpack.c.l.b16 %v1936
    %v2028 = vunpack.c.l.b16 %v1937
    %v2029 = vunpack.c.h.b16 %v1937
    %v2030 = vunpack.c.l.b16 %v1938
    %v2031 = vunpack.c.l.b16 %v1939
    %v2032 = vunpack.c.h.b16 %v1939
    %v2033 = vunpack.c.l.b16 %v1940
    %v2034 = vunpack.c.l.b16 %v1941
    %v2035 = vunpack.c.h.b16 %v1941
    %v2036 = vunpack.c.l.b16 %v1942
    %v2037 = vunpack.c.l.b16 %v1943
    %v2038 = vunpack.c.h.b16 %v1943
    %v2039 = vunpack.c.l.b16 %v1944
    %v2040 = vunpack.c.l.b16 %v1945
    %v2041 = vunpack.c.h.b16 %v1945
    %v2042 = vunpack.c.l.b16 %v1946
    %v2043 = vunpack.c.l.b16 %v1947
    %v2044 = vunpack.c.h.b16 %v1947
    %v2045 = vunpack.c.l.b16 %v1948
    %v2046 = vunpack.c.l.b16 %v1949
    %v2047 = vunpack.c.h.b16 %v1949
    %v2048 = vunpack.c.l.b16 %v1950
    %v2049 = vunpack.c.l.b16 %v1951
    %v2050 = vunpack.c.h.b16 %v1951
    %v2051 = vunpack.c.l.b16 %v1952
    %v2052 = vunpack.c.l.b16 %v1953
    %v2053 = vunpack.c.h.b16 %v1953
    %v2054 = vunpack.c.l.b16 %v1954
    %v2055 = vunpack.c.l.b16 %v1955
    %v2056 = vunpack.c.h.b16 %v1955
    %v2057 = vunpack.c.l.b16 %v1956
    %v2058 = vunpack.c.l.b16 %v1957
    %v2059 = vunpack.c.h.b16 %v1957
    %v2060 = vunpack.c.l.b16 %v1958
    %v2061 = vunpack.c.l.b16 %v1959
    %v2062 = vunpack.c.h.b16 %v1959
    %v2063 = vunpack.c.l.b16 %v1960
    %v2064 = vunpack.c.l.b16 %v1961
    %v2065 = vunpack.c.h.b16 %v1961
    %v2066 = vunpack.c.l.b16 %v1962
    %v2067 = vunpack.c.l.b16 %v1963
    %v2068 = vunpack.c.h.b16 %v1963
    %v2069 = vunpack.c.l.b16 %v1964
    %v2070 = vunpack.c.l.b16 %v1965
    %v2071 = vunpack.c.h.b16 %v1965
    %v2072 = vunpack.c.l.b16 %v1966
    %v2073 = vpack.c.b16 %v2028, %v2025
    %v2074 = vpack.c.b16 %v2029, %v2026
    %v2075 = vpack.c.b16 %v2030, %v2027
    %v2076 = vpack.c.b16 %v2034, %v2031
    %v2077 = vpack.c.b16 %v2035, %v2032
    %v2078 = vpack.c.b16 %v2036, %v2033
    %v2079 = vpack.c.b16 %v2040, %v2037
    %v2080 = vpack.c.b16 %v2041, %v2038
    %v2081 = vpack.c.b16 %v2042, %v2039
    %v2082 = vpack.c.b16 %v2046, %v2043
    %v2083 = vpack.c.b16 %v2047, %v2044
    %v2084 = vpack.c.b16 %v2048, %v2045
    %v2085 = vpack.c.b16 %v2052, %v2049
    %v2086 = vpack.c.b16 %v2053, %v2050
    %v2087 = vpack.c.b16 %v2054, %v2051
    %v2088 = vpack.c.b16 %v2058, %v2055
    %v2089 = vpack.c.b16 %v2059, %v2056
    %v2090 = vpack.c.b16 %v2060, %v2057
    %v2091 = vpack.c.b16 %v2064, %v2061
    %v2092 = vpack.c.b16 %v2065, %v2062
    %v2093 = vpack.c.b16 %v2066, %v2063
    %v2094 = vpack.c.b16 %v2070, %v2067
    %v2095 = vpack.c.b16 %v2071, %v2068
    %v2096 = vpack.c.b16 %v2072, %v2069
    %2121 = vmatprep.subr.bf16.mxu0 %v2095
    %2122 = vmatpush1.bf16.msra.mxu0 %v2094
    %2123 = vmatprep.subr.bf16.mxu0 %v2092
    %2124 = vmatpush1.bf16.msra.mxu0 %v2091
    %2125 = vmatprep.subr.bf16.mxu0 %v2089
    %2126 = vmatpush1.bf16.msra.mxu0 %v2088
    %2127 = vmatprep.subr.bf16.mxu0 %v2086
    %2128 = vmatpush1.bf16.msra.mxu0 %v2085
    %2129 = vmatprep.subr.bf16.mxu0 %v2083
    %2130 = vmatpush1.bf16.msra.mxu0 %v2082
    %2131 = vmatprep.subr.bf16.mxu0 %v2080
    %2132 = vmatpush1.bf16.msra.mxu0 %v2079
    %2133 = vmatprep.subr.bf16.mxu0 %v2077
    %2134 = vmatpush1.bf16.msra.mxu0 %v2076
    %2135 = vmatprep.subr.bf16.mxu0 %v2074
    %2136 = vmatpush1.bf16.msra.mxu0 %v2073
    %2137 = vmatprep.subr.bf16.mxu0 0
    %2138 = vmatpush2.bf16.msra.mxu0 0
    %2139 = vmatprep.subr.bf16.mxu0 0
    %2140 = vmatpush2.bf16.msra.mxu0 0
    %2141 = vmatprep.subr.bf16.mxu0 0
    %2142 = vmatpush2.bf16.msra.mxu0 0
    %2143 = vmatprep.subr.bf16.mxu0 0
    %2144 = vmatpush2.bf16.msra.mxu0 0
    %2145 = vmatprep.subr.bf16.mxu0 0
    %2146 = vmatpush2.bf16.msra.mxu0 0
    %2147 = vmatprep.subr.bf16.mxu0 0
    %2148 = vmatpush2.bf16.msra.mxu0 0
    %2149 = vmatprep.subr.bf16.mxu0 0
    %2150 = vmatpush2.bf16.msra.mxu0 0
    %2151 = vmatprep.subr.bf16.mxu0 0
    %2152 = vmatpush2.bf16.msra.mxu0 0
    %2153 = vmatprep.mubr.bf16.mxu0 0
    %2154 = vmatmul.mubr.bf16.gmra.mxu0 %v1976
    %v2155 = vpop.f32.mrf.mxu0
    %v2156 = vadd.f32 %v1981, %v2155
    %v2157 = vpop.f32.mrf.mxu0
    %v2158 = vadd.f32 %v1985, %v2157
    %v2159 = vpop.f32.mrf.mxu0
    %v2160 = vpop.f32.mrf.mxu0
    %2161 = vdwg.mxu0
    %2162 = vmatprep.subr.bf16.mxu0 0
    %2163 = vmatpush1.bf16.msra.mxu0 %v2096
    %2164 = vmatprep.subr.bf16.mxu0 0
    %2165 = vmatpush1.bf16.msra.mxu0 %v2093
    %2166 = vmatprep.subr.bf16.mxu0 0
    %2167 = vmatpush1.bf16.msra.mxu0 %v2090
    %2168 = vmatprep.subr.bf16.mxu0 0
    %2169 = vmatpush1.bf16.msra.mxu0 %v2087
    %2170 = vmatprep.subr.bf16.mxu0 0
    %2171 = vmatpush1.bf16.msra.mxu0 %v2084
    %2172 = vmatprep.subr.bf16.mxu0 0
    %2173 = vmatpush1.bf16.msra.mxu0 %v2081
    %2174 = vmatprep.subr.bf16.mxu0 0
    %2175 = vmatpush1.bf16.msra.mxu0 %v2078
    %2176 = vmatprep.subr.bf16.mxu0 0
    %2177 = vmatpush1.bf16.msra.mxu0 %v2075
    %2178 = vmatprep.subr.bf16.mxu0 0
    %2179 = vmatpush2.bf16.msra.mxu0 0
    %2180 = vmatprep.subr.bf16.mxu0 0
    %2181 = vmatpush2.bf16.msra.mxu0 0
    %2182 = vmatprep.subr.bf16.mxu0 0
    %2183 = vmatpush2.bf16.msra.mxu0 0
    %2184 = vmatprep.subr.bf16.mxu0 0
    %2185 = vmatpush2.bf16.msra.mxu0 0
    %2186 = vmatprep.subr.bf16.mxu0 0
    %2187 = vmatpush2.bf16.msra.mxu0 0
    %2188 = vmatprep.subr.bf16.mxu0 0
    %2189 = vmatpush2.bf16.msra.mxu0 0
    %2190 = vmatprep.subr.bf16.mxu0 0
    %2191 = vmatpush2.bf16.msra.mxu0 0
    %2192 = vmatprep.subr.bf16.mxu0 0
    %2193 = vmatpush2.bf16.msra.mxu0 0
    %2194 = vmatprep.mubr.bf16.mxu0 0
    %2195 = vmatmul.mubr.bf16.gmra.mxu0 %v1976
    %v2196 = vpop.f32.mrf.mxu0
    %v2197 = vadd.f32 %v1989, %v2196
    %v2198 = vpop.f32.mrf.mxu0
    %v2199 = vpop.f32.mrf.mxu0
    %v2200 = vpop.f32.mrf.mxu0
    %2201 = vdwg.mxu0
    %v2202 = vadd.f32 %v1973, %v2156
    %v2203 = vxor.u32 %v2202, 2147483648
    %v2204 = vmul.f32 %v2203, 1.442695
    %v2205 = vpow.pop %v2204
    %v2206 = vadd.f32 %v2205, 1.0
    %v2207 = vrcp.pop %v2206
    %v2208 = vmul.f32 1.0, %v2207
    %v2209 = vadd.f32 %v1974, %v2158
    %v2210 = vxor.u32 %v2209, 2147483648
    %v2211 = vmul.f32 %v2210, 1.442695
    %v2212 = vpow.pop %v2211
    %v2213 = vadd.f32 %v2212, 1.0
    %v2214 = vrcp.pop %v2213
    %v2215 = vmul.f32 1.0, %v2214
    %v2216 = vmul.f32 %v2208, %v2197
    %v2217 = vadd.f32 %v1975, %v2216
    %v2218 = vtanh.pop %v2217
    %v2219 = vsub.f32 1.0, %v2215
    %v2220 = vmul.f32 %v2219, %v2218
    %v2221 = vmul.f32 %v2215, %v1968
    %v2222 = vadd.f32 %v2220, %v2221
    %v2223 = vstv %s1969
    %vm2224 = vcmp.gt.s32.totalorder %v1934, %v2223
    %v2225 = vsel %vm2224, 1, 0
    %2226 = vset.pattern.permute.xlu0 0
    %2227 = vperm.xlu0 %2226, %v2225
    %v2228 = vpop.permute.xlu0 %2227
    %vm2229 = vcmp.eq.s32.totalorder %v2228, 1
    %v2230 = vsel %vm2229, %v2222, %v1968
    %s2231 = sadd.s32 %s1969, 1
    %s2232 = smul.u32 1, 3
    %s2233 = smul.addr %s2232, 8
    %s2234 = scalar_lea.vmem [#allocation2], %s2233
    %v2235 = vld [vmem:[%s2234] sm:$0xff]
    %v2236 = vld [vmem:[%s2234 + $0x8] sm:$0xff]
    %v2237 = vld [vmem:[%s2234 + $0x10] sm:$0xff]
    %v2238 = vpack.c.bf16 %v2230, %v2230
    %2239 = vmatprep.subr.bf16.mxu0 %v2095
    %2240 = vmatpush1.bf16.msra.mxu0 %v2094
    %2241 = vmatprep.subr.bf16.mxu0 %v2092
    %2242 = vmatpush1.bf16.msra.mxu0 %v2091
    %2243 = vmatprep.subr.bf16.mxu0 %v2089
    %2244 = vmatpush1.bf16.msra.mxu0 %v2088
    %2245 = vmatprep.subr.bf16.mxu0 %v2086
    %2246 = vmatpush1.bf16.msra.mxu0 %v2085
    %2247 = vmatprep.subr.bf16.mxu0 %v2083
    %2248 = vmatpush1.bf16.msra.mxu0 %v2082
    %2249 = vmatprep.subr.bf16.mxu0 %v2080
    %2250 = vmatpush1.bf16.msra.mxu0 %v2079
    %2251 = vmatprep.subr.bf16.mxu0 %v2077
    %2252 = vmatpush1.bf16.msra.mxu0 %v2076
    %2253 = vmatprep.subr.bf16.mxu0 %v2074
    %2254 = vmatpush1.bf16.msra.mxu0 %v2073
    %2255 = vmatprep.subr.bf16.mxu0 0
    %2256 = vmatpush2.bf16.msra.mxu0 0
    %2257 = vmatprep.subr.bf16.mxu0 0
    %2258 = vmatpush2.bf16.msra.mxu0 0
    %2259 = vmatprep.subr.bf16.mxu0 0
    %2260 = vmatpush2.bf16.msra.mxu0 0
    %2261 = vmatprep.subr.bf16.mxu0 0
    %2262 = vmatpush2.bf16.msra.mxu0 0
    %2263 = vmatprep.subr.bf16.mxu0 0
    %2264 = vmatpush2.bf16.msra.mxu0 0
    %2265 = vmatprep.subr.bf16.mxu0 0
    %2266 = vmatpush2.bf16.msra.mxu0 0
    %2267 = vmatprep.subr.bf16.mxu0 0
    %2268 = vmatpush2.bf16.msra.mxu0 0
    %2269 = vmatprep.subr.bf16.mxu0 0
    %2270 = vmatpush2.bf16.msra.mxu0 0
    %2271 = vmatprep.mubr.bf16.mxu0 0
    %2272 = vmatmul.mubr.bf16.gmra.mxu0 %v2238
    %v2273 = vpop.f32.mrf.mxu0
    %v2274 = vadd.f32 %v1981, %v2273
    %v2275 = vpop.f32.mrf.mxu0
    %v2276 = vadd.f32 %v1985, %v2275
    %v2277 = vpop.f32.mrf.mxu0
    %v2278 = vpop.f32.mrf.mxu0
    %2279 = vdwg.mxu0
    %2280 = vmatprep.subr.bf16.mxu0 0
    %2281 = vmatpush1.bf16.msra.mxu0 %v2096
    %2282 = vmatprep.subr.bf16.mxu0 0
    %2283 = vmatpush1.bf16.msra.mxu0 %v2093
    %2284 = vmatprep.subr.bf16.mxu0 0
    %2285 = vmatpush1.bf16.msra.mxu0 %v2090
    %2286 = vmatprep.subr.bf16.mxu0 0
    %2287 = vmatpush1.bf16.msra.mxu0 %v2087
    %2288 = vmatprep.subr.bf16.mxu0 0
    %2289 = vmatpush1.bf16.msra.mxu0 %v2084
    %2290 = vmatprep.subr.bf16.mxu0 0
    %2291 = vmatpush1.bf16.msra.mxu0 %v2081
    %2292 = vmatprep.subr.bf16.mxu0 0
    %2293 = vmatpush1.bf16.msra.mxu0 %v2078
    %2294 = vmatprep.subr.bf16.mxu0 0
    %2295 = vmatpush1.bf16.msra.mxu0 %v2075
    %2296 = vmatprep.subr.bf16.mxu0 0
    %2297 = vmatpush2.bf16.msra.mxu0 0
    %2298 = vmatprep.subr.bf16.mxu0 0
    %2299 = vmatpush2.bf16.msra.mxu0 0
    %2300 = vmatprep.subr.bf16.mxu0 0
    %2301 = vmatpush2.bf16.msra.mxu0 0
    %2302 = vmatprep.subr.bf16.mxu0 0
    %2303 = vmatpush2.bf16.msra.mxu0 0
    %2304 = vmatprep.subr.bf16.mxu0 0
    %2305 = vmatpush2.bf16.msra.mxu0 0
    %2306 = vmatprep.subr.bf16.mxu0 0
    %2307 = vmatpush2.bf16.msra.mxu0 0
    %2308 = vmatprep.subr.bf16.mxu0 0
    %2309 = vmatpush2.bf16.msra.mxu0 0
    %2310 = vmatprep.subr.bf16.mxu0 0
    %2311 = vmatpush2.bf16.msra.mxu0 0
    %2312 = vmatprep.mubr.bf16.mxu0 0
    %2313 = vmatmul.mubr.bf16.gmra.mxu0 %v2238
    %v2314 = vpop.f32.mrf.mxu0
    %v2315 = vadd.f32 %v1989, %v2314
    %v2316 = vpop.f32.mrf.mxu0
    %v2317 = vpop.f32.mrf.mxu0
    %v2318 = vpop.f32.mrf.mxu0
    %2319 = vdwg.mxu0
    %v2320 = vadd.f32 %v2235, %v2274
    %v2321 = vxor.u32 %v2320, 2147483648
    %v2322 = vmul.f32 %v2321, 1.442695
    %v2323 = vpow.pop %v2322
    %v2324 = vadd.f32 %v2323, 1.0
    %v2325 = vrcp.pop %v2324
    %v2326 = vmul.f32 1.0, %v2325
    %v2327 = vadd.f32 %v2236, %v2276
    %v2328 = vxor.u32 %v2327, 2147483648
    %v2329 = vmul.f32 %v2328, 1.442695
    %v2330 = vpow.pop %v2329
    %v2331 = vadd.f32 %v2330, 1.0
    %v2332 = vrcp.pop %v2331
    %v2333 = vmul.f32 1.0, %v2332
    %v2334 = vmul.f32 %v2326, %v2315
    %v2335 = vadd.f32 %v2237, %v2334
    %v2336 = vtanh.pop %v2335
    %v2337 = vsub.f32 1.0, %v2333
    %v2338 = vmul.f32 %v2337, %v2336
    %v2339 = vmul.f32 %v2333, %v2230
    %v2340 = vadd.f32 %v2338, %v2339
    %v2341 = vstv %s2231
    %vm2342 = vcmp.gt.s32.totalorder %v1934, %v2341
    %v2343 = vsel %vm2342, 1, 0
    %2344 = vset.pattern.permute.xlu0 0
    %2345 = vperm.xlu0 %2344, %v2343
    %v2346 = vpop.permute.xlu0 %2345
    %vm2347 = vcmp.eq.s32.totalorder %v2346, 1
    %v2348 = vsel %vm2347, %v2340, %v2230
    %s2349 = sadd.s32 %s1969, 2
    %s2350 = smul.u32 2, 3
    %s2351 = smul.addr %s2350, 8
    %s2352 = scalar_lea.vmem [#allocation2], %s2351
    %v2353 = vld [vmem:[%s2352] sm:$0xff]
    %v2354 = vld [vmem:[%s2352 + $0x8] sm:$0xff]
    %v2355 = vld [vmem:[%s2352 + $0x10] sm:$0xff]
    %v2356 = vpack.c.bf16 %v2348, %v2348
    %2357 = vmatprep.subr.bf16.mxu0 %v2095
    %2358 = vmatpush1.bf16.msra.mxu0 %v2094
    %2359 = vmatprep.subr.bf16.mxu0 %v2092
    %2360 = vmatpush1.bf16.msra.mxu0 %v2091
    %2361 = vmatprep.subr.bf16.mxu0 %v2089
    %2362 = vmatpush1.bf16.msra.mxu0 %v2088
    %2363 = vmatprep.subr.bf16.mxu0 %v2086
    %2364 = vmatpush1.bf16.msra.mxu0 %v2085
    %2365 = vmatprep.subr.bf16.mxu0 %v2083
    %2366 = vmatpush1.bf16.msra.mxu0 %v2082
    %2367 = vmatprep.subr.bf16.mxu0 %v2080
    %2368 = vmatpush1.bf16.msra.mxu0 %v2079
    %2369 = vmatprep.subr.bf16.mxu0 %v2077
    %2370 = vmatpush1.bf16.msra.mxu0 %v2076
    %2371 = vmatprep.subr.bf16.mxu0 %v2074
    %2372 = vmatpush1.bf16.msra.mxu0 %v2073
    %2373 = vmatprep.subr.bf16.mxu0 0
    %2374 = vmatpush2.bf16.msra.mxu0 0
    %2375 = vmatprep.subr.bf16.mxu0 0
    %2376 = vmatpush2.bf16.msra.mxu0 0
    %2377 = vmatprep.subr.bf16.mxu0 0
    %2378 = vmatpush2.bf16.msra.mxu0 0
    %2379 = vmatprep.subr.bf16.mxu0 0
    %2380 = vmatpush2.bf16.msra.mxu0 0
    %2381 = vmatprep.subr.bf16.mxu0 0
    %2382 = vmatpush2.bf16.msra.mxu0 0
    %2383 = vmatprep.subr.bf16.mxu0 0
    %2384 = vmatpush2.bf16.msra.mxu0 0
    %2385 = vmatprep.subr.bf16.mxu0 0
    %2386 = vmatpush2.bf16.msra.mxu0 0
    %2387 = vmatprep.subr.bf16.mxu0 0
    %2388 = vmatpush2.bf16.msra.mxu0 0
    %2389 = vmatprep.mubr.bf16.mxu0 0
    %2390 = vmatmul.mubr.bf16.gmra.mxu0 %v2356
    %v2391 = vpop.f32.mrf.mxu0
    %v2392 = vadd.f32 %v1981, %v2391
    %v2393 = vpop.f32.mrf.mxu0
    %v2394 = vadd.f32 %v1985, %v2393
    %v2395 = vpop.f32.mrf.mxu0
    %v2396 = vpop.f32.mrf.mxu0
    %2397 = vdwg.mxu0
    %2398 = vmatprep.subr.bf16.mxu0 0
    %2399 = vmatpush1.bf16.msra.mxu0 %v2096
    %2400 = vmatprep.subr.bf16.mxu0 0
    %2401 = vmatpush1.bf16.msra.mxu0 %v2093
    %2402 = vmatprep.subr.bf16.mxu0 0
    %2403 = vmatpush1.bf16.msra.mxu0 %v2090
    %2404 = vmatprep.subr.bf16.mxu0 0
    %2405 = vmatpush1.bf16.msra.mxu0 %v2087
    %2406 = vmatprep.subr.bf16.mxu0 0
    %2407 = vmatpush1.bf16.msra.mxu0 %v2084
    %2408 = vmatprep.subr.bf16.mxu0 0
    %2409 = vmatpush1.bf16.msra.mxu0 %v2081
    %2410 = vmatprep.subr.bf16.mxu0 0
    %2411 = vmatpush1.bf16.msra.mxu0 %v2078
    %2412 = vmatprep.subr.bf16.mxu0 0
    %2413 = vmatpush1.bf16.msra.mxu0 %v2075
    %2414 = vmatprep.subr.bf16.mxu0 0
    %2415 = vmatpush2.bf16.msra.mxu0 0
    %2416 = vmatprep.subr.bf16.mxu0 0
    %2417 = vmatpush2.bf16.msra.mxu0 0
    %2418 = vmatprep.subr.bf16.mxu0 0
    %2419 = vmatpush2.bf16.msra.mxu0 0
    %2420 = vmatprep.subr.bf16.mxu0 0
    %2421 = vmatpush2.bf16.msra.mxu0 0
    %2422 = vmatprep.subr.bf16.mxu0 0
    %2423 = vmatpush2.bf16.msra.mxu0 0
    %2424 = vmatprep.subr.bf16.mxu0 0
    %2425 = vmatpush2.bf16.msra.mxu0 0
    %2426 = vmatprep.subr.bf16.mxu0 0
    %2427 = vmatpush2.bf16.msra.mxu0 0
    %2428 = vmatprep.subr.bf16.mxu0 0
    %2429 = vmatpush2.bf16.msra.mxu0 0
    %2430 = vmatprep.mubr.bf16.mxu0 0
    %2431 = vmatmul.mubr.bf16.gmra.mxu0 %v2356
    %v2432 = vpop.f32.mrf.mxu0
    %v2433 = vadd.f32 %v1989, %v2432
    %v2434 = vpop.f32.mrf.mxu0
    %v2435 = vpop.f32.mrf.mxu0
    %v2436 = vpop.f32.mrf.mxu0
    %2437 = vdwg.mxu0
    %v2438 = vadd.f32 %v2353, %v2392
    %v2439 = vxor.u32 %v2438, 2147483648
    %v2440 = vmul.f32 %v2439, 1.442695
    %v2441 = vpow.pop %v2440
    %v2442 = vadd.f32 %v2441, 1.0
    %v2443 = vrcp.pop %v2442
    %v2444 = vmul.f32 1.0, %v2443
    %v2445 = vadd.f32 %v2354, %v2394
    %v2446 = vxor.u32 %v2445, 2147483648
    %v2447 = vmul.f32 %v2446, 1.442695
    %v2448 = vpow.pop %v2447
    %v2449 = vadd.f32 %v2448, 1.0
    %v2450 = vrcp.pop %v2449
    %v2451 = vmul.f32 1.0, %v2450
    %v2452 = vmul.f32 %v2444, %v2433
    %v2453 = vadd.f32 %v2355, %v2452
    %v2454 = vtanh.pop %v2453
    %v2455 = vsub.f32 1.0, %v2451
    %v2456 = vmul.f32 %v2455, %v2454
    %v2457 = vmul.f32 %v2451, %v2348
    %v2458 = vadd.f32 %v2456, %v2457
    %v2459 = vstv %s2349
    %vm2460 = vcmp.gt.s32.totalorder %v1934, %v2459
    %v2461 = vsel %vm2460, 1, 0
    %2462 = vset.pattern.permute.xlu0 0
    %2463 = vperm.xlu0 %2462, %v2461
    %v2464 = vpop.permute.xlu0 %2463
    %vm2465 = vcmp.eq.s32.totalorder %v2464, 1
    %v2466 = vsel %vm2465, %v2458, %v2348
    %s2467 = sadd.s32 %s1969, 3
    %s2468 = smul.u32 3, 3
    %s2469 = smul.addr %s2468, 8
    %s2470 = scalar_lea.vmem [#allocation2], %s2469
    %v2471 = vld [vmem:[%s2470] sm:$0xff]
    %v2472 = vld [vmem:[%s2470 + $0x8] sm:$0xff]
    %v2473 = vld [vmem:[%s2470 + $0x10] sm:$0xff]
    %v2474 = vpack.c.bf16 %v2466, %v2466
    %2475 = vmatprep.subr.bf16.mxu0 %v2095
    %2476 = vmatpush1.bf16.msra.mxu0 %v2094
    %2477 = vmatprep.subr.bf16.mxu0 %v2092
    %2478 = vmatpush1.bf16.msra.mxu0 %v2091
    %2479 = vmatprep.subr.bf16.mxu0 %v2089
    %2480 = vmatpush1.bf16.msra.mxu0 %v2088
    %2481 = vmatprep.subr.bf16.mxu0 %v2086
    %2482 = vmatpush1.bf16.msra.mxu0 %v2085
    %2483 = vmatprep.subr.bf16.mxu0 %v2083
    %2484 = vmatpush1.bf16.msra.mxu0 %v2082
    %2485 = vmatprep.subr.bf16.mxu0 %v2080
    %2486 = vmatpush1.bf16.msra.mxu0 %v2079
    %2487 = vmatprep.subr.bf16.mxu0 %v2077
    %2488 = vmatpush1.bf16.msra.mxu0 %v2076
    %2489 = vmatprep.subr.bf16.mxu0 %v2074
    %2490 = vmatpush1.bf16.msra.mxu0 %v2073
    %2491 = vmatprep.subr.bf16.mxu0 0
    %2492 = vmatpush2.bf16.msra.mxu0 0
    %2493 = vmatprep.subr.bf16.mxu0 0
    %2494 = vmatpush2.bf16.msra.mxu0 0
    %2495 = vmatprep.subr.bf16.mxu0 0
    %2496 = vmatpush2.bf16.msra.mxu0 0
    %2497 = vmatprep.subr.bf16.mxu0 0
    %2498 = vmatpush2.bf16.msra.mxu0 0
    %2499 = vmatprep.subr.bf16.mxu0 0
    %2500 = vmatpush2.bf16.msra.mxu0 0
    %2501 = vmatprep.subr.bf16.mxu0 0
    %2502 = vmatpush2.bf16.msra.mxu0 0
    %2503 = vmatprep.subr.bf16.mxu0 0
    %2504 = vmatpush2.bf16.msra.mxu0 0
    %2505 = vmatprep.subr.bf16.mxu0 0
    %2506 = vmatpush2.bf16.msra.mxu0 0
    %2507 = vmatprep.mubr.bf16.mxu0 0
    %2508 = vmatmul.mubr.bf16.gmra.mxu0 %v2474
    %v2509 = vpop.f32.mrf.mxu0
    %v2510 = vadd.f32 %v1981, %v2509
    %v2511 = vpop.f32.mrf.mxu0
    %v2512 = vadd.f32 %v1985, %v2511
    %v2513 = vpop.f32.mrf.mxu0
    %v2514 = vpop.f32.mrf.mxu0
    %2515 = vdwg.mxu0
    %2516 = vmatprep.subr.bf16.mxu0 0
    %2517 = vmatpush1.bf16.msra.mxu0 %v2096
    %2518 = vmatprep.subr.bf16.mxu0 0
    %2519 = vmatpush1.bf16.msra.mxu0 %v2093
    %2520 = vmatprep.subr.bf16.mxu0 0
    %2521 = vmatpush1.bf16.msra.mxu0 %v2090
    %2522 = vmatprep.subr.bf16.mxu0 0
    %2523 = vmatpush1.bf16.msra.mxu0 %v2087
    %2524 = vmatprep.subr.bf16.mxu0 0
    %2525 = vmatpush1.bf16.msra.mxu0 %v2084
    %2526 = vmatprep.subr.bf16.mxu0 0
    %2527 = vmatpush1.bf16.msra.mxu0 %v2081
    %2528 = vmatprep.subr.bf16.mxu0 0
    %2529 = vmatpush1.bf16.msra.mxu0 %v2078
    %2530 = vmatprep.subr.bf16.mxu0 0
    %2531 = vmatpush1.bf16.msra.mxu0 %v2075
    %2532 = vmatprep.subr.bf16.mxu0 0
    %2533 = vmatpush2.bf16.msra.mxu0 0
    %2534 = vmatprep.subr.bf16.mxu0 0
    %2535 = vmatpush2.bf16.msra.mxu0 0
    %2536 = vmatprep.subr.bf16.mxu0 0
    %2537 = vmatpush2.bf16.msra.mxu0 0
    %2538 = vmatprep.subr.bf16.mxu0 0
    %2539 = vmatpush2.bf16.msra.mxu0 0
    %2540 = vmatprep.subr.bf16.mxu0 0
    %2541 = vmatpush2.bf16.msra.mxu0 0
    %2542 = vmatprep.subr.bf16.mxu0 0
    %2543 = vmatpush2.bf16.msra.mxu0 0
    %2544 = vmatprep.subr.bf16.mxu0 0
    %2545 = vmatpush2.bf16.msra.mxu0 0
    %2546 = vmatprep.subr.bf16.mxu0 0
    %2547 = vmatpush2.bf16.msra.mxu0 0
    %2548 = vmatprep.mubr.bf16.mxu0 0
    %2549 = vmatmul.mubr.bf16.gmra.mxu0 %v2474
    %v2550 = vpop.f32.mrf.mxu0
    %v2551 = vadd.f32 %v1989, %v2550
    %v2552 = vpop.f32.mrf.mxu0
    %v2553 = vpop.f32.mrf.mxu0
    %v2554 = vpop.f32.mrf.mxu0
    %2555 = vdwg.mxu0
    %v2556 = vadd.f32 %v2471, %v2510
    %v2557 = vxor.u32 %v2556, 2147483648
    %v2558 = vmul.f32 %v2557, 1.442695
    %v2559 = vpow.pop %v2558
    %v2560 = vadd.f32 %v2559, 1.0
    %v2561 = vrcp.pop %v2560
    %v2562 = vmul.f32 1.0, %v2561
    %v2563 = vadd.f32 %v2472, %v2512
    %v2564 = vxor.u32 %v2563, 2147483648
    %v2565 = vmul.f32 %v2564, 1.442695
    %v2566 = vpow.pop %v2565
    %v2567 = vadd.f32 %v2566, 1.0
    %v2568 = vrcp.pop %v2567
    %v2569 = vmul.f32 1.0, %v2568
    %v2570 = vmul.f32 %v2562, %v2551
    %v2571 = vadd.f32 %v2473, %v2570
    %v2572 = vtanh.pop %v2571
    %v2573 = vsub.f32 1.0, %v2569
    %v2574 = vmul.f32 %v2573, %v2572
    %v2575 = vmul.f32 %v2569, %v2466
    %v2576 = vadd.f32 %v2574, %v2575
    %v2577 = vstv %s2467
    %vm2578 = vcmp.gt.s32.totalorder %v1934, %v2577
    %v2579 = vsel %vm2578, 1, 0
    %2580 = vset.pattern.permute.xlu0 0
    %2581 = vperm.xlu0 %2580, %v2579
    %v2582 = vpop.permute.xlu0 %2581
    %vm2583 = vcmp.eq.s32.totalorder %v2582, 1
    %v2584 = vsel %vm2583, %v2576, %v2466
    %s2585 = sadd.s32 %s1969, 4
    %s2586 = smul.u32 4, 3
    %s2587 = smul.addr %s2586, 8
    %s2588 = scalar_lea.vmem [#allocation2], %s2587
    %v2589 = vld [vmem:[%s2588] sm:$0xff]
    %v2590 = vld [vmem:[%s2588 + $0x8] sm:$0xff]
    %v2591 = vld [vmem:[%s2588 + $0x10] sm:$0xff]
    %v2592 = vpack.c.bf16 %v2584, %v2584
    %2593 = vmatprep.subr.bf16.mxu0 %v2095
    %2594 = vmatpush1.bf16.msra.mxu0 %v2094
    %2595 = vmatprep.subr.bf16.mxu0 %v2092
    %2596 = vmatpush1.bf16.msra.mxu0 %v2091
    %2597 = vmatprep.subr.bf16.mxu0 %v2089
    %2598 = vmatpush1.bf16.msra.mxu0 %v2088
    %2599 = vmatprep.subr.bf16.mxu0 %v2086
    %2600 = vmatpush1.bf16.msra.mxu0 %v2085
    %2601 = vmatprep.subr.bf16.mxu0 %v2083
    %2602 = vmatpush1.bf16.msra.mxu0 %v2082
    %2603 = vmatprep.subr.bf16.mxu0 %v2080
    %2604 = vmatpush1.bf16.msra.mxu0 %v2079
    %2605 = vmatprep.subr.bf16.mxu0 %v2077
    %2606 = vmatpush1.bf16.msra.mxu0 %v2076
    %2607 = vmatprep.subr.bf16.mxu0 %v2074
    %2608 = vmatpush1.bf16.msra.mxu0 %v2073
    %2609 = vmatprep.subr.bf16.mxu0 0
    %2610 = vmatpush2.bf16.msra.mxu0 0
    %2611 = vmatprep.subr.bf16.mxu0 0
    %2612 = vmatpush2.bf16.msra.mxu0 0
    %2613 = vmatprep.subr.bf16.mxu0 0
    %2614 = vmatpush2.bf16.msra.mxu0 0
    %2615 = vmatprep.subr.bf16.mxu0 0
    %2616 = vmatpush2.bf16.msra.mxu0 0
    %2617 = vmatprep.subr.bf16.mxu0 0
    %2618 = vmatpush2.bf16.msra.mxu0 0
    %2619 = vmatprep.subr.bf16.mxu0 0
    %2620 = vmatpush2.bf16.msra.mxu0 0
    %2621 = vmatprep.subr.bf16.mxu0 0
    %2622 = vmatpush2.bf16.msra.mxu0 0
    %2623 = vmatprep.subr.bf16.mxu0 0
    %2624 = vmatpush2.bf16.msra.mxu0 0
    %2625 = vmatprep.mubr.bf16.mxu0 0
    %2626 = vmatmul.mubr.bf16.gmra.mxu0 %v2592
    %v2627 = vpop.f32.mrf.mxu0
    %v2628 = vadd.f32 %v1981, %v2627
    %v2629 = vpop.f32.mrf.mxu0
    %v2630 = vadd.f32 %v1985, %v2629
    %v2631 = vpop.f32.mrf.mxu0
    %v2632 = vpop.f32.mrf.mxu0
    %2633 = vdwg.mxu0
    %2634 = vmatprep.subr.bf16.mxu0 0
    %2635 = vmatpush1.bf16.msra.mxu0 %v2096
    %2636 = vmatprep.subr.bf16.mxu0 0
    %2637 = vmatpush1.bf16.msra.mxu0 %v2093
    %2638 = vmatprep.subr.bf16.mxu0 0
    %2639 = vmatpush1.bf16.msra.mxu0 %v2090
    %2640 = vmatprep.subr.bf16.mxu0 0
    %2641 = vmatpush1.bf16.msra.mxu0 %v2087
    %2642 = vmatprep.subr.bf16.mxu0 0
    %2643 = vmatpush1.bf16.msra.mxu0 %v2084
    %2644 = vmatprep.subr.bf16.mxu0 0
    %2645 = vmatpush1.bf16.msra.mxu0 %v2081
    %2646 = vmatprep.subr.bf16.mxu0 0
    %2647 = vmatpush1.bf16.msra.mxu0 %v2078
    %2648 = vmatprep.subr.bf16.mxu0 0
    %2649 = vmatpush1.bf16.msra.mxu0 %v2075
    %2650 = vmatprep.subr.bf16.mxu0 0
    %2651 = vmatpush2.bf16.msra.mxu0 0
    %2652 = vmatprep.subr.bf16.mxu0 0
    %2653 = vmatpush2.bf16.msra.mxu0 0
    %2654 = vmatprep.subr.bf16.mxu0 0
    %2655 = vmatpush2.bf16.msra.mxu0 0
    %2656 = vmatprep.subr.bf16.mxu0 0
    %2657 = vmatpush2.bf16.msra.mxu0 0
    %2658 = vmatprep.subr.bf16.mxu0 0
    %2659 = vmatpush2.bf16.msra.mxu0 0
    %2660 = vmatprep.subr.bf16.mxu0 0
    %2661 = vmatpush2.bf16.msra.mxu0 0
    %2662 = vmatprep.subr.bf16.mxu0 0
    %2663 = vmatpush2.bf16.msra.mxu0 0
    %2664 = vmatprep.subr.bf16.mxu0 0
    %2665 = vmatpush2.bf16.msra.mxu0 0
    %2666 = vmatprep.mubr.bf16.mxu0 0
    %2667 = vmatmul.mubr.bf16.gmra.mxu0 %v2592
    %v2668 = vpop.f32.mrf.mxu0
    %v2669 = vadd.f32 %v1989, %v2668
    %v2670 = vpop.f32.mrf.mxu0
    %v2671 = vpop.f32.mrf.mxu0
    %v2672 = vpop.f32.mrf.mxu0
    %2673 = vdwg.mxu0
    %v2674 = vadd.f32 %v2589, %v2628
    %v2675 = vxor.u32 %v2674, 2147483648
    %v2676 = vmul.f32 %v2675, 1.442695
    %v2677 = vpow.pop %v2676
    %v2678 = vadd.f32 %v2677, 1.0
    %v2679 = vrcp.pop %v2678
    %v2680 = vmul.f32 1.0, %v2679
    %v2681 = vadd.f32 %v2590, %v2630
    %v2682 = vxor.u32 %v2681, 2147483648
    %v2683 = vmul.f32 %v2682, 1.442695
    %v2684 = vpow.pop %v2683
    %v2685 = vadd.f32 %v2684, 1.0
    %v2686 = vrcp.pop %v2685
    %v2687 = vmul.f32 1.0, %v2686
    %v2688 = vmul.f32 %v2680, %v2669
    %v2689 = vadd.f32 %v2591, %v2688
    %v2690 = vtanh.pop %v2689
    %v2691 = vsub.f32 1.0, %v2687
    %v2692 = vmul.f32 %v2691, %v2690
    %v2693 = vmul.f32 %v2687, %v2584
    %v2694 = vadd.f32 %v2692, %v2693
    %v2695 = vstv %s2585
    %vm2696 = vcmp.gt.s32.totalorder %v1934, %v2695
    %v2697 = vsel %vm2696, 1, 0
    %2698 = vset.pattern.permute.xlu0 0
    %2699 = vperm.xlu0 %2698, %v2697
    %v2700 = vpop.permute.xlu0 %2699
    %vm2701 = vcmp.eq.s32.totalorder %v2700, 1
    %v2702 = vsel %vm2701, %v2694, %v2584
    %s2703 = sadd.s32 %s1969, 5
    %s2704 = smul.u32 5, 3
    %s2705 = smul.addr %s2704, 8
    %s2706 = scalar_lea.vmem [#allocation2], %s2705
    %v2707 = vld [vmem:[%s2706] sm:$0xff]
    %v2708 = vld [vmem:[%s2706 + $0x8] sm:$0xff]
    %v2709 = vld [vmem:[%s2706 + $0x10] sm:$0xff]
    %v2710 = vpack.c.bf16 %v2702, %v2702
    %2711 = vmatprep.subr.bf16.mxu0 %v2095
    %2712 = vmatpush1.bf16.msra.mxu0 %v2094
    %2713 = vmatprep.subr.bf16.mxu0 %v2092
    %2714 = vmatpush1.bf16.msra.mxu0 %v2091
    %2715 = vmatprep.subr.bf16.mxu0 %v2089
    %2716 = vmatpush1.bf16.msra.mxu0 %v2088
    %2717 = vmatprep.subr.bf16.mxu0 %v2086
    %2718 = vmatpush1.bf16.msra.mxu0 %v2085
    %2719 = vmatprep.subr.bf16.mxu0 %v2083
    %2720 = vmatpush1.bf16.msra.mxu0 %v2082
    %2721 = vmatprep.subr.bf16.mxu0 %v2080
    %2722 = vmatpush1.bf16.msra.mxu0 %v2079
    %2723 = vmatprep.subr.bf16.mxu0 %v2077
    %2724 = vmatpush1.bf16.msra.mxu0 %v2076
    %2725 = vmatprep.subr.bf16.mxu0 %v2074
    %2726 = vmatpush1.bf16.msra.mxu0 %v2073
    %2727 = vmatprep.subr.bf16.mxu0 0
    %2728 = vmatpush2.bf16.msra.mxu0 0
    %2729 = vmatprep.subr.bf16.mxu0 0
    %2730 = vmatpush2.bf16.msra.mxu0 0
    %2731 = vmatprep.subr.bf16.mxu0 0
    %2732 = vmatpush2.bf16.msra.mxu0 0
    %2733 = vmatprep.subr.bf16.mxu0 0
    %2734 = vmatpush2.bf16.msra.mxu0 0
    %2735 = vmatprep.subr.bf16.mxu0 0
    %2736 = vmatpush2.bf16.msra.mxu0 0
    %2737 = vmatprep.subr.bf16.mxu0 0
    %2738 = vmatpush2.bf16.msra.mxu0 0
    %2739 = vmatprep.subr.bf16.mxu0 0
    %2740 = vmatpush2.bf16.msra.mxu0 0
    %2741 = vmatprep.subr.bf16.mxu0 0
    %2742 = vmatpush2.bf16.msra.mxu0 0
    %2743 = vmatprep.mubr.bf16.mxu0 0
    %2744 = vmatmul.mubr.bf16.gmra.mxu0 %v2710
    %v2745 = vpop.f32.mrf.mxu0
    %v2746 = vadd.f32 %v1981, %v2745
    %v2747 = vpop.f32.mrf.mxu0
    %v2748 = vadd.f32 %v1985, %v2747
    %v2749 = vpop.f32.mrf.mxu0
    %v2750 = vpop.f32.mrf.mxu0
    %2751 = vdwg.mxu0
    %2752 = vmatprep.subr.bf16.mxu0 0
    %2753 = vmatpush1.bf16.msra.mxu0 %v2096
    %2754 = vmatprep.subr.bf16.mxu0 0
    %2755 = vmatpush1.bf16.msra.mxu0 %v2093
    %2756 = vmatprep.subr.bf16.mxu0 0
    %2757 = vmatpush1.bf16.msra.mxu0 %v2090
    %2758 = vmatprep.subr.bf16.mxu0 0
    %2759 = vmatpush1.bf16.msra.mxu0 %v2087
    %2760 = vmatprep.subr.bf16.mxu0 0
    %2761 = vmatpush1.bf16.msra.mxu0 %v2084
    %2762 = vmatprep.subr.bf16.mxu0 0
    %2763 = vmatpush1.bf16.msra.mxu0 %v2081
    %2764 = vmatprep.subr.bf16.mxu0 0
    %2765 = vmatpush1.bf16.msra.mxu0 %v2078
    %2766 = vmatprep.subr.bf16.mxu0 0
    %2767 = vmatpush1.bf16.msra.mxu0 %v2075
    %2768 = vmatprep.subr.bf16.mxu0 0
    %2769 = vmatpush2.bf16.msra.mxu0 0
    %2770 = vmatprep.subr.bf16.mxu0 0
    %2771 = vmatpush2.bf16.msra.mxu0 0
    %2772 = vmatprep.subr.bf16.mxu0 0
    %2773 = vmatpush2.bf16.msra.mxu0 0
    %2774 = vmatprep.subr.bf16.mxu0 0
    %2775 = vmatpush2.bf16.msra.mxu0 0
    %2776 = vmatprep.subr.bf16.mxu0 0
    %2777 = vmatpush2.bf16.msra.mxu0 0
    %2778 = vmatprep.subr.bf16.mxu0 0
    %2779 = vmatpush2.bf16.msra.mxu0 0
    %2780 = vmatprep.subr.bf16.mxu0 0
    %2781 = vmatpush2.bf16.msra.mxu0 0
    %2782 = vmatprep.subr.bf16.mxu0 0
    %2783 = vmatpush2.bf16.msra.mxu0 0
    %2784 = vmatprep.mubr.bf16.mxu0 0
    %2785 = vmatmul.mubr.bf16.gmra.mxu0 %v2710
    %v2786 = vpop.f32.mrf.mxu0
    %v2787 = vadd.f32 %v1989, %v2786
    %v2788 = vpop.f32.mrf.mxu0
    %v2789 = vpop.f32.mrf.mxu0
    %v2790 = vpop.f32.mrf.mxu0
    %2791 = vdwg.mxu0
    %v2792 = vadd.f32 %v2707, %v2746
    %v2793 = vxor.u32 %v2792, 2147483648
    %v2794 = vmul.f32 %v2793, 1.442695
    %v2795 = vpow.pop %v2794
    %v2796 = vadd.f32 %v2795, 1.0
    %v2797 = vrcp.pop %v2796
    %v2798 = vmul.f32 1.0, %v2797
    %v2799 = vadd.f32 %v2708, %v2748
    %v2800 = vxor.u32 %v2799, 2147483648
    %v2801 = vmul.f32 %v2800, 1.442695
    %v2802 = vpow.pop %v2801
    %v2803 = vadd.f32 %v2802, 1.0
    %v2804 = vrcp.pop %v2803
    %v2805 = vmul.f32 1.0, %v2804
    %v2806 = vmul.f32 %v2798, %v2787
    %v2807 = vadd.f32 %v2709, %v2806
    %v2808 = vtanh.pop %v2807
    %v2809 = vsub.f32 1.0, %v2805
    %v2810 = vmul.f32 %v2809, %v2808
    %v2811 = vmul.f32 %v2805, %v2702
    %v2812 = vadd.f32 %v2810, %v2811
    %v2813 = vstv %s2703
    %vm2814 = vcmp.gt.s32.totalorder %v1934, %v2813
    %v2815 = vsel %vm2814, 1, 0
    %2816 = vset.pattern.permute.xlu0 0
    %2817 = vperm.xlu0 %2816, %v2815
    %v2818 = vpop.permute.xlu0 %2817
    %vm2819 = vcmp.eq.s32.totalorder %v2818, 1
    %v2820 = vsel %vm2819, %v2812, %v2702
    %s2821 = sadd.s32 %s1969, 6
    %s2822 = smul.u32 6, 3
    %s2823 = smul.addr %s2822, 8
    %s2824 = scalar_lea.vmem [#allocation2], %s2823
    %v2825 = vld [vmem:[%s2824] sm:$0xff]
    %v2826 = vld [vmem:[%s2824 + $0x8] sm:$0xff]
    %v2827 = vld [vmem:[%s2824 + $0x10] sm:$0xff]
    %v2828 = vpack.c.bf16 %v2820, %v2820
    %2829 = vmatprep.subr.bf16.mxu0 %v2095
    %2830 = vmatpush1.bf16.msra.mxu0 %v2094
    %2831 = vmatprep.subr.bf16.mxu0 %v2092
    %2832 = vmatpush1.bf16.msra.mxu0 %v2091
    %2833 = vmatprep.subr.bf16.mxu0 %v2089
    %2834 = vmatpush1.bf16.msra.mxu0 %v2088
    %2835 = vmatprep.subr.bf16.mxu0 %v2086
    %2836 = vmatpush1.bf16.msra.mxu0 %v2085
    %2837 = vmatprep.subr.bf16.mxu0 %v2083
    %2838 = vmatpush1.bf16.msra.mxu0 %v2082
    %2839 = vmatprep.subr.bf16.mxu0 %v2080
    %2840 = vmatpush1.bf16.msra.mxu0 %v2079
    %2841 = vmatprep.subr.bf16.mxu0 %v2077
    %2842 = vmatpush1.bf16.msra.mxu0 %v2076
    %2843 = vmatprep.subr.bf16.mxu0 %v2074
    %2844 = vmatpush1.bf16.msra.mxu0 %v2073
    %2845 = vmatprep.subr.bf16.mxu0 0
    %2846 = vmatpush2.bf16.msra.mxu0 0
    %2847 = vmatprep.subr.bf16.mxu0 0
    %2848 = vmatpush2.bf16.msra.mxu0 0
    %2849 = vmatprep.subr.bf16.mxu0 0
    %2850 = vmatpush2.bf16.msra.mxu0 0
    %2851 = vmatprep.subr.bf16.mxu0 0
    %2852 = vmatpush2.bf16.msra.mxu0 0
    %2853 = vmatprep.subr.bf16.mxu0 0
    %2854 = vmatpush2.bf16.msra.mxu0 0
    %2855 = vmatprep.subr.bf16.mxu0 0
    %2856 = vmatpush2.bf16.msra.mxu0 0
    %2857 = vmatprep.subr.bf16.mxu0 0
    %2858 = vmatpush2.bf16.msra.mxu0 0
    %2859 = vmatprep.subr.bf16.mxu0 0
    %2860 = vmatpush2.bf16.msra.mxu0 0
    %2861 = vmatprep.mubr.bf16.mxu0 0
    %2862 = vmatmul.mubr.bf16.gmra.mxu0 %v2828
    %v2863 = vpop.f32.mrf.mxu0
    %v2864 = vadd.f32 %v1981, %v2863
    %v2865 = vpop.f32.mrf.mxu0
    %v2866 = vadd.f32 %v1985, %v2865
    %v2867 = vpop.f32.mrf.mxu0
    %v2868 = vpop.f32.mrf.mxu0
    %2869 = vdwg.mxu0
    %2870 = vmatprep.subr.bf16.mxu0 0
    %2871 = vmatpush1.bf16.msra.mxu0 %v2096
    %2872 = vmatprep.subr.bf16.mxu0 0
    %2873 = vmatpush1.bf16.msra.mxu0 %v2093
    %2874 = vmatprep.subr.bf16.mxu0 0
    %2875 = vmatpush1.bf16.msra.mxu0 %v2090
    %2876 = vmatprep.subr.bf16.mxu0 0
    %2877 = vmatpush1.bf16.msra.mxu0 %v2087
    %2878 = vmatprep.subr.bf16.mxu0 0
    %2879 = vmatpush1.bf16.msra.mxu0 %v2084
    %2880 = vmatprep.subr.bf16.mxu0 0
    %2881 = vmatpush1.bf16.msra.mxu0 %v2081
    %2882 = vmatprep.subr.bf16.mxu0 0
    %2883 = vmatpush1.bf16.msra.mxu0 %v2078
    %2884 = vmatprep.subr.bf16.mxu0 0
    %2885 = vmatpush1.bf16.msra.mxu0 %v2075
    %2886 = vmatprep.subr.bf16.mxu0 0
    %2887 = vmatpush2.bf16.msra.mxu0 0
    %2888 = vmatprep.subr.bf16.mxu0 0
    %2889 = vmatpush2.bf16.msra.mxu0 0
    %2890 = vmatprep.subr.bf16.mxu0 0
    %2891 = vmatpush2.bf16.msra.mxu0 0
    %2892 = vmatprep.subr.bf16.mxu0 0
    %2893 = vmatpush2.bf16.msra.mxu0 0
    %2894 = vmatprep.subr.bf16.mxu0 0
    %2895 = vmatpush2.bf16.msra.mxu0 0
    %2896 = vmatprep.subr.bf16.mxu0 0
    %2897 = vmatpush2.bf16.msra.mxu0 0
    %2898 = vmatprep.subr.bf16.mxu0 0
    %2899 = vmatpush2.bf16.msra.mxu0 0
    %2900 = vmatprep.subr.bf16.mxu0 0
    %2901 = vmatpush2.bf16.msra.mxu0 0
    %2902 = vmatprep.mubr.bf16.mxu0 0
    %2903 = vmatmul.mubr.bf16.gmra.mxu0 %v2828
    %v2904 = vpop.f32.mrf.mxu0
    %v2905 = vadd.f32 %v1989, %v2904
    %v2906 = vpop.f32.mrf.mxu0
    %v2907 = vpop.f32.mrf.mxu0
    %v2908 = vpop.f32.mrf.mxu0
    %2909 = vdwg.mxu0
    %v2910 = vadd.f32 %v2825, %v2864
    %v2911 = vxor.u32 %v2910, 2147483648
    %v2912 = vmul.f32 %v2911, 1.442695
    %v2913 = vpow.pop %v2912
    %v2914 = vadd.f32 %v2913, 1.0
    %v2915 = vrcp.pop %v2914
    %v2916 = vmul.f32 1.0, %v2915
    %v2917 = vadd.f32 %v2826, %v2866
    %v2918 = vxor.u32 %v2917, 2147483648
    %v2919 = vmul.f32 %v2918, 1.442695
    %v2920 = vpow.pop %v2919
    %v2921 = vadd.f32 %v2920, 1.0
    %v2922 = vrcp.pop %v2921
    %v2923 = vmul.f32 1.0, %v2922
    %v2924 = vmul.f32 %v2916, %v2905
    %v2925 = vadd.f32 %v2827, %v2924
    %v2926 = vtanh.pop %v2925
    %v2927 = vsub.f32 1.0, %v2923
    %v2928 = vmul.f32 %v2927, %v2926
    %v2929 = vmul.f32 %v2923, %v2820
    %v2930 = vadd.f32 %v2928, %v2929
    %v2931 = vstv %s2821
    %vm2932 = vcmp.gt.s32.totalorder %v1934, %v2931
    %v2933 = vsel %vm2932, 1, 0
    %2934 = vset.pattern.permute.xlu0 0
    %2935 = vperm.xlu0 %2934, %v2933
    %v2936 = vpop.permute.xlu0 %2935
    %vm2937 = vcmp.eq.s32.totalorder %v2936, 1
    %v2938 = vsel %vm2937, %v2930, %v2820
    %s2939 = sadd.s32 %s1969, 7
    %s2940 = smul.u32 7, 3
    %s2941 = smul.addr %s2940, 8
    %s2942 = scalar_lea.vmem [#allocation2], %s2941
    %v2943 = vld [vmem:[%s2942] sm:$0xff]
    %v2944 = vld [vmem:[%s2942 + $0x8] sm:$0xff]
    %v2945 = vld [vmem:[%s2942 + $0x10] sm:$0xff]
    %v2946 = vpack.c.bf16 %v2938, %v2938
    %2947 = vmatprep.subr.bf16.mxu0 %v2095
    %2948 = vmatpush1.bf16.msra.mxu0 %v2094
    %2949 = vmatprep.subr.bf16.mxu0 %v2092
    %2950 = vmatpush1.bf16.msra.mxu0 %v2091
    %2951 = vmatprep.subr.bf16.mxu0 %v2089
    %2952 = vmatpush1.bf16.msra.mxu0 %v2088
    %2953 = vmatprep.subr.bf16.mxu0 %v2086
    %2954 = vmatpush1.bf16.msra.mxu0 %v2085
    %2955 = vmatprep.subr.bf16.mxu0 %v2083
    %2956 = vmatpush1.bf16.msra.mxu0 %v2082
    %2957 = vmatprep.subr.bf16.mxu0 %v2080
    %2958 = vmatpush1.bf16.msra.mxu0 %v2079
    %2959 = vmatprep.subr.bf16.mxu0 %v2077
    %2960 = vmatpush1.bf16.msra.mxu0 %v2076
    %2961 = vmatprep.subr.bf16.mxu0 %v2074
    %2962 = vmatpush1.bf16.msra.mxu0 %v2073
    %2963 = vmatprep.subr.bf16.mxu0 0
    %2964 = vmatpush2.bf16.msra.mxu0 0
    %2965 = vmatprep.subr.bf16.mxu0 0
    %2966 = vmatpush2.bf16.msra.mxu0 0
    %2967 = vmatprep.subr.bf16.mxu0 0
    %2968 = vmatpush2.bf16.msra.mxu0 0
    %2969 = vmatprep.subr.bf16.mxu0 0
    %2970 = vmatpush2.bf16.msra.mxu0 0
    %2971 = vmatprep.subr.bf16.mxu0 0
    %2972 = vmatpush2.bf16.msra.mxu0 0
    %2973 = vmatprep.subr.bf16.mxu0 0
    %2974 = vmatpush2.bf16.msra.mxu0 0
    %2975 = vmatprep.subr.bf16.mxu0 0
    %2976 = vmatpush2.bf16.msra.mxu0 0
    %2977 = vmatprep.subr.bf16.mxu0 0
    %2978 = vmatpush2.bf16.msra.mxu0 0
    %2979 = vmatprep.mubr.bf16.mxu0 0
    %2980 = vmatmul.mubr.bf16.gmra.mxu0 %v2946
    %v2981 = vpop.f32.mrf.mxu0
    %v2982 = vadd.f32 %v1981, %v2981
    %v2983 = vpop.f32.mrf.mxu0
    %v2984 = vadd.f32 %v1985, %v2983
    %v2985 = vpop.f32.mrf.mxu0
    %v2986 = vpop.f32.mrf.mxu0
    %2987 = vdwg.mxu0
    %2988 = vmatprep.subr.bf16.mxu0 0
    %2989 = vmatpush1.bf16.msra.mxu0 %v2096
    %2990 = vmatprep.subr.bf16.mxu0 0
    %2991 = vmatpush1.bf16.msra.mxu0 %v2093
    %2992 = vmatprep.subr.bf16.mxu0 0
    %2993 = vmatpush1.bf16.msra.mxu0 %v2090
    %2994 = vmatprep.subr.bf16.mxu0 0
    %2995 = vmatpush1.bf16.msra.mxu0 %v2087
    %2996 = vmatprep.subr.bf16.mxu0 0
    %2997 = vmatpush1.bf16.msra.mxu0 %v2084
    %2998 = vmatprep.subr.bf16.mxu0 0
    %2999 = vmatpush1.bf16.msra.mxu0 %v2081
    %3000 = vmatprep.subr.bf16.mxu0 0
    %3001 = vmatpush1.bf16.msra.mxu0 %v2078
    %3002 = vmatprep.subr.bf16.mxu0 0
    %3003 = vmatpush1.bf16.msra.mxu0 %v2075
    %3004 = vmatprep.subr.bf16.mxu0 0
    %3005 = vmatpush2.bf16.msra.mxu0 0
    %3006 = vmatprep.subr.bf16.mxu0 0
    %3007 = vmatpush2.bf16.msra.mxu0 0
    %3008 = vmatprep.subr.bf16.mxu0 0
    %3009 = vmatpush2.bf16.msra.mxu0 0
    %3010 = vmatprep.subr.bf16.mxu0 0
    %3011 = vmatpush2.bf16.msra.mxu0 0
    %3012 = vmatprep.subr.bf16.mxu0 0
    %3013 = vmatpush2.bf16.msra.mxu0 0
    %3014 = vmatprep.subr.bf16.mxu0 0
    %3015 = vmatpush2.bf16.msra.mxu0 0
    %3016 = vmatprep.subr.bf16.mxu0 0
    %3017 = vmatpush2.bf16.msra.mxu0 0
    %3018 = vmatprep.subr.bf16.mxu0 0
    %3019 = vmatpush2.bf16.msra.mxu0 0
    %3020 = vmatprep.mubr.bf16.mxu0 0
    %3021 = vmatmul.mubr.bf16.gmra.mxu0 %v2946
    %v3022 = vpop.f32.mrf.mxu0
    %v3023 = vadd.f32 %v1989, %v3022
    %v3024 = vpop.f32.mrf.mxu0
    %v3025 = vpop.f32.mrf.mxu0
    %v3026 = vpop.f32.mrf.mxu0
    %3027 = vdwg.mxu0
    %v3028 = vadd.f32 %v2943, %v2982
    %v3029 = vxor.u32 %v3028, 2147483648
    %v3030 = vmul.f32 %v3029, 1.442695
    %v3031 = vpow.pop %v3030
    %v3032 = vadd.f32 %v3031, 1.0
    %v3033 = vrcp.pop %v3032
    %v3034 = vmul.f32 1.0, %v3033
    %v3035 = vadd.f32 %v2944, %v2984
    %v3036 = vxor.u32 %v3035, 2147483648
    %v3037 = vmul.f32 %v3036, 1.442695
    %v3038 = vpow.pop %v3037
    %v3039 = vadd.f32 %v3038, 1.0
    %v3040 = vrcp.pop %v3039
    %v3041 = vmul.f32 1.0, %v3040
    %v3042 = vmul.f32 %v3034, %v3023
    %v3043 = vadd.f32 %v2945, %v3042
    %v3044 = vtanh.pop %v3043
    %v3045 = vsub.f32 1.0, %v3041
    %v3046 = vmul.f32 %v3045, %v3044
    %v3047 = vmul.f32 %v3041, %v2938
    %v3048 = vadd.f32 %v3046, %v3047
    %v3049 = vstv %s2939
    %vm3050 = vcmp.gt.s32.totalorder %v1934, %v3049
    %v3051 = vsel %vm3050, 1, 0
    %3052 = vset.pattern.permute.xlu0 0
    %3053 = vperm.xlu0 %3052, %v3051
    %v3054 = vpop.permute.xlu0 %3053
    %vm3055 = vcmp.eq.s32.totalorder %v3054, 1
    %v3056 = vsel %vm3055, %v3048, %v2938
    %3057 = vst [vmem:[#allocation3] sm:$0xff] %v3056
    // Predicated region
    $region66: #{tpu_custom_call.1} parent=1 // pred_check
      %p3058 = pneg %p1929
    $region67: #{tpu_custom_call.1} parent=1 // pred_check_branch
      %3060 = sbr.rel (%p3058) target = $region69
    $region68: #{tpu_custom_call.1} parent=1 // pred_region
      %3061 = vst [vmem:[#allocation14] sm:$0xff] %v3056
      %v3062 = vpack.c.bf16 %v3056, %v3056
      %v3063 = vld [vmem:[#allocation12] sm:$0xf]
      %v3064 = vld [vmem:[#allocation12 + $0x4] sm:$0xf]
      %v3065 = vld [vmem:[#allocation12 + $0x8] sm:$0xf]
      %v3066 = vld [vmem:[#allocation12 + $0xc] sm:$0xf]
      %v3067 = vld [vmem:[#allocation12 + $0x10] sm:$0xf]
      %v3068 = vld [vmem:[#allocation12 + $0x14] sm:$0xf]
      %v3069 = vld [vmem:[#allocation12 + $0x18] sm:$0xf]
      %v3070 = vld [vmem:[#allocation12 + $0x1c] sm:$0xf]
      %v3071 = vld [vmem:[#allocation12 + $0x20] sm:$0xf]
      %v3072 = vld [vmem:[#allocation12 + $0x24] sm:$0xf]
      %v3073 = vld [vmem:[#allocation12 + $0x28] sm:$0xf]
      %v3074 = vld [vmem:[#allocation12 + $0x2c] sm:$0xf]
      %v3075 = vld [vmem:[#allocation12 + $0x30] sm:$0xf]
      %v3076 = vld [vmem:[#allocation12 + $0x34] sm:$0xf]
      %v3077 = vld [vmem:[#allocation12 + $0x38] sm:$0xf]
      %v3078 = vld [vmem:[#allocation12 + $0x3c] sm:$0xf]
      %v3079 = vld [vmem:[%s9] sm:$0x1]
      %v3081 = vlaneseq
      %v3082 = vshrl.u32 %v3081, 7
      %v3083 = vsub.s32 0, %v3082
      %v3084 = vrot.slane %v3079, %v3083
      %v3102 = vunpack.c.l.b16 %v3063
      %v3103 = vunpack.c.l.b16 %v3064
      %v3104 = vunpack.c.l.b16 %v3065
      %v3105 = vunpack.c.l.b16 %v3066
      %v3106 = vunpack.c.l.b16 %v3067
      %v3107 = vunpack.c.l.b16 %v3068
      %v3108 = vunpack.c.l.b16 %v3069
      %v3109 = vunpack.c.l.b16 %v3070
      %v3110 = vunpack.c.l.b16 %v3071
      %v3111 = vunpack.c.l.b16 %v3072
      %v3112 = vunpack.c.l.b16 %v3073
      %v3113 = vunpack.c.l.b16 %v3074
      %v3114 = vunpack.c.l.b16 %v3075
      %v3115 = vunpack.c.l.b16 %v3076
      %v3116 = vunpack.c.l.b16 %v3077
      %v3117 = vunpack.c.l.b16 %v3078
      %v3118 = vpack.c.b16 %v3103, %v3102
      %v3119 = vpack.c.b16 %v3105, %v3104
      %v3120 = vpack.c.b16 %v3107, %v3106
      %v3121 = vpack.c.b16 %v3109, %v3108
      %v3122 = vpack.c.b16 %v3111, %v3110
      %v3123 = vpack.c.b16 %v3113, %v3112
      %v3124 = vpack.c.b16 %v3115, %v3114
      %v3125 = vpack.c.b16 %v3117, %v3116
      %3134 = vmatprep.subr.bf16.mxu0 0
      %3135 = vmatpush1.bf16.msra.mxu0 %v3125
      %3136 = vmatprep.subr.bf16.mxu0 0
      %3137 = vmatpush1.bf16.msra.mxu0 %v3124
      %3138 = vmatprep.subr.bf16.mxu0 0
      %3139 = vmatpush1.bf16.msra.mxu0 %v3123
      %3140 = vmatprep.subr.bf16.mxu0 0
      %3141 = vmatpush1.bf16.msra.mxu0 %v3122
      %3142 = vmatprep.subr.bf16.mxu0 0
      %3143 = vmatpush1.bf16.msra.mxu0 %v3121
      %3144 = vmatprep.subr.bf16.mxu0 0
      %3145 = vmatpush1.bf16.msra.mxu0 %v3120
      %3146 = vmatprep.subr.bf16.mxu0 0
      %3147 = vmatpush1.bf16.msra.mxu0 %v3119
      %3148 = vmatprep.subr.bf16.mxu0 0
      %3149 = vmatpush1.bf16.msra.mxu0 %v3118
      %3150 = vmatprep.subr.bf16.mxu0 0
      %3151 = vmatpush2.bf16.msra.mxu0 0
      %3152 = vmatprep.subr.bf16.mxu0 0
      %3153 = vmatpush2.bf16.msra.mxu0 0
      %3154 = vmatprep.subr.bf16.mxu0 0
      %3155 = vmatpush2.bf16.msra.mxu0 0
      %3156 = vmatprep.subr.bf16.mxu0 0
      %3157 = vmatpush2.bf16.msra.mxu0 0
      %3158 = vmatprep.subr.bf16.mxu0 0
      %3159 = vmatpush2.bf16.msra.mxu0 0
      %3160 = vmatprep.subr.bf16.mxu0 0
      %3161 = vmatpush2.bf16.msra.mxu0 0
      %3162 = vmatprep.subr.bf16.mxu0 0
      %3163 = vmatpush2.bf16.msra.mxu0 0
      %3164 = vmatprep.subr.bf16.mxu0 0
      %3165 = vmatpush2.bf16.msra.mxu0 0
      %3166 = vmatprep.mubr.bf16.mxu0 0
      %3167 = vmatmul.mubr.bf16.gmra.mxu0 %v3062
      %v3168 = vpop.f32.mrf.mxu0
      %v3169 = vadd.f32 %v3084, %v3168
      %v3170 = vpop.f32.mrf.mxu0
      %v3171 = vpop.f32.mrf.mxu0
      %v3172 = vpop.f32.mrf.mxu0
      %3173 = vdwg.mxu0
      %3174 = vst [vmem:[#allocation16] sm:$0xff] %v3169
    $region69: #{tpu_custom_call.1} parent=1 // pred_fallthru
      _
    // Predicated region
    $region70: #{tpu_custom_call.1} parent=1 // pred_check
      _
    $region71: #{tpu_custom_call.1} parent=1 // pred_check_branch
      %3176 = sbr.rel (0) target = $region73
    $region72: #{tpu_custom_call.1} parent=1 // pred_region
      %s3177 = sadd.s32 0, 0
      %s3178 = smul.u32 8, %s3177
      %s3180 = ssub.s32 1024, 1024
      %3181 = vsyncadd [#allocation6], %s3180
      %s3182 = smul.addr %s3178, 128
      %s3183 = scalar_lea.hbm %s10, %s3182
      %s3184 = sshll.u32 [#allocation13], 4
      %s3185 = int_to_ptr.vmem [resolvable:$true] %s3184
      %3190 = dma.vmem_to_hbm [thread:$0]  %s3185, 1024, %s3183, [#allocation6], 128, 128, 8
    $region73: #{tpu_custom_call.1} parent=1 // pred_fallthru
      _
    // Predicated region
    $region74: #{tpu_custom_call.1} parent=1 // pred_check
      _
    $region75: #{tpu_custom_call.1} parent=1 // pred_check_branch
      %3192 = sbr.rel (0) target = $region77
    $region76: #{tpu_custom_call.1} parent=1 // pred_region
      %s3194 = ssub.s32 128, 128
      %3195 = vsyncadd [#allocation15], %s3194
      %s3197 = sshll.u32 [#allocation14], 4
      %s3198 = int_to_ptr.vmem [resolvable:$true] %s3197
      %3200 = dma.vmem_to_hbm [thread:$0]  %s3198, 128, %s11, [#allocation15]
    $region77: #{tpu_custom_call.1} parent=1 // pred_fallthru
      _
    // Predicated region
    $region78: #{tpu_custom_call.1} parent=1 // pred_check
      _
    $region79: #{tpu_custom_call.1} parent=1 // pred_check_branch
      %3202 = sbr.rel (0) target = $region81
    $region80: #{tpu_custom_call.1} parent=1 // pred_region
      %s3204 = ssub.s32 128, 128
      %3205 = vsyncadd [#allocation15], %s3204
      %s3207 = sshll.u32 [#allocation16], 4
      %s3208 = int_to_ptr.vmem [resolvable:$true] %s3207
      %3210 = dma.vmem_to_hbm [thread:$0]  %s3208, 128, %s12, [#allocation15]
    $region81: #{tpu_custom_call.1} parent=1 // pred_fallthru
      _
    // Predicated region
    $region82: #{tpu_custom_call.1} parent=1 // pred_check
      _
    $region83: #{tpu_custom_call.1} parent=1 // pred_check_branch
      %3212 = sbr.rel (0) target = $region85
    $region84: #{tpu_custom_call.1} parent=1 // pred_region
      %3213 = dma.done [#allocation6], 1024
    $region85: #{tpu_custom_call.1} parent=1 // pred_fallthru
      _
    // Predicated region
    $region86: #{tpu_custom_call.1} parent=1 // pred_check
      _
    $region87: #{tpu_custom_call.1} parent=1 // pred_check_branch
      %3215 = sbr.rel (0) target = $region89
    $region88: #{tpu_custom_call.1} parent=1 // pred_region
      %3216 = dma.done [#allocation15], 128
    $region89: #{tpu_custom_call.1} parent=1 // pred_fallthru
      _
    // Predicated region
    $region90: #{tpu_custom_call.1} parent=1 // pred_check
      _
    $region91: #{tpu_custom_call.1} parent=1 // pred_check_branch
      %3218 = sbr.rel (0) target = $region93
    $region92: #{tpu_custom_call.1} parent=1 // pred_region
      %3219 = dma.done [#allocation15], 128
    $region93: #{tpu_custom_call.1} parent=1 // pred_fallthru
      _
    %3220 = vsyncpa [#allocation5], 1
    %3221 = vsyncpa [#allocation8], 1
    %3222 = vsyncpa [#allocation11], 1
    %3223 = vsyncpa [#allocation6], 1
    %3224 = vsyncpa [#allocation15], 1

</llo_original>
